<compile_context>
chip_gen: v7x
topology: tpu7x:2x2x1
jax: 0.10.0
libtpu: 0.0.40
codegen_flags: <defaults>
</compile_context>

<pallas_src>
import functools

import numpy as np
import jax
import jax.numpy as jnp
from jax.experimental import pallas as pl
from jax.experimental.pallas import tpu as pltpu

EPS = 1e-5                   # nn.GroupNorm default
MXU_DTYPE = jnp.bfloat16     # matmul input dtype (accumulation stays f32 everywhere)


def _bytes(shape, dtype):
    return int(np.prod(shape)) * jnp.dtype(dtype).itemsize


def _compiler_params(semantics, block_bytes):
    # Explicit scoped-VMEM budget: 2x (double buffering) + headroom, clamped to the
    # smallest physical VMEM (v7x: 64 MiB).  Raise toward ~100 MiB on v5e/v6e if a
    # larger production tile needs it.
    limit = int(min(max(2 * block_bytes + (8 << 20), 32 << 20), 64 << 20))
    return pltpu.CompilerParams(dimension_semantics=semantics,
                                vmem_limit_bytes=limit)


# ----------------------------------------------------------------------------
# Kernel 1: fused query conv+GN, key conv+GN, 2x2x2 max-pool, relu, psi conv.
# GroupNorm (+ conv bias) is pre-folded into per-channel scale/shift vectors, so
# each projection is one MXU dot followed by one VPU multiply-add.  Grid is
# (B, Sg_tiles), both axes "parallel" (no cross-step state).
# ----------------------------------------------------------------------------
def _gate_kernel(x_ref, g_ref, wk_ref, wq_ref, wp_ref,
                 ksc_ref, ksh_ref, qsc_ref, qsh_ref, s_ref):
    # query projection (GN + bias folded into qsc/qsh)
    q = jnp.dot(g_ref[0], wq_ref[...], preferred_element_type=jnp.float32)
    q = q * qsc_ref[0] + qsh_ref[0]                                  # [tsg, EH]
    # key projection (GN + bias folded) + MaxPool3d(2): the 8 window members of every
    # pooled row are the 8 leading slabs of the window-first x block.
    ksc = ksc_ref[0]
    ksh = ksh_ref[0]
    m = None
    for j in range(8):
        kj = jnp.dot(x_ref[0, j], wk_ref[...], preferred_element_type=jnp.float32)
        kj = kj * ksc + ksh
        m = kj if m is None else jnp.maximum(m, kj)
    pre = jnp.maximum(m + q, 0.0)                                    # relu(key + query)
    # psi conv (block-diagonal over heads).  Its bias is exactly cancelled by the
    # following GN(1,1); that GN + sigmoid run on the tiny [B,Sg,H] map outside.
    s_ref[0] = jnp.dot(pre.astype(MXU_DTYPE), wp_ref[...],
                       preferred_element_type=jnp.float32)


def gate_scores(x_fw, g_f, wk, wq, wp, ksc, ksh, qsc, qsh, *, tsg):
    B, _, Sg, Cx = x_fw.shape
    Cg = g_f.shape[-1]
    EH = wk.shape[1]
    H = wp.shape[1]
    nsg = Sg // tsg
    block_bytes = (_bytes((8, tsg, Cx), x_fw.dtype) + _bytes((tsg, Cg), g_f.dtype)
                   + _bytes((Cx, EH), wk.dtype) + _bytes((Cg, EH), wq.dtype)
                   + _bytes((EH, H), wp.dtype) + 4 * _bytes((1, EH), jnp.float32)
                   + _bytes((tsg, H), jnp.float32))
    return pl.pallas_call(
        _gate_kernel,
        out_shape=jax.ShapeDtypeStruct((B, Sg, H), jnp.float32),
        grid=(B, nsg),
        in_specs=[
            pl.BlockSpec((1, 8, tsg, Cx), lambda b, s: (b, 0, s, 0)),
            pl.BlockSpec((1, tsg, Cg), lambda b, s: (b, s, 0)),
            pl.BlockSpec((Cx, EH), lambda b, s: (0, 0)),
            pl.BlockSpec((Cg, EH), lambda b, s: (0, 0)),
            pl.BlockSpec((EH, H), lambda b, s: (0, 0)),
            pl.BlockSpec((1, 1, EH), lambda b, s: (b, 0, 0)),
            pl.BlockSpec((1, 1, EH), lambda b, s: (b, 0, 0)),
            pl.BlockSpec((1, 1, EH), lambda b, s: (b, 0, 0)),
            pl.BlockSpec((1, 1, EH), lambda b, s: (b, 0, 0)),
        ],
        out_specs=pl.BlockSpec((1, tsg, H), lambda b, s: (b, s, 0)),
        compiler_params=_compiler_params(("parallel", "parallel"), block_bytes),
    )(x_fw, g_f, wk, wq, wp, ksc, ksh, qsc, qsh)


# ----------------------------------------------------------------------------
# Kernel 2: fused value conv+GN, per-head gating, output conv.  The output-GN
# channel moments (sum / sum-of-squares) are accumulated across the "arbitrary"
# S grid axis into VMEM accumulator outputs; value / z never hit HBM.
# ----------------------------------------------------------------------------
def _value_out_kernel(x_ref, a_ref, r_ref, wv_ref, wc_ref, bc_ref,
                      vsc_ref, vsh_ref, y_ref, ysum_ref, ysq_ref):
    @pl.when(pl.program_id(1) == 0)
    def _():
        ysum_ref[...] = jnp.zeros_like(ysum_ref)
        ysq_ref[...] = jnp.zeros_like(ysq_ref)
    # value projection (GN + bias folded into vsc/vsh)
    v = jnp.dot(x_ref[0], wv_ref[...], preferred_element_type=jnp.float32)
    v = v * vsc_ref[0] + vsh_ref[0]                                  # [ts, EH]
    # expand the per-head gate [ts, H] to [ts, E*H] with a 0/1 expansion matmul
    gate = jnp.dot(a_ref[0], r_ref[...], preferred_element_type=jnp.float32)
    z = (v * gate).astype(MXU_DTYPE)
    y = jnp.dot(z, wc_ref[...], preferred_element_type=jnp.float32) + bc_ref[...]
    y_ref[0] = y                                                     # [ts, Cout]
    # accumulate output-GN channel moments across the S axis
    ysum_ref[0] += jnp.sum(y, axis=0, keepdims=True)
    ysq_ref[0] += jnp.sum(y * y, axis=0, keepdims=True)


def value_gate_out(x_f, a_up, rexp, wv, wc, bc, vsc, vsh, *, ts):
    B, Sx, Cx = x_f.shape
    H = a_up.shape[-1]
    EH = wv.shape[1]
    Cout = wc.shape[1]
    ns = Sx // ts
    block_bytes = (_bytes((ts, Cx), x_f.dtype) + _bytes((ts, H), a_up.dtype)
                   + _bytes((H, EH), rexp.dtype) + _bytes((Cx, EH), wv.dtype)
                   + _bytes((EH, Cout), wc.dtype) + _bytes((1, Cout), jnp.float32)
                   + 2 * _bytes((1, EH), jnp.float32)
                   + _bytes((ts, Cout), jnp.float32)
                   + 2 * _bytes((1, Cout), jnp.float32))
    return pl.pallas_call(
        _value_out_kernel,
        out_shape=(jax.ShapeDtypeStruct((B, Sx, Cout), jnp.float32),
                   jax.ShapeDtypeStruct((B, 1, Cout), jnp.float32),
                   jax.ShapeDtypeStruct((B, 1, Cout), jnp.float32)),
        grid=(B, ns),
        in_specs=[
            pl.BlockSpec((1, ts, Cx), lambda b, s: (b, s, 0)),
            pl.BlockSpec((1, ts, H), lambda b, s: (b, s, 0)),
            pl.BlockSpec((H, EH), lambda b, s: (0, 0)),
            pl.BlockSpec((Cx, EH), lambda b, s: (0, 0)),
            pl.BlockSpec((EH, Cout), lambda b, s: (0, 0)),
            pl.BlockSpec((1, Cout), lambda b, s: (0, 0)),
            pl.BlockSpec((1, 1, EH), lambda b, s: (b, 0, 0)),
            pl.BlockSpec((1, 1, EH), lambda b, s: (b, 0, 0)),
        ],
        out_specs=(pl.BlockSpec((1, ts, Cout), lambda b, s: (b, s, 0)),
                   pl.BlockSpec((1, 1, Cout), lambda b, s: (b, 0, 0)),
                   pl.BlockSpec((1, 1, Cout), lambda b, s: (b, 0, 0))),
        compiler_params=_compiler_params(("parallel", "arbitrary"), block_bytes),
    )(x_f, a_up, rexp, wv, wc, bc, vsc, vsh)


# ----------------------------------------------------------------------------
# Host-side helpers (all tiny except the channel moments, which are a standard
# batched contraction XLA already runs at roofline and that must finish before
# the gate kernel anyway).
# ----------------------------------------------------------------------------
def _channel_moments(t):
    """Per-batch channel sum [B,C] and gram X^T X [B,C,C] of a [B,S,C] bf16 array."""
    tsum = jnp.sum(t.astype(jnp.float32), axis=1)
    gram = jnp.einsum("bsc,bsd->bcd", t, t, preferred_element_type=jnp.float32)
    return tsum, gram


def _gn_affine_from_moments(xsum, xgram, w, b, gamma, beta, n_rows, num_groups):
    """Fold `GroupNorm(conv1x1(x) + b) * gamma + beta` into per-channel (scale, shift)
    so the kernel only computes `(x @ w) * scale + shift`.  Exact for a linear conv."""
    B = xsum.shape[0]
    K = w.shape[1]
    cpg = K // num_groups
    s1 = xsum @ w                                             # [B, K]  sum_rows (xW)_k
    t = jnp.einsum("bij,jk->bik", xgram, w)
    s2 = jnp.einsum("jk,bjk->bk", w, t)                       # [B, K]  sum_rows (xW)_k^2
    ysum = s1 + n_rows * b                                    # stats of y = xW + b
    ysq = s2 + 2.0 * b * s1 + n_rows * b * b
    gs1 = ysum.reshape(B, num_groups, cpg).sum(-1)
    gs2 = ysq.reshape(B, num_groups, cpg).sum(-1)
    cnt = float(n_rows * cpg)
    mu = gs1 / cnt
    var = jnp.maximum(gs2 / cnt - mu * mu, 0.0)
    rstd = jax.lax.rsqrt(var + EPS)                           # [B, G]
    mu_c = jnp.repeat(mu, cpg, axis=1)                        # [B, K]
    rstd_c = jnp.repeat(rstd, cpg, axis=1)
    scale = gamma * rstd_c
    shift = beta + (b - mu_c) * scale
    return (scale[:, None, :].astype(jnp.float32),
            shift[:, None, :].astype(jnp.float32))            # [B, 1, K]


def _interp_matrix_1d(n_in, n_out):
    """1D linear interpolation matrix, align_corners=True (PyTorch semantics)."""
    if n_in == 1:
        return np.ones((n_out, 1), np.float32)
    src = np.arange(n_out, dtype=np.float64) * (n_in - 1) / (n_out - 1)
    i0 = np.clip(np.floor(src).astype(np.int64), 0, n_in - 1)
    i1 = np.minimum(i0 + 1, n_in - 1)
    w = (src - i0).astype(np.float32)
    m = np.zeros((n_out, n_in), np.float32)
    rows = np.arange(n_out)
    np.add.at(m, (rows, i0), 1.0 - w)
    np.add.at(m, (rows, i1), w)
    return m


# ----------------------------------------------------------------------------
# Parameters (deterministic synthetic init).  Per-head PyTorch Conv/GN params map onto
# these fused arrays by head-major channel concatenation; the psi conv weights become
# a block-diagonal [E*H, H] matrix.  bp is kept only to document the PyTorch mapping:
# it is exactly cancelled by the psi GN(1,1) mean subtraction and never applied.
# ----------------------------------------------------------------------------
def init_params(key, in_channels, emb, out_channels, num_heads):
    cx = in_channels // 2          # key_stride=2 -> kW / vW input has in_channels // 2
    cg = in_channels
    EH = emb * num_heads
    keys = iter(jax.random.split(key, 24))

    def nrm(shape, scale=0.1):
        return scale * jax.random.normal(next(keys), shape, jnp.float32)

    wp_heads = nrm((num_heads, emb))
    wp = (wp_heads[:, :, None] *
          jnp.eye(num_heads, dtype=jnp.float32)[:, None, :]).reshape(EH, num_heads)
    return dict(
        wk=nrm((cx, EH)), bk=nrm((1, EH)), gk_g=1.0 + nrm((1, EH)), gk_b=nrm((1, EH)),
        wq=nrm((cg, EH)), bq=nrm((1, EH)), gq_g=1.0 + nrm((1, EH)), gq_b=nrm((1, EH)),
        wv=nrm((cx, EH)), bv=nrm((1, EH)), gv_g=1.0 + nrm((1, EH)), gv_b=nrm((1, EH)),
        wp=wp, bp=nrm((1, num_heads)),
        gp_g=1.0 + nrm((1, num_heads)), gp_b=nrm((1, num_heads)),
        wc=nrm((EH, out_channels)), bc=nrm((1, out_channels)),
        gc_g=1.0 + nrm((1, out_channels)), gc_b=nrm((1, out_channels)),
    )


# ----------------------------------------------------------------------------
# MHCA forward (g: [B, C, Dg, Hg, Wg] NCDHW, x: [B, C//2, 2Dg, 2Hg, 2Wg]).
# ----------------------------------------------------------------------------
def mhca_forward(g, x, params, *, s_tile=512):
    B, Cg, Dg, Hg, Wg = g.shape
    _, Cx, Dx, Hx, Wx = x.shape
    assert (Dx, Hx, Wx) == (2 * Dg, 2 * Hg, 2 * Wg), "expects x spatial == 2 * g spatial"
    # TODO(synk): the equalize_dimensions zero-padding path is only non-trivial when the
    # upsampled-A and value spatial shapes differ; with exact 2x shapes it is a no-op.
    Sg = Dg * Hg * Wg
    Sx = Dx * Hx * Wx
    H = params["wp"].shape[1]
    EH = params["wk"].shape[1]
    E = EH // H
    Cout = params["wc"].shape[1]
    assert Sg % 8 == 0 and Sx % 8 == 0, "flattened spatial extents must be multiples of 8"
    assert EH % (4 * H) == 0 and Cout % 4 == 0, "GroupNorm group sizes must divide channels"

    def _pick_tile(S, want):
        t = max(8, min(want, S) - (min(want, S) % 8))
        while S % t:
            t -= 8
        return t

    tsx = _pick_tile(Sx, s_tile)
    tsg = _pick_tile(Sg, s_tile)

    # Channels-last layouts; x additionally in "window-first" order [B, 8, Sg, Cx] so
    # the 2x2x2 max-pool members are contiguous slabs.  bf16 halves HBM/VMEM traffic.
    g_f = jnp.transpose(g, (0, 2, 3, 4, 1)).reshape(B, Sg, Cg).astype(MXU_DTYPE)
    x_t = jnp.transpose(x, (0, 2, 3, 4, 1)).reshape(B, Dg, 2, Hg, 2, Wg, 2, Cx)
    x_fw = jnp.transpose(x_t, (0, 2, 4, 6, 1, 3, 5, 7)).reshape(B, 8, Sg, Cx)
    x_fw = x_fw.astype(MXU_DTYPE)
    x_f = x_fw.reshape(B, Sx, Cx)

    # Pass 1: channel moments of x and g -> exact GroupNorm stats for every linear
    # 1x1 conv, folded (with conv bias + GN affine) into per-channel scale/shift.
    xsum, xgram = _channel_moments(x_f)
    gsum, ggram = _channel_moments(g_f)
    ksc, ksh = _gn_affine_from_moments(xsum, xgram, params["wk"], params["bk"],
                                       params["gk_g"], params["gk_b"], Sx, 4 * H)
    qsc, qsh = _gn_affine_from_moments(gsum, ggram, params["wq"], params["bq"],
                                       params["gq_g"], params["gq_b"], Sg, 4 * H)
    vsc, vsh = _gn_affine_from_moments(xsum, xgram, params["wv"], params["bv"],
                                       params["gv_g"], params["gv_b"], Sx, 4 * H)

    # Pass 2 (Pallas): query conv+GN, key conv+GN, max-pool, relu, psi conv -> logits.
    s_logits = gate_scores(x_fw, g_f,
                           params["wk"].astype(MXU_DTYPE),
                           params["wq"].astype(MXU_DTYPE),
                           params["wp"].astype(MXU_DTYPE),
                           ksc, ksh, qsc, qsh, tsg=tsg)                      # [B,Sg,H]

    # psi GN(1,1) + sigmoid on the tiny logit map (XLA).  The psi conv bias is exactly
    # cancelled by this mean subtraction, so it is never applied.
    mu = jnp.mean(s_logits, axis=1, keepdims=True)
    var = jnp.mean(jnp.square(s_logits - mu), axis=1, keepdims=True)
    a = jax.nn.sigmoid((s_logits - mu) * jax.lax.rsqrt(var + EPS)
                       * params["gp_g"] + params["gp_b"])                    # [B,Sg,H]

    # 2x trilinear upsample (align_corners=True) via separable 1D interpolation on the
    # tiny gate map, reordered to the window-first x layout.
    md = jnp.asarray(_interp_matrix_1d(Dg, Dx))
    mh = jnp.asarray(_interp_matrix_1d(Hg, Hx))
    mw = jnp.asarray(_interp_matrix_1d(Wg, Wx))
    a4 = a.reshape(B, Dg, Hg, Wg, H)
    a_up = jnp.einsum("xd,bdhwc->bxhwc", md, a4)
    a_up = jnp.einsum("yh,bdhwc->bdywc", mh, a_up)
    a_up = jnp.einsum("zw,bdhwc->bdhzc", mw, a_up)                           # [B,Dx,Hx,Wx,H]
    a_up = a_up.reshape(B, Dg, 2, Hg, 2, Wg, 2, H)
    a_up = jnp.transpose(a_up, (0, 2, 4, 6, 1, 3, 5, 7)).reshape(B, Sx, H)
    a_up = a_up.astype(MXU_DTYPE)

    # Pass 3 (Pallas): value conv+GN, per-head gating, output conv; accumulates the
    # output-GN channel moments across the S grid axis.
    rexp = jnp.asarray(np.kron(np.eye(H, dtype=np.float32),
                               np.ones((1, E), np.float32))).astype(MXU_DTYPE)
    y, ysum, ysq = value_gate_out(x_f, a_up, rexp,
                                  params["wv"].astype(MXU_DTYPE),
                                  params["wc"].astype(MXU_DTYPE),
                                  params["bc"], vsc, vsh, ts=tsx)

    # Output GroupNorm(4, Cout) from the accumulated moments: a per-channel
    # scale/shift applied in the same XLA pass that restores the NCDHW layout.
    cpg = Cout // 4
    gs1 = ysum[:, 0, :].reshape(B, 4, cpg).sum(-1)
    gs2 = ysq[:, 0, :].reshape(B, 4, cpg).sum(-1)
    cnt = float(Sx * cpg)
    mu_o = gs1 / cnt
    var_o = jnp.maximum(gs2 / cnt - mu_o * mu_o, 0.0)
    rstd_o = jax.lax.rsqrt(var_o + EPS)
    scale = params["gc_g"] * jnp.repeat(rstd_o, cpg, axis=1)                 # [B, Cout]
    shift = params["gc_b"] - jnp.repeat(mu_o, cpg, axis=1) * scale
    out = y * scale[:, None, :] + shift[:, None, :]

    # Undo the window-first permutation, back to NCDHW.
    out = out.reshape(B, 2, 2, 2, Dg, Hg, Wg, Cout)
    out = jnp.transpose(out, (0, 7, 4, 1, 5, 2, 6, 3)).reshape(B, Cout, Dx, Hx, Wx)
    return out


if __name__ == "__main__":
    B = 2
    in_channels = 8       # g has in_channels; x has in_channels // 2 (key_stride=2)
    emb = 8               # divisible by 4 (GroupNorm groups per head)
    out_channels = 8
    num_heads = 2
    Dg = Hg = Wg = 4
    Dx, Hx, Wx = 2 * Dg, 2 * Hg, 2 * Wg

    root = jax.random.PRNGKey(0)
    kg, kx, kp = jax.random.split(root, 3)
    g = jax.random.normal(kg, (B, in_channels, Dg, Hg, Wg), jnp.float32)
    x = jax.random.normal(kx, (B, in_channels // 2, Dx, Hx, Wx), jnp.float32)
    params = init_params(kp, in_channels, emb, out_channels, num_heads)

    # s_tile=256 so the demo exercises a multi-step S axis (accumulator path) as well.
    fwd = jax.jit(functools.partial(mhca_forward, s_tile=256))
    out = jax.block_until_ready(fwd(g, x, params))
    assert out.shape == (B, out_channels, Dx, Hx, Wx), out.shape
    assert bool(jnp.all(jnp.isfinite(out)))
    print("KERNEL_OK")
</pallas_src>

<mosaic_0001>
module attributes {stable_mosaic.version = 11 : i64} {
  func.func @_gate_kernel(%arg0: i32, %arg1: i32, %arg2: memref<1x8x64x4xbf16, #tpu.memory_space<vmem>>, %arg3: memref<1x64x8xbf16, #tpu.memory_space<vmem>>, %arg4: memref<4x16xbf16, #tpu.memory_space<vmem>>, %arg5: memref<8x16xbf16, #tpu.memory_space<vmem>>, %arg6: memref<16x2xbf16, #tpu.memory_space<vmem>>, %arg7: memref<1x1x16xf32, #tpu.memory_space<vmem>>, %arg8: memref<1x1x16xf32, #tpu.memory_space<vmem>>, %arg9: memref<1x1x16xf32, #tpu.memory_space<vmem>>, %arg10: memref<1x1x16xf32, #tpu.memory_space<vmem>>, %arg11: memref<1x64x2xf32, #tpu.memory_space<vmem>>) attributes {dimension_semantics = [#tpu.dimension_semantics<parallel>, #tpu.dimension_semantics<parallel>], iteration_bounds = array<i64: 2, 1>, scalar_prefetch = 0 : i64, scratch_operands = 0 : i64, tpu.core_type = #tpu.core_type<tc>, window_params = [{transform_indices = @transform_0, window_bounds = array<i64: 1, 8, 64, 4>}, {transform_indices = @transform_1, window_bounds = array<i64: 1, 64, 8>}, {pipeline_mode = #tpu.pipeline_mode<synchronous>, transform_indices = @transform_2, window_bounds = array<i64: 4, 16>}, {pipeline_mode = #tpu.pipeline_mode<synchronous>, transform_indices = @transform_3, window_bounds = array<i64: 8, 16>}, {pipeline_mode = #tpu.pipeline_mode<synchronous>, transform_indices = @transform_4, window_bounds = array<i64: 16, 2>}, {transform_indices = @transform_5, window_bounds = array<i64: 1, 1, 16>}, {transform_indices = @transform_6, window_bounds = array<i64: 1, 1, 16>}, {transform_indices = @transform_7, window_bounds = array<i64: 1, 1, 16>}, {transform_indices = @transform_8, window_bounds = array<i64: 1, 1, 16>}, {transform_indices = @transform_9, window_bounds = array<i64: 1, 64, 2>}]} {
    %c0 = arith.constant 0 : index
    %c0_0 = arith.constant 0 : index
    %c0_1 = arith.constant 0 : index
    %0 = vector.load %arg3[%c0, %c0_0, %c0_1] : memref<1x64x8xbf16, #tpu.memory_space<vmem>>, vector<1x64x8xbf16>
    %1 = vector.shape_cast %0 : vector<1x64x8xbf16> to vector<64x8xbf16>
    %c0_2 = arith.constant 0 : index
    %c0_3 = arith.constant 0 : index
    %2 = vector.load %arg5[%c0_2, %c0_3] : memref<8x16xbf16, #tpu.memory_space<vmem>>, vector<8x16xbf16>
    %cst = arith.constant dense<0.000000e+00> : vector<64x16xf32>
    %3 = tpu.matmul %1, %2, %cst {dimension_numbers = #tpu.dot_dimension_numbers<[1], [0], [0], [1], [0, 0, 1, 1], [], []>} : vector<64x8xbf16>, vector<8x16xbf16>, vector<64x16xf32> -> vector<64x16xf32>
    %c0_4 = arith.constant 0 : index
    %c0_5 = arith.constant 0 : index
    %c0_6 = arith.constant 0 : index
    %4 = vector.load %arg9[%c0_4, %c0_5, %c0_6] : memref<1x1x16xf32, #tpu.memory_space<vmem>>, vector<1x1x16xf32>
    %5 = vector.shape_cast %4 : vector<1x1x16xf32> to vector<1x16xf32>
    %6 = vector.broadcast %5 : vector<1x16xf32> to vector<64x16xf32>
    %7 = arith.mulf %3, %6 : vector<64x16xf32>
    %c0_7 = arith.constant 0 : index
    %c0_8 = arith.constant 0 : index
    %c0_9 = arith.constant 0 : index
    %8 = vector.load %arg10[%c0_7, %c0_8, %c0_9] : memref<1x1x16xf32, #tpu.memory_space<vmem>>, vector<1x1x16xf32>
    %9 = vector.shape_cast %8 : vector<1x1x16xf32> to vector<1x16xf32>
    %10 = vector.broadcast %9 : vector<1x16xf32> to vector<64x16xf32>
    %11 = arith.addf %7, %10 : vector<64x16xf32>
    %c0_10 = arith.constant 0 : index
    %c0_11 = arith.constant 0 : index
    %c0_12 = arith.constant 0 : index
    %12 = vector.load %arg7[%c0_10, %c0_11, %c0_12] : memref<1x1x16xf32, #tpu.memory_space<vmem>>, vector<1x1x16xf32>
    %13 = vector.shape_cast %12 : vector<1x1x16xf32> to vector<1x16xf32>
    %c0_13 = arith.constant 0 : index
    %c0_14 = arith.constant 0 : index
    %c0_15 = arith.constant 0 : index
    %14 = vector.load %arg8[%c0_13, %c0_14, %c0_15] : memref<1x1x16xf32, #tpu.memory_space<vmem>>, vector<1x1x16xf32>
    %15 = vector.shape_cast %14 : vector<1x1x16xf32> to vector<1x16xf32>
    %c0_16 = arith.constant 0 : index
    %c0_17 = arith.constant 0 : index
    %c0_18 = arith.constant 0 : index
    %c0_19 = arith.constant 0 : index
    %16 = vector.load %arg2[%c0_16, %c0_17, %c0_18, %c0_19] : memref<1x8x64x4xbf16, #tpu.memory_space<vmem>>, vector<1x1x64x4xbf16>
    %17 = vector.shape_cast %16 : vector<1x1x64x4xbf16> to vector<64x4xbf16>
    %c0_20 = arith.constant 0 : index
    %c0_21 = arith.constant 0 : index
    %18 = vector.load %arg4[%c0_20, %c0_21] : memref<4x16xbf16, #tpu.memory_space<vmem>>, vector<4x16xbf16>
    %cst_22 = arith.constant dense<0.000000e+00> : vector<64x16xf32>
    %19 = tpu.matmul %17, %18, %cst_22 {dimension_numbers = #tpu.dot_dimension_numbers<[1], [0], [0], [1], [0, 0, 1, 1], [], []>} : vector<64x4xbf16>, vector<4x16xbf16>, vector<64x16xf32> -> vector<64x16xf32>
    %20 = vector.broadcast %13 : vector<1x16xf32> to vector<64x16xf32>
    %21 = arith.mulf %19, %20 : vector<64x16xf32>
    %22 = vector.broadcast %15 : vector<1x16xf32> to vector<64x16xf32>
    %23 = arith.addf %21, %22 : vector<64x16xf32>
    %c0_23 = arith.constant 0 : index
    %c1 = arith.constant 1 : index
    %c0_24 = arith.constant 0 : index
    %c0_25 = arith.constant 0 : index
    %24 = vector.load %arg2[%c0_23, %c1, %c0_24, %c0_25] : memref<1x8x64x4xbf16, #tpu.memory_space<vmem>>, vector<1x1x64x4xbf16>
    %25 = vector.shape_cast %24 : vector<1x1x64x4xbf16> to vector<64x4xbf16>
    %c0_26 = arith.constant 0 : index
    %c0_27 = arith.constant 0 : index
    %26 = vector.load %arg4[%c0_26, %c0_27] : memref<4x16xbf16, #tpu.memory_space<vmem>>, vector<4x16xbf16>
    %cst_28 = arith.constant dense<0.000000e+00> : vector<64x16xf32>
    %27 = tpu.matmul %25, %26, %cst_28 {dimension_numbers = #tpu.dot_dimension_numbers<[1], [0], [0], [1], [0, 0, 1, 1], [], []>} : vector<64x4xbf16>, vector<4x16xbf16>, vector<64x16xf32> -> vector<64x16xf32>
    %28 = vector.broadcast %13 : vector<1x16xf32> to vector<64x16xf32>
    %29 = arith.mulf %27, %28 : vector<64x16xf32>
    %30 = vector.broadcast %15 : vector<1x16xf32> to vector<64x16xf32>
    %31 = arith.addf %29, %30 : vector<64x16xf32>
    %32 = arith.maximumf %23, %31 : vector<64x16xf32>
    %c0_29 = arith.constant 0 : index
    %c2 = arith.constant 2 : index
    %c0_30 = arith.constant 0 : index
    %c0_31 = arith.constant 0 : index
    %33 = vector.load %arg2[%c0_29, %c2, %c0_30, %c0_31] : memref<1x8x64x4xbf16, #tpu.memory_space<vmem>>, vector<1x1x64x4xbf16>
    %34 = vector.shape_cast %33 : vector<1x1x64x4xbf16> to vector<64x4xbf16>
    %c0_32 = arith.constant 0 : index
    %c0_33 = arith.constant 0 : index
    %35 = vector.load %arg4[%c0_32, %c0_33] : memref<4x16xbf16, #tpu.memory_space<vmem>>, vector<4x16xbf16>
    %cst_34 = arith.constant dense<0.000000e+00> : vector<64x16xf32>
    %36 = tpu.matmul %34, %35, %cst_34 {dimension_numbers = #tpu.dot_dimension_numbers<[1], [0], [0], [1], [0, 0, 1, 1], [], []>} : vector<64x4xbf16>, vector<4x16xbf16>, vector<64x16xf32> -> vector<64x16xf32>
    %37 = vector.broadcast %13 : vector<1x16xf32> to vector<64x16xf32>
    %38 = arith.mulf %36, %37 : vector<64x16xf32>
    %39 = vector.broadcast %15 : vector<1x16xf32> to vector<64x16xf32>
    %40 = arith.addf %38, %39 : vector<64x16xf32>
    %41 = arith.maximumf %32, %40 : vector<64x16xf32>
    %c0_35 = arith.constant 0 : index
    %c3 = arith.constant 3 : index
    %c0_36 = arith.constant 0 : index
    %c0_37 = arith.constant 0 : index
    %42 = vector.load %arg2[%c0_35, %c3, %c0_36, %c0_37] : memref<1x8x64x4xbf16, #tpu.memory_space<vmem>>, vector<1x1x64x4xbf16>
    %43 = vector.shape_cast %42 : vector<1x1x64x4xbf16> to vector<64x4xbf16>
    %c0_38 = arith.constant 0 : index
    %c0_39 = arith.constant 0 : index
    %44 = vector.load %arg4[%c0_38, %c0_39] : memref<4x16xbf16, #tpu.memory_space<vmem>>, vector<4x16xbf16>
    %cst_40 = arith.constant dense<0.000000e+00> : vector<64x16xf32>
    %45 = tpu.matmul %43, %44, %cst_40 {dimension_numbers = #tpu.dot_dimension_numbers<[1], [0], [0], [1], [0, 0, 1, 1], [], []>} : vector<64x4xbf16>, vector<4x16xbf16>, vector<64x16xf32> -> vector<64x16xf32>
    %46 = vector.broadcast %13 : vector<1x16xf32> to vector<64x16xf32>
    %47 = arith.mulf %45, %46 : vector<64x16xf32>
    %48 = vector.broadcast %15 : vector<1x16xf32> to vector<64x16xf32>
    %49 = arith.addf %47, %48 : vector<64x16xf32>
    %50 = arith.maximumf %41, %49 : vector<64x16xf32>
    %c0_41 = arith.constant 0 : index
    %c4 = arith.constant 4 : index
    %c0_42 = arith.constant 0 : index
    %c0_43 = arith.constant 0 : index
    %51 = vector.load %arg2[%c0_41, %c4, %c0_42, %c0_43] : memref<1x8x64x4xbf16, #tpu.memory_space<vmem>>, vector<1x1x64x4xbf16>
    %52 = vector.shape_cast %51 : vector<1x1x64x4xbf16> to vector<64x4xbf16>
    %c0_44 = arith.constant 0 : index
    %c0_45 = arith.constant 0 : index
    %53 = vector.load %arg4[%c0_44, %c0_45] : memref<4x16xbf16, #tpu.memory_space<vmem>>, vector<4x16xbf16>
    %cst_46 = arith.constant dense<0.000000e+00> : vector<64x16xf32>
    %54 = tpu.matmul %52, %53, %cst_46 {dimension_numbers = #tpu.dot_dimension_numbers<[1], [0], [0], [1], [0, 0, 1, 1], [], []>} : vector<64x4xbf16>, vector<4x16xbf16>, vector<64x16xf32> -> vector<64x16xf32>
    %55 = vector.broadcast %13 : vector<1x16xf32> to vector<64x16xf32>
    %56 = arith.mulf %54, %55 : vector<64x16xf32>
    %57 = vector.broadcast %15 : vector<1x16xf32> to vector<64x16xf32>
    %58 = arith.addf %56, %57 : vector<64x16xf32>
    %59 = arith.maximumf %50, %58 : vector<64x16xf32>
    %c0_47 = arith.constant 0 : index
    %c5 = arith.constant 5 : index
    %c0_48 = arith.constant 0 : index
    %c0_49 = arith.constant 0 : index
    %60 = vector.load %arg2[%c0_47, %c5, %c0_48, %c0_49] : memref<1x8x64x4xbf16, #tpu.memory_space<vmem>>, vector<1x1x64x4xbf16>
    %61 = vector.shape_cast %60 : vector<1x1x64x4xbf16> to vector<64x4xbf16>
    %c0_50 = arith.constant 0 : index
    %c0_51 = arith.constant 0 : index
    %62 = vector.load %arg4[%c0_50, %c0_51] : memref<4x16xbf16, #tpu.memory_space<vmem>>, vector<4x16xbf16>
    %cst_52 = arith.constant dense<0.000000e+00> : vector<64x16xf32>
    %63 = tpu.matmul %61, %62, %cst_52 {dimension_numbers = #tpu.dot_dimension_numbers<[1], [0], [0], [1], [0, 0, 1, 1], [], []>} : vector<64x4xbf16>, vector<4x16xbf16>, vector<64x16xf32> -> vector<64x16xf32>
    %64 = vector.broadcast %13 : vector<1x16xf32> to vector<64x16xf32>
    %65 = arith.mulf %63, %64 : vector<64x16xf32>
    %66 = vector.broadcast %15 : vector<1x16xf32> to vector<64x16xf32>
    %67 = arith.addf %65, %66 : vector<64x16xf32>
    %68 = arith.maximumf %59, %67 : vector<64x16xf32>
    %c0_53 = arith.constant 0 : index
    %c6 = arith.constant 6 : index
    %c0_54 = arith.constant 0 : index
    %c0_55 = arith.constant 0 : index
    %69 = vector.load %arg2[%c0_53, %c6, %c0_54, %c0_55] : memref<1x8x64x4xbf16, #tpu.memory_space<vmem>>, vector<1x1x64x4xbf16>
    %70 = vector.shape_cast %69 : vector<1x1x64x4xbf16> to vector<64x4xbf16>
    %c0_56 = arith.constant 0 : index
    %c0_57 = arith.constant 0 : index
    %71 = vector.load %arg4[%c0_56, %c0_57] : memref<4x16xbf16, #tpu.memory_space<vmem>>, vector<4x16xbf16>
    %cst_58 = arith.constant dense<0.000000e+00> : vector<64x16xf32>
    %72 = tpu.matmul %70, %71, %cst_58 {dimension_numbers = #tpu.dot_dimension_numbers<[1], [0], [0], [1], [0, 0, 1, 1], [], []>} : vector<64x4xbf16>, vector<4x16xbf16>, vector<64x16xf32> -> vector<64x16xf32>
    %73 = vector.broadcast %13 : vector<1x16xf32> to vector<64x16xf32>
    %74 = arith.mulf %72, %73 : vector<64x16xf32>
    %75 = vector.broadcast %15 : vector<1x16xf32> to vector<64x16xf32>
    %76 = arith.addf %74, %75 : vector<64x16xf32>
    %77 = arith.maximumf %68, %76 : vector<64x16xf32>
    %c0_59 = arith.constant 0 : index
    %c7 = arith.constant 7 : index
    %c0_60 = arith.constant 0 : index
    %c0_61 = arith.constant 0 : index
    %78 = vector.load %arg2[%c0_59, %c7, %c0_60, %c0_61] : memref<1x8x64x4xbf16, #tpu.memory_space<vmem>>, vector<1x1x64x4xbf16>
    %79 = vector.shape_cast %78 : vector<1x1x64x4xbf16> to vector<64x4xbf16>
    %c0_62 = arith.constant 0 : index
    %c0_63 = arith.constant 0 : index
    %80 = vector.load %arg4[%c0_62, %c0_63] : memref<4x16xbf16, #tpu.memory_space<vmem>>, vector<4x16xbf16>
    %cst_64 = arith.constant dense<0.000000e+00> : vector<64x16xf32>
    %81 = tpu.matmul %79, %80, %cst_64 {dimension_numbers = #tpu.dot_dimension_numbers<[1], [0], [0], [1], [0, 0, 1, 1], [], []>} : vector<64x4xbf16>, vector<4x16xbf16>, vector<64x16xf32> -> vector<64x16xf32>
    %82 = vector.broadcast %13 : vector<1x16xf32> to vector<64x16xf32>
    %83 = arith.mulf %81, %82 : vector<64x16xf32>
    %84 = vector.broadcast %15 : vector<1x16xf32> to vector<64x16xf32>
    %85 = arith.addf %83, %84 : vector<64x16xf32>
    %86 = arith.maximumf %77, %85 : vector<64x16xf32>
    %87 = arith.addf %86, %11 : vector<64x16xf32>
    %cst_65 = arith.constant 0.000000e+00 : f32
    %88 = vector.broadcast %cst_65 : f32 to vector<64x16xf32>
    %89 = arith.maximumf %87, %88 : vector<64x16xf32>
    %90 = arith.truncf %89 : vector<64x16xf32> to vector<64x16xbf16>
    %c0_66 = arith.constant 0 : index
    %c0_67 = arith.constant 0 : index
    %91 = vector.load %arg6[%c0_66, %c0_67] : memref<16x2xbf16, #tpu.memory_space<vmem>>, vector<16x2xbf16>
    %cst_68 = arith.constant dense<0.000000e+00> : vector<64x2xf32>
    %92 = tpu.matmul %90, %91, %cst_68 {dimension_numbers = #tpu.dot_dimension_numbers<[1], [0], [0], [1], [0, 0, 1, 1], [], []>} : vector<64x16xbf16>, vector<16x2xbf16>, vector<64x2xf32> -> vector<64x2xf32>
    %c0_69 = arith.constant 0 : index
    %c0_70 = arith.constant 0 : index
    %c0_71 = arith.constant 0 : index
    %93 = vector.load %arg11[%c0_69, %c0_70, %c0_71] : memref<1x64x2xf32, #tpu.memory_space<vmem>>, vector<1x64x2xf32>
    %94 = vector.shape_cast %93 : vector<1x64x2xf32> to vector<64x2xf32>
    %95 = vector.shape_cast %92 : vector<64x2xf32> to vector<1x64x2xf32>
    tpu.vector_store %arg11[%c0_69, %c0_70, %c0_71], %95 {strides = array<i32>} : memref<1x64x2xf32, #tpu.memory_space<vmem>>, vector<1x64x2xf32>,
    return
  }
  func.func @transform_0(%arg0: i32, %arg1: i32) -> (i32, i32, i32, i32) {
    %c0_i32 = arith.constant 0 : i32
    %c0_i32_0 = arith.constant 0 : i32
    %c0_i32_1 = arith.constant 0 : i32
    return %arg0, %c0_i32, %arg1, %c0_i32_0 : i32, i32, i32, i32
  }
  func.func @transform_1(%arg0: i32, %arg1: i32) -> (i32, i32, i32) {
    %c0_i32 = arith.constant 0 : i32
    %c0_i32_0 = arith.constant 0 : i32
    return %arg0, %arg1, %c0_i32 : i32, i32, i32
  }
  func.func @transform_2(%arg0: i32, %arg1: i32) -> (i32, i32) {
    %c0_i32 = arith.constant 0 : i32
    %c0_i32_0 = arith.constant 0 : i32
    %c0_i32_1 = arith.constant 0 : i32
    return %c0_i32, %c0_i32_0 : i32, i32
  }
  func.func @transform_3(%arg0: i32, %arg1: i32) -> (i32, i32) {
    %c0_i32 = arith.constant 0 : i32
    %c0_i32_0 = arith.constant 0 : i32
    %c0_i32_1 = arith.constant 0 : i32
    return %c0_i32, %c0_i32_0 : i32, i32
  }
  func.func @transform_4(%arg0: i32, %arg1: i32) -> (i32, i32) {
    %c0_i32 = arith.constant 0 : i32
    %c0_i32_0 = arith.constant 0 : i32
    %c0_i32_1 = arith.constant 0 : i32
    return %c0_i32, %c0_i32_0 : i32, i32
  }
  func.func @transform_5(%arg0: i32, %arg1: i32) -> (i32, i32, i32) {
    %c0_i32 = arith.constant 0 : i32
    %c0_i32_0 = arith.constant 0 : i32
    %c0_i32_1 = arith.constant 0 : i32
    return %arg0, %c0_i32, %c0_i32_0 : i32, i32, i32
  }
  func.func @transform_6(%arg0: i32, %arg1: i32) -> (i32, i32, i32) {
    %c0_i32 = arith.constant 0 : i32
    %c0_i32_0 = arith.constant 0 : i32
    %c0_i32_1 = arith.constant 0 : i32
    return %arg0, %c0_i32, %c0_i32_0 : i32, i32, i32
  }
  func.func @transform_7(%arg0: i32, %arg1: i32) -> (i32, i32, i32) {
    %c0_i32 = arith.constant 0 : i32
    %c0_i32_0 = arith.constant 0 : i32
    %c0_i32_1 = arith.constant 0 : i32
    return %arg0, %c0_i32, %c0_i32_0 : i32, i32, i32
  }
  func.func @transform_8(%arg0: i32, %arg1: i32) -> (i32, i32, i32) {
    %c0_i32 = arith.constant 0 : i32
    %c0_i32_0 = arith.constant 0 : i32
    %c0_i32_1 = arith.constant 0 : i32
    return %arg0, %c0_i32, %c0_i32_0 : i32, i32, i32
  }
  func.func @transform_9(%arg0: i32, %arg1: i32) -> (i32, i32, i32) {
    %c0_i32 = arith.constant 0 : i32
    %c0_i32_0 = arith.constant 0 : i32
    return %arg0, %arg1, %c0_i32 : i32, i32, i32
  }
}

module attributes {stable_mosaic.version = 11 : i64} {
  func.func @_value_out_kernel(%arg0: i32, %arg1: i32, %arg2: memref<1x256x4xbf16, #tpu.memory_space<vmem>>, %arg3: memref<1x256x2xbf16, #tpu.memory_space<vmem>>, %arg4: memref<2x16xbf16, #tpu.memory_space<vmem>>, %arg5: memref<4x16xbf16, #tpu.memory_space<vmem>>, %arg6: memref<16x8xbf16, #tpu.memory_space<vmem>>, %arg7: memref<1x8xf32, #tpu.memory_space<vmem>>, %arg8: memref<1x1x16xf32, #tpu.memory_space<vmem>>, %arg9: memref<1x1x16xf32, #tpu.memory_space<vmem>>, %arg10: memref<1x256x8xf32, #tpu.memory_space<vmem>>, %arg11: memref<1x1x8xf32, #tpu.memory_space<vmem>>, %arg12: memref<1x1x8xf32, #tpu.memory_space<vmem>>) attributes {dimension_semantics = [#tpu.dimension_semantics<parallel>, #tpu.dimension_semantics<arbitrary>], iteration_bounds = array<i64: 2, 2>, scalar_prefetch = 0 : i64, scratch_operands = 0 : i64, tpu.core_type = #tpu.core_type<tc>, window_params = [{transform_indices = @transform_0, window_bounds = array<i64: 1, 256, 4>}, {transform_indices = @transform_1, window_bounds = array<i64: 1, 256, 2>}, {pipeline_mode = #tpu.pipeline_mode<synchronous>, transform_indices = @transform_2, window_bounds = array<i64: 2, 16>}, {pipeline_mode = #tpu.pipeline_mode<synchronous>, transform_indices = @transform_3, window_bounds = array<i64: 4, 16>}, {pipeline_mode = #tpu.pipeline_mode<synchronous>, transform_indices = @transform_4, window_bounds = array<i64: 16, 8>}, {pipeline_mode = #tpu.pipeline_mode<synchronous>, transform_indices = @transform_5, window_bounds = array<i64: 1, 8>}, {transform_indices = @transform_6, window_bounds = array<i64: 1, 1, 16>}, {transform_indices = @transform_7, window_bounds = array<i64: 1, 1, 16>}, {transform_indices = @transform_8, window_bounds = array<i64: 1, 256, 8>}, {transform_indices = @transform_9, window_bounds = array<i64: 1, 1, 8>}, {transform_indices = @transform_10, window_bounds = array<i64: 1, 1, 8>}]} {
    %c0_i32 = arith.constant 0 : i32
    %0 = arith.cmpi eq, %arg1, %c0_i32 : i32
    %1 = arith.extui %0 : i1 to i32
    %c0_i32_0 = arith.constant 0 : i32
    %2 = arith.cmpi ne, %1, %c0_i32_0 : i32
    scf.if %2 {
      %cst_39 = arith.constant 0.000000e+00 : f32
      %46 = vector.broadcast %cst_39 : f32 to vector<1x1x8xf32>
      %c0_40 = arith.constant 0 : index
      %c0_41 = arith.constant 0 : index
      %c0_42 = arith.constant 0 : index
      %47 = vector.load %arg11[%c0_40, %c0_41, %c0_42] : memref<1x1x8xf32, #tpu.memory_space<vmem>>, vector<1x1x8xf32>
      tpu.vector_store %arg11[%c0_40, %c0_41, %c0_42], %46 {strides = array<i32>} : memref<1x1x8xf32, #tpu.memory_space<vmem>>, vector<1x1x8xf32>,
      %cst_43 = arith.constant 0.000000e+00 : f32
      %48 = vector.broadcast %cst_43 : f32 to vector<1x1x8xf32>
      %c0_44 = arith.constant 0 : index
      %c0_45 = arith.constant 0 : index
      %c0_46 = arith.constant 0 : index
      %49 = vector.load %arg12[%c0_44, %c0_45, %c0_46] : memref<1x1x8xf32, #tpu.memory_space<vmem>>, vector<1x1x8xf32>
      tpu.vector_store %arg12[%c0_44, %c0_45, %c0_46], %48 {strides = array<i32>} : memref<1x1x8xf32, #tpu.memory_space<vmem>>, vector<1x1x8xf32>,
    } else {
    }
    %c0 = arith.constant 0 : index
    %c0_1 = arith.constant 0 : index
    %c0_2 = arith.constant 0 : index
    %3 = vector.load %arg2[%c0, %c0_1, %c0_2] : memref<1x256x4xbf16, #tpu.memory_space<vmem>>, vector<1x256x4xbf16>
    %4 = vector.shape_cast %3 : vector<1x256x4xbf16> to vector<256x4xbf16>
    %c0_3 = arith.constant 0 : index
    %c0_4 = arith.constant 0 : index
    %5 = vector.load %arg5[%c0_3, %c0_4] : memref<4x16xbf16, #tpu.memory_space<vmem>>, vector<4x16xbf16>
    %cst = arith.constant dense<0.000000e+00> : vector<256x16xf32>
    %6 = tpu.matmul %4, %5, %cst {dimension_numbers = #tpu.dot_dimension_numbers<[1], [0], [0], [1], [0, 0, 1, 1], [], []>} : vector<256x4xbf16>, vector<4x16xbf16>, vector<256x16xf32> -> vector<256x16xf32>
    %c0_5 = arith.constant 0 : index
    %c0_6 = arith.constant 0 : index
    %c0_7 = arith.constant 0 : index
    %7 = vector.load %arg8[%c0_5, %c0_6, %c0_7] : memref<1x1x16xf32, #tpu.memory_space<vmem>>, vector<1x1x16xf32>
    %8 = vector.shape_cast %7 : vector<1x1x16xf32> to vector<1x16xf32>
    %9 = vector.broadcast %8 : vector<1x16xf32> to vector<256x16xf32>
    %10 = arith.mulf %6, %9 : vector<256x16xf32>
    %c0_8 = arith.constant 0 : index
    %c0_9 = arith.constant 0 : index
    %c0_10 = arith.constant 0 : index
    %11 = vector.load %arg9[%c0_8, %c0_9, %c0_10] : memref<1x1x16xf32, #tpu.memory_space<vmem>>, vector<1x1x16xf32>
    %12 = vector.shape_cast %11 : vector<1x1x16xf32> to vector<1x16xf32>
    %13 = vector.broadcast %12 : vector<1x16xf32> to vector<256x16xf32>
    %14 = arith.addf %10, %13 : vector<256x16xf32>
    %c0_11 = arith.constant 0 : index
    %c0_12 = arith.constant 0 : index
    %c0_13 = arith.constant 0 : index
    %15 = vector.load %arg3[%c0_11, %c0_12, %c0_13] : memref<1x256x2xbf16, #tpu.memory_space<vmem>>, vector<1x256x2xbf16>
    %16 = vector.shape_cast %15 : vector<1x256x2xbf16> to vector<256x2xbf16>
    %c0_14 = arith.constant 0 : index
    %c0_15 = arith.constant 0 : index
    %17 = vector.load %arg4[%c0_14, %c0_15] : memref<2x16xbf16, #tpu.memory_space<vmem>>, vector<2x16xbf16>
    %cst_16 = arith.constant dense<0.000000e+00> : vector<256x16xf32>
    %18 = tpu.matmul %16, %17, %cst_16 {dimension_numbers = #tpu.dot_dimension_numbers<[1], [0], [0], [1], [0, 0, 1, 1], [], []>} : vector<256x2xbf16>, vector<2x16xbf16>, vector<256x16xf32> -> vector<256x16xf32>
    %19 = arith.mulf %14, %18 : vector<256x16xf32>
    %20 = arith.truncf %19 : vector<256x16xf32> to vector<256x16xbf16>
    %c0_17 = arith.constant 0 : index
    %c0_18 = arith.constant 0 : index
    %21 = vector.load %arg6[%c0_17, %c0_18] : memref<16x8xbf16, #tpu.memory_space<vmem>>, vector<16x8xbf16>
    %cst_19 = arith.constant dense<0.000000e+00> : vector<256x8xf32>
    %22 = tpu.matmul %20, %21, %cst_19 {dimension_numbers = #tpu.dot_dimension_numbers<[1], [0], [0], [1], [0, 0, 1, 1], [], []>} : vector<256x16xbf16>, vector<16x8xbf16>, vector<256x8xf32> -> vector<256x8xf32>
    %c0_20 = arith.constant 0 : index
    %c0_21 = arith.constant 0 : index
    %23 = vector.load %arg7[%c0_20, %c0_21] : memref<1x8xf32, #tpu.memory_space<vmem>>, vector<1x8xf32>
    %24 = vector.broadcast %23 : vector<1x8xf32> to vector<256x8xf32>
    %25 = arith.addf %22, %24 : vector<256x8xf32>
    %c0_22 = arith.constant 0 : index
    %c0_23 = arith.constant 0 : index
    %c0_24 = arith.constant 0 : index
    %26 = vector.load %arg10[%c0_22, %c0_23, %c0_24] : memref<1x256x8xf32, #tpu.memory_space<vmem>>, vector<1x256x8xf32>
    %27 = vector.shape_cast %26 : vector<1x256x8xf32> to vector<256x8xf32>
    %28 = vector.shape_cast %25 : vector<256x8xf32> to vector<1x256x8xf32>
    tpu.vector_store %arg10[%c0_22, %c0_23, %c0_24], %28 {strides = array<i32>} : memref<1x256x8xf32, #tpu.memory_space<vmem>>, vector<1x256x8xf32>,
    %c0_25 = arith.constant 0 : index
    %c0_26 = arith.constant 0 : index
    %c0_27 = arith.constant 0 : index
    %29 = vector.load %arg11[%c0_25, %c0_26, %c0_27] : memref<1x1x8xf32, #tpu.memory_space<vmem>>, vector<1x1x8xf32>
    %30 = vector.shape_cast %29 : vector<1x1x8xf32> to vector<1x8xf32>
    %cst_28 = arith.constant dense<0.000000e+00> : vector<8xf32>
    %31 = vector.multi_reduction <add>, %25, %cst_28 [0] : vector<256x8xf32> to vector<8xf32>
    %32 = vector.shape_cast %31 : vector<8xf32> to vector<1x8xf32>
    %33 = arith.addf %30, %32 : vector<1x8xf32>
    %c0_29 = arith.constant 0 : index
    %c0_30 = arith.constant 0 : index
    %c0_31 = arith.constant 0 : index
    %34 = vector.load %arg11[%c0_29, %c0_30, %c0_31] : memref<1x1x8xf32, #tpu.memory_space<vmem>>, vector<1x1x8xf32>
    %35 = vector.shape_cast %34 : vector<1x1x8xf32> to vector<1x8xf32>
    %36 = vector.shape_cast %33 : vector<1x8xf32> to vector<1x1x8xf32>
    tpu.vector_store %arg11[%c0_29, %c0_30, %c0_31], %36 {strides = array<i32>} : memref<1x1x8xf32, #tpu.memory_space<vmem>>, vector<1x1x8xf32>,
    %c0_32 = arith.constant 0 : index
    %c0_33 = arith.constant 0 : index
    %c0_34 = arith.constant 0 : index
    %37 = vector.load %arg12[%c0_32, %c0_33, %c0_34] : memref<1x1x8xf32, #tpu.memory_space<vmem>>, vector<1x1x8xf32>
    %38 = vector.shape_cast %37 : vector<1x1x8xf32> to vector<1x8xf32>
    %39 = arith.mulf %25, %25 : vector<256x8xf32>
    %cst_35 = arith.constant dense<0.000000e+00> : vector<8xf32>
    %40 = vector.multi_reduction <add>, %39, %cst_35 [0] : vector<256x8xf32> to vector<8xf32>
    %41 = vector.shape_cast %40 : vector<8xf32> to vector<1x8xf32>
    %42 = arith.addf %38, %41 : vector<1x8xf32>
    %c0_36 = arith.constant 0 : index
    %c0_37 = arith.constant 0 : index
    %c0_38 = arith.constant 0 : index
    %43 = vector.load %arg12[%c0_36, %c0_37, %c0_38] : memref<1x1x8xf32, #tpu.memory_space<vmem>>, vector<1x1x8xf32>
    %44 = vector.shape_cast %43 : vector<1x1x8xf32> to vector<1x8xf32>
    %45 = vector.shape_cast %42 : vector<1x8xf32> to vector<1x1x8xf32>
    tpu.vector_store %arg12[%c0_36, %c0_37, %c0_38], %45 {strides = array<i32>} : memref<1x1x8xf32, #tpu.memory_space<vmem>>, vector<1x1x8xf32>,
    return
  }
  func.func @transform_0(%arg0: i32, %arg1: i32) -> (i32, i32, i32) {
    %c0_i32 = arith.constant 0 : i32
    %c0_i32_0 = arith.constant 0 : i32
    return %arg0, %arg1, %c0_i32 : i32, i32, i32
  }
  func.func @transform_1(%arg0: i32, %arg1: i32) -> (i32, i32, i32) {
    %c0_i32 = arith.constant 0 : i32
    %c0_i32_0 = arith.constant 0 : i32
    return %arg0, %arg1, %c0_i32 : i32, i32, i32
  }
  func.func @transform_2(%arg0: i32, %arg1: i32) -> (i32, i32) {
    %c0_i32 = arith.constant 0 : i32
    %c0_i32_0 = arith.constant 0 : i32
    %c0_i32_1 = arith.constant 0 : i32
    return %c0_i32, %c0_i32_0 : i32, i32
  }
  func.func @transform_3(%arg0: i32, %arg1: i32) -> (i32, i32) {
    %c0_i32 = arith.constant 0 : i32
    %c0_i32_0 = arith.constant 0 : i32
    %c0_i32_1 = arith.constant 0 : i32
    return %c0_i32, %c0_i32_0 : i32, i32
  }
  func.func @transform_4(%arg0: i32, %arg1: i32) -> (i32, i32) {
    %c0_i32 = arith.constant 0 : i32
    %c0_i32_0 = arith.constant 0 : i32
    %c0_i32_1 = arith.constant 0 : i32
    return %c0_i32, %c0_i32_0 : i32, i32
  }
  func.func @transform_5(%arg0: i32, %arg1: i32) -> (i32, i32) {
    %c0_i32 = arith.constant 0 : i32
    %c0_i32_0 = arith.constant 0 : i32
    %c0_i32_1 = arith.constant 0 : i32
    return %c0_i32, %c0_i32_0 : i32, i32
  }
  func.func @transform_6(%arg0: i32, %arg1: i32) -> (i32, i32, i32) {
    %c0_i32 = arith.constant 0 : i32
    %c0_i32_0 = arith.constant 0 : i32
    %c0_i32_1 = arith.constant 0 : i32
    return %arg0, %c0_i32, %c0_i32_0 : i32, i32, i32
  }
  func.func @transform_7(%arg0: i32, %arg1: i32) -> (i32, i32, i32) {
    %c0_i32 = arith.constant 0 : i32
    %c0_i32_0 = arith.constant 0 : i32
    %c0_i32_1 = arith.constant 0 : i32
    return %arg0, %c0_i32, %c0_i32_0 : i32, i32, i32
  }
  func.func @transform_8(%arg0: i32, %arg1: i32) -> (i32, i32, i32) {
    %c0_i32 = arith.constant 0 : i32
    %c0_i32_0 = arith.constant 0 : i32
    return %arg0, %arg1, %c0_i32 : i32, i32, i32
  }
  func.func @transform_9(%arg0: i32, %arg1: i32) -> (i32, i32, i32) {
    %c0_i32 = arith.constant 0 : i32
    %c0_i32_0 = arith.constant 0 : i32
    %c0_i32_1 = arith.constant 0 : i32
    return %arg0, %c0_i32, %c0_i32_0 : i32, i32, i32
  }
  func.func @transform_10(%arg0: i32, %arg1: i32) -> (i32, i32, i32) {
    %c0_i32 = arith.constant 0 : i32
    %c0_i32_0 = arith.constant 0 : i32
    %c0_i32_1 = arith.constant 0 : i32
    return %arg0, %c0_i32, %c0_i32_0 : i32, i32, i32
  }
}

</mosaic_0001>

<llo_original>
// kernel: mhca_forward.2
$region0: #{mhca_forward.2}
  #allocation0 [shape = 'u32[]', space=smem, size = 0x4, offset = 0x4, fixed_abs, tag = 'smem constant byte address 0x4 - core index']
  #allocation1 [shape = 'u32[144,128]{1,0:T(1,128)}', space=vmem, size = 0x12000, scoped, tag = 'internal scratch']
  %s0 = inlined_call_operand.vmem [shape: bf16[2,8,64,4], index: 0, kind: input, shape index: {}]
  %s1 = inlined_call_operand.vmem [shape: bf16[2,64,8], index: 1, kind: input, shape index: {}]
  %s2 = inlined_call_operand.vmem [shape: bf16[4,16], index: 2, kind: input, shape index: {}]
  %s3 = inlined_call_operand.vmem [shape: bf16[8,16], index: 3, kind: input, shape index: {}]
  %s4 = inlined_call_operand.vmem [shape: bf16[16,2], index: 4, kind: input, shape index: {}]
  %s5 = inlined_call_operand.vmem [shape: f32[2,1,16], index: 5, kind: input, shape index: {}]
  %s6 = inlined_call_operand.vmem [shape: f32[2,1,16], index: 6, kind: input, shape index: {}]
  %s7 = inlined_call_operand.vmem [shape: f32[2,1,16], index: 7, kind: input, shape index: {}]
  %s8 = inlined_call_operand.vmem [shape: f32[2,1,16], index: 8, kind: input, shape index: {}]
  %s9 = inlined_call_operand.vmem [shape: f32[2,64,2], index: 9, kind: output, shape index: {}]
  %s10 = sld [smem:[#allocation0]]
  $region69: #{mhca_forward.2} parent=0
    _
  %s12 = ssub.s32 1, %s10
  %s13 = scalar_select 0, %s12, %s10
  loop: start=0, step=1, limit=4
  $region2: #{mhca_forward.2} parent=0 // loop_pre_header
    _
  $region3: #{mhca_forward.2} parent=0 // loop_header
    %s15 = sphi 0, %s19
    %p16 = scmp.ge.s32.totalorder %s15, 4
    %s22 = sphi 0, %s34
    %s23 = sphi 0, %s30
    %s24 = sphi 0, %s22
    %s25 = sphi 0, %s23
    %s26 = sphi 0, %s24
    %s27 = sphi 0, %s25
    %s39 = sphi 0, %s41
    %s42 = sphi 0, %s39
    %s43 = sphi 0, %s42
    %s59 = sphi 0, %s43
    %s67 = sphi 0, %s69
    %s70 = sphi 0, %s67
    %s71 = sphi 0, %s70
    %s87 = sphi 0, %s71
    %s91 = sphi 0, %s91
    %s93 = sphi 0, %s91
    %s94 = sphi 0, %s93
    %s108 = sphi 0, %s94
    %s112 = sphi 0, %s112
    %s114 = sphi 0, %s112
    %s115 = sphi 0, %s114
    %s129 = sphi 0, %s115
    %s133 = sphi 0, %s133
    %s135 = sphi 0, %s133
    %s136 = sphi 0, %s135
    %s150 = sphi 0, %s136
    %s156 = sphi 0, %s158
    %s159 = sphi 0, %s156
    %s160 = sphi 0, %s159
    %s176 = sphi 0, %s160
    %s182 = sphi 0, %s184
    %s185 = sphi 0, %s182
    %s186 = sphi 0, %s185
    %s202 = sphi 0, %s186
    %s208 = sphi 0, %s210
    %s211 = sphi 0, %s208
    %s212 = sphi 0, %s211
    %s228 = sphi 0, %s212
    %s234 = sphi 0, %s236
    %s237 = sphi 0, %s234
    %s238 = sphi 0, %s237
    %s254 = sphi 0, %s238
    %s262 = sphi 0, %s264
    %s265 = sphi 0, %s262
    %s266 = sphi 0, %s265
    %s282 = sphi 0, %s266
  $region4: #{mhca_forward.2} parent=0 // loop_header_branch
    %18 = sbr.rel (%p16) target = $region8
  $region5: #{mhca_forward.2} parent=0 // loop_body
    %s20 = ssub.s32 %s15, 1
    %s21 = ssub.s32 %s15, 2
    %s28 = sadd.s32 1, %s23
    %p29 = scmp.ge.s32.totalorder %s28, 1
    %s30 = scalar_select %p29, 0, %s28
    %s31 = sadd.s32 1, %s22
    %s32 = scalar_select %p29, %s31, %s22
    %p33 = scmp.ge.s32.totalorder %s32, 2
    %s34 = scalar_select %p33, 0, %s32
    %s35 = ssub.s32 %s22, %s34
    %s36 = ssub.s32 %s23, %s30
    %s37 = sor.u32 %s35, %s36
    %p38 = scmp.eq.s32.totalorder %s37, 0
    %s40 = sadd.s32 %s39, 1
    %s41 = scalar_select %p38, %s39, %s40
    %p44 = pneg %p38
    %p45 = scmp.eq.s32.totalorder %s15, 1
    %p46 = por %p44, %p45
    %p47 = scmp.ne.s32.totalorder %s39, %s42
    %p48 = scmp.eq.s32.totalorder %s15, 0
    %p49 = por %p47, %p48
    %p50 = scmp.ne.s32.totalorder %s39, %s42
    %p51 = scmp.eq.s32.totalorder %s20, 1
    %p52 = por %p50, %p51
    %p53 = scmp.ne.s32.totalorder %s42, %s43
    %p54 = scmp.eq.s32.totalorder %s20, 0
    %p55 = por %p53, %p54
    %p56 = scmp.ne.s32.totalorder %s42, %s43
    %p57 = scmp.eq.s32.totalorder %s21, 1
    %p58 = por %p56, %p57
    %p60 = scmp.ne.s32.totalorder %s43, %s59
    %p61 = scmp.eq.s32.totalorder %s21, 0
    %p62 = por %p60, %p61
    %s63 = ssub.s32 %s22, %s34
    %s64 = ssub.s32 %s23, %s30
    %s65 = sor.u32 %s63, %s64
    %p66 = scmp.eq.s32.totalorder %s65, 0
    %s68 = sadd.s32 %s67, 1
    %s69 = scalar_select %p66, %s67, %s68
    %p72 = pneg %p66
    %p73 = scmp.eq.s32.totalorder %s15, 1
    %p74 = por %p72, %p73
    %p75 = scmp.ne.s32.totalorder %s67, %s70
    %p76 = scmp.eq.s32.totalorder %s15, 0
    %p77 = por %p75, %p76
    %p78 = scmp.ne.s32.totalorder %s67, %s70
    %p79 = scmp.eq.s32.totalorder %s20, 1
    %p80 = por %p78, %p79
    %p81 = scmp.ne.s32.totalorder %s70, %s71
    %p82 = scmp.eq.s32.totalorder %s20, 0
    %p83 = por %p81, %p82
    %p84 = scmp.ne.s32.totalorder %s70, %s71
    %p85 = scmp.eq.s32.totalorder %s21, 1
    %p86 = por %p84, %p85
    %p88 = scmp.ne.s32.totalorder %s71, %s87
    %p89 = scmp.eq.s32.totalorder %s21, 0
    %p90 = por %p88, %p89
    %s92 = sadd.s32 %s91, 1
    %p95 = scmp.eq.s32.totalorder %s15, 1
    %p96 = scmp.ne.s32.totalorder %s91, %s93
    %p97 = scmp.eq.s32.totalorder %s15, 0
    %p98 = por %p96, %p97
    %p99 = scmp.ne.s32.totalorder %s91, %s93
    %p100 = scmp.eq.s32.totalorder %s20, 1
    %p101 = por %p99, %p100
    %p102 = scmp.ne.s32.totalorder %s93, %s94
    %p103 = scmp.eq.s32.totalorder %s20, 0
    %p104 = por %p102, %p103
    %p105 = scmp.ne.s32.totalorder %s93, %s94
    %p106 = scmp.eq.s32.totalorder %s21, 1
    %p107 = por %p105, %p106
    %p109 = scmp.ne.s32.totalorder %s94, %s108
    %p110 = scmp.eq.s32.totalorder %s21, 0
    %p111 = por %p109, %p110
    %s113 = sadd.s32 %s112, 1
    %p116 = scmp.eq.s32.totalorder %s15, 1
    %p117 = scmp.ne.s32.totalorder %s112, %s114
    %p118 = scmp.eq.s32.totalorder %s15, 0
    %p119 = por %p117, %p118
    %p120 = scmp.ne.s32.totalorder %s112, %s114
    %p121 = scmp.eq.s32.totalorder %s20, 1
    %p122 = por %p120, %p121
    %p123 = scmp.ne.s32.totalorder %s114, %s115
    %p124 = scmp.eq.s32.totalorder %s20, 0
    %p125 = por %p123, %p124
    %p126 = scmp.ne.s32.totalorder %s114, %s115
    %p127 = scmp.eq.s32.totalorder %s21, 1
    %p128 = por %p126, %p127
    %p130 = scmp.ne.s32.totalorder %s115, %s129
    %p131 = scmp.eq.s32.totalorder %s21, 0
    %p132 = por %p130, %p131
    %s134 = sadd.s32 %s133, 1
    %p137 = scmp.eq.s32.totalorder %s15, 1
    %p138 = scmp.ne.s32.totalorder %s133, %s135
    %p139 = scmp.eq.s32.totalorder %s15, 0
    %p140 = por %p138, %p139
    %p141 = scmp.ne.s32.totalorder %s133, %s135
    %p142 = scmp.eq.s32.totalorder %s20, 1
    %p143 = por %p141, %p142
    %p144 = scmp.ne.s32.totalorder %s135, %s136
    %p145 = scmp.eq.s32.totalorder %s20, 0
    %p146 = por %p144, %p145
    %p147 = scmp.ne.s32.totalorder %s135, %s136
    %p148 = scmp.eq.s32.totalorder %s21, 1
    %p149 = por %p147, %p148
    %p151 = scmp.ne.s32.totalorder %s136, %s150
    %p152 = scmp.eq.s32.totalorder %s21, 0
    %p153 = por %p151, %p152
    %s154 = ssub.s32 %s22, %s34
    %p155 = scmp.eq.s32.totalorder %s154, 0
    %s157 = sadd.s32 %s156, 1
    %s158 = scalar_select %p155, %s156, %s157
    %p161 = pneg %p155
    %p162 = scmp.eq.s32.totalorder %s15, 1
    %p163 = por %p161, %p162
    %p164 = scmp.ne.s32.totalorder %s156, %s159
    %p165 = scmp.eq.s32.totalorder %s15, 0
    %p166 = por %p164, %p165
    %p167 = scmp.ne.s32.totalorder %s156, %s159
    %p168 = scmp.eq.s32.totalorder %s20, 1
    %p169 = por %p167, %p168
    %p170 = scmp.ne.s32.totalorder %s159, %s160
    %p171 = scmp.eq.s32.totalorder %s20, 0
    %p172 = por %p170, %p171
    %p173 = scmp.ne.s32.totalorder %s159, %s160
    %p174 = scmp.eq.s32.totalorder %s21, 1
    %p175 = por %p173, %p174
    %p177 = scmp.ne.s32.totalorder %s160, %s176
    %p178 = scmp.eq.s32.totalorder %s21, 0
    %p179 = por %p177, %p178
    %s180 = ssub.s32 %s22, %s34
    %p181 = scmp.eq.s32.totalorder %s180, 0
    %s183 = sadd.s32 %s182, 1
    %s184 = scalar_select %p181, %s182, %s183
    %p187 = pneg %p181
    %p188 = scmp.eq.s32.totalorder %s15, 1
    %p189 = por %p187, %p188
    %p190 = scmp.ne.s32.totalorder %s182, %s185
    %p191 = scmp.eq.s32.totalorder %s15, 0
    %p192 = por %p190, %p191
    %p193 = scmp.ne.s32.totalorder %s182, %s185
    %p194 = scmp.eq.s32.totalorder %s20, 1
    %p195 = por %p193, %p194
    %p196 = scmp.ne.s32.totalorder %s185, %s186
    %p197 = scmp.eq.s32.totalorder %s20, 0
    %p198 = por %p196, %p197
    %p199 = scmp.ne.s32.totalorder %s185, %s186
    %p200 = scmp.eq.s32.totalorder %s21, 1
    %p201 = por %p199, %p200
    %p203 = scmp.ne.s32.totalorder %s186, %s202
    %p204 = scmp.eq.s32.totalorder %s21, 0
    %p205 = por %p203, %p204
    %s206 = ssub.s32 %s22, %s34
    %p207 = scmp.eq.s32.totalorder %s206, 0
    %s209 = sadd.s32 %s208, 1
    %s210 = scalar_select %p207, %s208, %s209
    %p213 = pneg %p207
    %p214 = scmp.eq.s32.totalorder %s15, 1
    %p215 = por %p213, %p214
    %p216 = scmp.ne.s32.totalorder %s208, %s211
    %p217 = scmp.eq.s32.totalorder %s15, 0
    %p218 = por %p216, %p217
    %p219 = scmp.ne.s32.totalorder %s208, %s211
    %p220 = scmp.eq.s32.totalorder %s20, 1
    %p221 = por %p219, %p220
    %p222 = scmp.ne.s32.totalorder %s211, %s212
    %p223 = scmp.eq.s32.totalorder %s20, 0
    %p224 = por %p222, %p223
    %p225 = scmp.ne.s32.totalorder %s211, %s212
    %p226 = scmp.eq.s32.totalorder %s21, 1
    %p227 = por %p225, %p226
    %p229 = scmp.ne.s32.totalorder %s212, %s228
    %p230 = scmp.eq.s32.totalorder %s21, 0
    %p231 = por %p229, %p230
    %s232 = ssub.s32 %s22, %s34
    %p233 = scmp.eq.s32.totalorder %s232, 0
    %s235 = sadd.s32 %s234, 1
    %s236 = scalar_select %p233, %s234, %s235
    %p239 = pneg %p233
    %p240 = scmp.eq.s32.totalorder %s15, 1
    %p241 = por %p239, %p240
    %p242 = scmp.ne.s32.totalorder %s234, %s237
    %p243 = scmp.eq.s32.totalorder %s15, 0
    %p244 = por %p242, %p243
    %p245 = scmp.ne.s32.totalorder %s234, %s237
    %p246 = scmp.eq.s32.totalorder %s20, 1
    %p247 = por %p245, %p246
    %p248 = scmp.ne.s32.totalorder %s237, %s238
    %p249 = scmp.eq.s32.totalorder %s20, 0
    %p250 = por %p248, %p249
    %p251 = scmp.ne.s32.totalorder %s237, %s238
    %p252 = scmp.eq.s32.totalorder %s21, 1
    %p253 = por %p251, %p252
    %p255 = scmp.ne.s32.totalorder %s238, %s254
    %p256 = scmp.eq.s32.totalorder %s21, 0
    %p257 = por %p255, %p256
    %s258 = ssub.s32 %s22, %s34
    %s259 = ssub.s32 %s23, %s30
    %s260 = sor.u32 %s258, %s259
    %p261 = scmp.eq.s32.totalorder %s260, 0
    %s263 = sadd.s32 %s262, 1
    %s264 = scalar_select %p261, %s262, %s263
    %p267 = pneg %p261
    %p268 = scmp.eq.s32.totalorder %s15, 1
    %p269 = por %p267, %p268
    %p270 = scmp.ne.s32.totalorder %s262, %s265
    %p271 = scmp.eq.s32.totalorder %s15, 0
    %p272 = por %p270, %p271
    %p273 = scmp.ne.s32.totalorder %s262, %s265
    %p274 = scmp.eq.s32.totalorder %s20, 1
    %p275 = por %p273, %p274
    %p276 = scmp.ne.s32.totalorder %s265, %s266
    %p277 = scmp.eq.s32.totalorder %s20, 0
    %p278 = por %p276, %p277
    %p279 = scmp.ne.s32.totalorder %s265, %s266
    %p280 = scmp.eq.s32.totalorder %s21, 1
    %p281 = por %p279, %p280
    %p283 = scmp.ne.s32.totalorder %s266, %s282
    %p284 = scmp.eq.s32.totalorder %s21, 0
    %p285 = por %p283, %p284
    %p286 = scmp.le.s32.totalorder 1, %s15
    %p287 = scmp.lt.s32.totalorder %s15, 3
    %p288 = pnand %p286, %p287
    %p289 = pneg %p288
    // Predicated region
    $region9: #{mhca_forward.2} parent=5 // pred_check
      _
    $region10: #{mhca_forward.2} parent=5 // pred_check_branch
      %291 = sbr.rel (%p288) target = $region12
    $region11: #{mhca_forward.2} parent=5 // pred_region
      %s292 = ssub.s32 %s15, 1
      // Predicated region
      $region13: #{mhca_forward.2} parent=11 // pred_check
        %p293 = pneg %p104
      $region14: #{mhca_forward.2} parent=11 // pred_check_branch
        %295 = sbr.rel (%p293) target = $region16
      $region15: #{mhca_forward.2} parent=11 // pred_region
        _
      $region16: #{mhca_forward.2} parent=11 // pred_fallthru
        _
      // Predicated region
      $region17: #{mhca_forward.2} parent=11 // pred_check
        %p296 = pneg %p125
      $region18: #{mhca_forward.2} parent=11 // pred_check_branch
        %298 = sbr.rel (%p296) target = $region20
      $region19: #{mhca_forward.2} parent=11 // pred_region
        _
      $region20: #{mhca_forward.2} parent=11 // pred_fallthru
        _
      // Predicated region
      $region21: #{mhca_forward.2} parent=11 // pred_check
        %p299 = pneg %p146
      $region22: #{mhca_forward.2} parent=11 // pred_check_branch
        %301 = sbr.rel (%p299) target = $region24
      $region23: #{mhca_forward.2} parent=11 // pred_region
        _
      $region24: #{mhca_forward.2} parent=11 // pred_fallthru
        _
    $region12: #{mhca_forward.2} parent=5 // pred_fallthru
      _
    %p302 = scmp.lt.s32.totalorder %s15, 2
    // Predicated region
    $region25: #{mhca_forward.2} parent=5 // pred_check
      %p303 = pneg %p302
    $region26: #{mhca_forward.2} parent=5 // pred_check_branch
      %305 = sbr.rel (%p303) target = $region28
    $region27: #{mhca_forward.2} parent=5 // pred_region
      // Predicated region
      $region29: #{mhca_forward.2} parent=27 // pred_check
        %p306 = pneg %p49
      $region30: #{mhca_forward.2} parent=27 // pred_check_branch
        %308 = sbr.rel (%p306) target = $region32
      $region31: #{mhca_forward.2} parent=27 // pred_region
        %s309 = smul.u32 8, %s23
        %p310 = scmp.lt.s32.totalorder %s22, 1
        %s311 = scalar_select %p310, %s22, 1
        %p312 = scmp.lt.s32.totalorder %s309, 7
        %s313 = scalar_select %p312, %s309, 7
        %s314 = smul.addr %s311, 64
        %s315 = sadd.s32 %s313, %s314
        %s316 = smul.addr %s315, 4
        %s317 = scalar_lea.vmem %s0, %s316
        %s318 = smul.u32 8, %s23
      $region32: #{mhca_forward.2} parent=27 // pred_fallthru
        _
      // Predicated region
      $region33: #{mhca_forward.2} parent=27 // pred_check
        %p319 = pneg %p77
      $region34: #{mhca_forward.2} parent=27 // pred_check_branch
        %321 = sbr.rel (%p319) target = $region36
      $region35: #{mhca_forward.2} parent=27 // pred_region
        %s322 = smul.u32 8, %s23
        %p323 = scmp.lt.s32.totalorder %s22, 1
        %s324 = scalar_select %p323, %s22, 1
        %p325 = scmp.lt.s32.totalorder %s322, 7
        %s326 = scalar_select %p325, %s322, 7
        %s327 = smul.addr %s324, 8
        %s328 = sadd.s32 %s326, %s327
        %s329 = smul.addr %s328, 4
        %s330 = scalar_lea.vmem %s1, %s329
        %s331 = smul.u32 8, %s23
      $region36: #{mhca_forward.2} parent=27 // pred_fallthru
        _
      // Predicated region
      $region37: #{mhca_forward.2} parent=27 // pred_check
        %p332 = pneg %p166
      $region38: #{mhca_forward.2} parent=27 // pred_check_branch
        %334 = sbr.rel (%p332) target = $region40
      $region39: #{mhca_forward.2} parent=27 // pred_region
        %p335 = scmp.lt.s32.totalorder %s22, 1
        %s336 = scalar_select %p335, %s22, 1
        %s337 = scalar_lea.vmem %s5, %s336
      $region40: #{mhca_forward.2} parent=27 // pred_fallthru
        _
      // Predicated region
      $region41: #{mhca_forward.2} parent=27 // pred_check
        %p338 = pneg %p192
      $region42: #{mhca_forward.2} parent=27 // pred_check_branch
        %340 = sbr.rel (%p338) target = $region44
      $region43: #{mhca_forward.2} parent=27 // pred_region
        %p341 = scmp.lt.s32.totalorder %s22, 1
        %s342 = scalar_select %p341, %s22, 1
        %s343 = scalar_lea.vmem %s6, %s342
      $region44: #{mhca_forward.2} parent=27 // pred_fallthru
        _
      // Predicated region
      $region45: #{mhca_forward.2} parent=27 // pred_check
        %p344 = pneg %p218
      $region46: #{mhca_forward.2} parent=27 // pred_check_branch
        %346 = sbr.rel (%p344) target = $region48
      $region47: #{mhca_forward.2} parent=27 // pred_region
        %p347 = scmp.lt.s32.totalorder %s22, 1
        %s348 = scalar_select %p347, %s22, 1
        %s349 = scalar_lea.vmem %s7, %s348
      $region48: #{mhca_forward.2} parent=27 // pred_fallthru
        _
      // Predicated region
      $region49: #{mhca_forward.2} parent=27 // pred_check
        %p350 = pneg %p244
      $region50: #{mhca_forward.2} parent=27 // pred_check_branch
        %352 = sbr.rel (%p350) target = $region52
      $region51: #{mhca_forward.2} parent=27 // pred_region
        %p353 = scmp.lt.s32.totalorder %s22, 1
        %s354 = scalar_select %p353, %s22, 1
        %s355 = scalar_lea.vmem %s8, %s354
      $region52: #{mhca_forward.2} parent=27 // pred_fallthru
        _
    $region28: #{mhca_forward.2} parent=5 // pred_fallthru
      _
    %p356 = scmp.le.s32.totalorder 1, %s15
    %p357 = scmp.lt.s32.totalorder %s15, 3
    %p358 = pnand %p356, %p357
    %p359 = pneg %p358
    // Predicated region
    $region53: #{mhca_forward.2} parent=5 // pred_check
      _
    $region54: #{mhca_forward.2} parent=5 // pred_check_branch
      %361 = sbr.rel (%p358) target = $region56
    $region55: #{mhca_forward.2} parent=5 // pred_region
      %s362 = ssub.s32 %s15, 1
      %s363 = smul.u32 8, %s25
      %p364 = scmp.lt.s32.totalorder %s24, 1
      %s365 = scalar_select %p364, %s24, 1
      %p366 = scmp.lt.s32.totalorder %s363, 7
      %s367 = scalar_select %p366, %s363, 7
      %s368 = smul.addr %s365, 64
      %s369 = sadd.s32 %s367, %s368
      %s370 = smul.addr %s369, 4
      %s371 = scalar_lea.vmem %s0, %s370
      %p372 = pneg %p55
      %p373 = pneg %p52
      %s374 = smul.u32 8, %s25
      %p375 = scmp.lt.s32.totalorder %s24, 1
      %s376 = scalar_select %p375, %s24, 1
      %p377 = scmp.lt.s32.totalorder %s374, 7
      %s378 = scalar_select %p377, %s374, 7
      %s379 = smul.addr %s376, 8
      %s380 = sadd.s32 %s378, %s379
      %s381 = smul.addr %s380, 4
      %s382 = scalar_lea.vmem %s1, %s381
      %p383 = pneg %p83
      %p384 = pneg %p80
      %p385 = pneg %p104
      %p386 = pneg %p101
      %p387 = pneg %p125
      %p388 = pneg %p122
      %p389 = pneg %p146
      %p390 = pneg %p143
      %p391 = scmp.lt.s32.totalorder %s24, 1
      %s392 = scalar_select %p391, %s24, 1
      %s393 = scalar_lea.vmem %s5, %s392
      %p394 = pneg %p172
      %p395 = pneg %p169
      %p396 = scmp.lt.s32.totalorder %s24, 1
      %s397 = scalar_select %p396, %s24, 1
      %s398 = scalar_lea.vmem %s6, %s397
      %p399 = pneg %p198
      %p400 = pneg %p195
      %p401 = scmp.lt.s32.totalorder %s24, 1
      %s402 = scalar_select %p401, %s24, 1
      %s403 = scalar_lea.vmem %s7, %s402
      %p404 = pneg %p224
      %p405 = pneg %p221
      %p406 = scmp.lt.s32.totalorder %s24, 1
      %s407 = scalar_select %p406, %s24, 1
      %s408 = scalar_lea.vmem %s8, %s407
      %p409 = pneg %p250
      %p410 = pneg %p247
      %p411 = pneg %p278
      %p412 = pneg %p275
      %s413 = smul.u32 8, %s25
      %p414 = scmp.lt.s32.totalorder %s24, 1
      %s415 = scalar_select %p414, %s24, 1
      %p416 = scmp.lt.s32.totalorder %s413, 7
      %s417 = scalar_select %p416, %s413, 7
      %s418 = smul.addr %s415, 8
      %s419 = sadd.s32 %s417, %s418
      %s420 = smul.addr %s419, 8
      %s421 = scalar_lea.vmem %s9, %s420
      %s422 = smul.u32 8, %s25
      %p423 = scmp.lt.s32.totalorder %s24, 1
      %s424 = scalar_select %p423, %s24, 1
      %p425 = scmp.lt.s32.totalorder %s422, 7
      %s426 = scalar_select %p425, %s422, 7
      %s427 = smul.addr %s424, 64
      %s428 = sadd.s32 %s426, %s427
      %s429 = smul.addr %s428, 4
      %s430 = scalar_lea.vmem %s0, %s429
      %s431 = smul.u32 8, %s25
      %s432 = smul.u32 8, %s25
      %p433 = scmp.lt.s32.totalorder %s24, 1
      %s434 = scalar_select %p433, %s24, 1
      %p435 = scmp.lt.s32.totalorder %s432, 7
      %s436 = scalar_select %p435, %s432, 7
      %s437 = smul.addr %s434, 8
      %s438 = sadd.s32 %s436, %s437
      %s439 = smul.addr %s438, 4
      %s440 = scalar_lea.vmem %s1, %s439
      %s441 = smul.u32 8, %s25
      %p442 = scmp.lt.s32.totalorder %s24, 1
      %s443 = scalar_select %p442, %s24, 1
      %s444 = scalar_lea.vmem %s5, %s443
      %p445 = scmp.lt.s32.totalorder %s24, 1
      %s446 = scalar_select %p445, %s24, 1
      %s447 = scalar_lea.vmem %s6, %s446
      %p448 = scmp.lt.s32.totalorder %s24, 1
      %s449 = scalar_select %p448, %s24, 1
      %s450 = scalar_lea.vmem %s7, %s449
      %p451 = scmp.lt.s32.totalorder %s24, 1
      %s452 = scalar_select %p451, %s24, 1
      %s453 = scalar_lea.vmem %s8, %s452
      %s454 = smul.u32 8, %s25
      %p455 = scmp.lt.s32.totalorder %s24, 1
      %s456 = scalar_select %p455, %s24, 1
      %p457 = scmp.lt.s32.totalorder %s454, 7
      %s458 = scalar_select %p457, %s454, 7
      %s459 = smul.addr %s456, 8
      %s460 = sadd.s32 %s458, %s459
      %s461 = smul.addr %s460, 8
      %s462 = scalar_lea.vmem %s9, %s461
      %s463 = smul.u32 8, %s25
      %v465 = vld [vmem:[%s440] sm:$0xf]
      %v466 = vld [vmem:[%s440 + $0x4] sm:$0xf]
      %v467 = vld [vmem:[%s440 + $0x8] sm:$0xf]
      %v468 = vld [vmem:[%s440 + $0xc] sm:$0xf]
      %v469 = vld [vmem:[%s440 + $0x10] sm:$0xf]
      %v470 = vld [vmem:[%s440 + $0x14] sm:$0xf]
      %v471 = vld [vmem:[%s440 + $0x18] sm:$0xf]
      %v472 = vld [vmem:[%s440 + $0x1c] sm:$0xf]
      %v473 = vld [vmem:[%s3] sm:$0xf]
      %v482 = vunpack.c.l.b16 %v465
      %v483 = vunpack.c.l.b16 %v466
      %v484 = vunpack.c.l.b16 %v467
      %v485 = vunpack.c.l.b16 %v468
      %v486 = vunpack.c.l.b16 %v469
      %v487 = vunpack.c.l.b16 %v470
      %v488 = vunpack.c.l.b16 %v471
      %v489 = vunpack.c.l.b16 %v472
      %v490 = vpack.c.b16 %v483, %v482
      %v491 = vpack.c.b16 %v485, %v484
      %v492 = vpack.c.b16 %v487, %v486
      %v493 = vpack.c.b16 %v489, %v488
      %vm494 = vcmask 64512
      %v496 = vsel %vm494, %v490, 0
      %v499 = vsel %vm494, %v491, 0
      %v502 = vsel %vm494, %v492, 0
      %v505 = vsel %vm494, %v493, 0
      %vm507 = vcmask 1043456
      %v509 = vsel %vm507, %v473, 0
      %511 = vmatprep.subr.bf16.mxu0 0
      %512 = vmatpush1.bf16.msra.mxu0 %v509
      %513 = vmatprep.subr.bf16.mxu0 0
      %514 = vmatpush1.bf16.msra.mxu0 0
      %515 = vmatprep.subr.bf16.mxu0 0
      %516 = vmatpush1.bf16.msra.mxu0 0
      %517 = vmatprep.subr.bf16.mxu0 0
      %518 = vmatpush1.bf16.msra.mxu0 0
      %519 = vmatprep.subr.bf16.mxu0 0
      %520 = vmatpush1.bf16.msra.mxu0 0
      %521 = vmatprep.subr.bf16.mxu0 0
      %522 = vmatpush1.bf16.msra.mxu0 0
      %523 = vmatprep.subr.bf16.mxu0 0
      %524 = vmatpush1.bf16.msra.mxu0 0
      %525 = vmatprep.subr.bf16.mxu0 0
      %526 = vmatpush1.bf16.msra.mxu0 0
      %527 = vmatprep.subr.bf16.mxu0 0
      %528 = vmatpush1.bf16.msra.mxu0 0
      %529 = vmatprep.subr.bf16.mxu0 0
      %530 = vmatpush1.bf16.msra.mxu0 0
      %531 = vmatprep.subr.bf16.mxu0 0
      %532 = vmatpush1.bf16.msra.mxu0 0
      %533 = vmatprep.subr.bf16.mxu0 0
      %534 = vmatpush1.bf16.msra.mxu0 0
      %535 = vmatprep.subr.bf16.mxu0 0
      %536 = vmatpush1.bf16.msra.mxu0 0
      %537 = vmatprep.subr.bf16.mxu0 0
      %538 = vmatpush1.bf16.msra.mxu0 0
      %539 = vmatprep.subr.bf16.mxu0 0
      %540 = vmatpush1.bf16.msra.mxu0 0
      %541 = vmatprep.subr.bf16.mxu0 0
      %542 = vmatpush1.bf16.msra.mxu0 0
      %543 = vmatprep.mubr.bf16.mxu0 0
      %544 = vmatmul.mubr.bf16.gmra.mrb[0].mxu0 %v496
      %v545 = vpop.f32.mrb[0].mxu0
      %v546 = vadd.f32 0.0, %v545
      %v547 = vpop.f32.mrb[0].mxu0
      %v548 = vpop.f32.mrb[0].mxu0
      %v549 = vadd.f32 0.0, %v548
      %v550 = vpop.f32.mrb[0].mxu0
      %551 = vmatprep.mubr.bf16.mxu0 0
      %552 = vmatmul.mubr.bf16.gmra.mrb[0].mxu0 %v499
      %v553 = vpop.f32.mrb[0].mxu0
      %v554 = vadd.f32 0.0, %v553
      %v555 = vpop.f32.mrb[0].mxu0
      %v556 = vpop.f32.mrb[0].mxu0
      %v557 = vadd.f32 0.0, %v556
      %v558 = vpop.f32.mrb[0].mxu0
      %559 = vmatprep.mubr.bf16.mxu0 0
      %560 = vmatmul.mubr.bf16.gmra.mrb[0].mxu0 %v502
      %v561 = vpop.f32.mrb[0].mxu0
      %v562 = vadd.f32 0.0, %v561
      %v563 = vpop.f32.mrb[0].mxu0
      %v564 = vpop.f32.mrb[0].mxu0
      %v565 = vadd.f32 0.0, %v564
      %v566 = vpop.f32.mrb[0].mxu0
      %567 = vmatprep.mubr.bf16.mxu0 0
      %568 = vmatmul.mubr.bf16.gmra.mrb[0].mxu0 %v505
      %v569 = vpop.f32.mrb[0].mxu0
      %v570 = vadd.f32 0.0, %v569
      %v571 = vpop.f32.mrb[0].mxu0
      %v572 = vpop.f32.mrb[0].mxu0
      %v573 = vadd.f32 0.0, %v572
      %v574 = vpop.f32.mrb[0].mxu0
      %575 = vdwg.mxu0
      %v576 = vld [vmem:[%s450] sm:$0x1]
      %v578 = vlaneseq
      %v579 = vshrl.u32 %v578, 7
      %v580 = vsub.s32 0, %v579
      %v581 = vrot.slane %v576, %v580
      %v583 = vmul.f32 %v546, %v581
      %v584 = vmul.f32 %v549, %v581
      %v585 = vmul.f32 %v554, %v581
      %v586 = vmul.f32 %v557, %v581
      %v587 = vmul.f32 %v562, %v581
      %v588 = vmul.f32 %v565, %v581
      %v589 = vmul.f32 %v570, %v581
      %v590 = vmul.f32 %v573, %v581
      %v591 = vld [vmem:[%s453] sm:$0x1]
      %v593 = vlaneseq
      %v594 = vshrl.u32 %v593, 7
      %v595 = vsub.s32 0, %v594
      %v596 = vrot.slane %v591, %v595
      %v598 = vadd.f32 %v583, %v596
      %v599 = vadd.f32 %v584, %v596
      %v600 = vadd.f32 %v585, %v596
      %v601 = vadd.f32 %v586, %v596
      %v602 = vadd.f32 %v587, %v596
      %v603 = vadd.f32 %v588, %v596
      %v604 = vadd.f32 %v589, %v596
      %v605 = vadd.f32 %v590, %v596
      %v606 = vld [vmem:[%s444] sm:$0x1]
      %v607 = vld [vmem:[%s447] sm:$0x1]
      %v608 = vld [vmem:[%s430] sm:$0xf]
      %v609 = vld [vmem:[%s430 + $0x4] sm:$0xf]
      %v610 = vld [vmem:[%s430 + $0x8] sm:$0xf]
      %v611 = vld [vmem:[%s430 + $0xc] sm:$0xf]
      %v612 = vld [vmem:[%s430 + $0x10] sm:$0xf]
      %v613 = vld [vmem:[%s430 + $0x14] sm:$0xf]
      %v614 = vld [vmem:[%s430 + $0x18] sm:$0xf]
      %v615 = vld [vmem:[%s430 + $0x1c] sm:$0xf]
      %v616 = vld [vmem:[%s2] sm:$0x3]
      %v625 = vunpack.c.l.b16 %v608
      %v626 = vunpack.c.l.b16 %v609
      %v627 = vunpack.c.l.b16 %v610
      %v628 = vunpack.c.l.b16 %v611
      %v629 = vunpack.c.l.b16 %v612
      %v630 = vunpack.c.l.b16 %v613
      %v631 = vunpack.c.l.b16 %v614
      %v632 = vunpack.c.l.b16 %v615
      %v633 = vpack.c.b16 %v626, %v625
      %v634 = vpack.c.b16 %v628, %v627
      %v635 = vpack.c.b16 %v630, %v629
      %v636 = vpack.c.b16 %v632, %v631
      %vm637 = vcmask 31744
      %v639 = vsel %vm637, %v633, 0
      %v642 = vsel %vm637, %v634, 0
      %v645 = vsel %vm637, %v635, 0
      %v648 = vsel %vm637, %v636, 0
      %vm650 = vcmask 1041408
      %v652 = vsel %vm650, %v616, 0
      %654 = vmatprep.subr.bf16.mxu0 0
      %655 = vmatpush1.bf16.msra.mxu0 %v652
      %656 = vmatprep.subr.bf16.mxu0 0
      %657 = vmatpush1.bf16.msra.mxu0 0
      %658 = vmatprep.subr.bf16.mxu0 0
      %659 = vmatpush1.bf16.msra.mxu0 0
      %660 = vmatprep.subr.bf16.mxu0 0
      %661 = vmatpush1.bf16.msra.mxu0 0
      %662 = vmatprep.subr.bf16.mxu0 0
      %663 = vmatpush1.bf16.msra.mxu0 0
      %664 = vmatprep.subr.bf16.mxu0 0
      %665 = vmatpush1.bf16.msra.mxu0 0
      %666 = vmatprep.subr.bf16.mxu0 0
      %667 = vmatpush1.bf16.msra.mxu0 0
      %668 = vmatprep.subr.bf16.mxu0 0
      %669 = vmatpush1.bf16.msra.mxu0 0
      %670 = vmatprep.subr.bf16.mxu0 0
      %671 = vmatpush1.bf16.msra.mxu0 0
      %672 = vmatprep.subr.bf16.mxu0 0
      %673 = vmatpush1.bf16.msra.mxu0 0
      %674 = vmatprep.subr.bf16.mxu0 0
      %675 = vmatpush1.bf16.msra.mxu0 0
      %676 = vmatprep.subr.bf16.mxu0 0
      %677 = vmatpush1.bf16.msra.mxu0 0
      %678 = vmatprep.subr.bf16.mxu0 0
      %679 = vmatpush1.bf16.msra.mxu0 0
      %680 = vmatprep.subr.bf16.mxu0 0
      %681 = vmatpush1.bf16.msra.mxu0 0
      %682 = vmatprep.subr.bf16.mxu0 0
      %683 = vmatpush1.bf16.msra.mxu0 0
      %684 = vmatprep.subr.bf16.mxu0 0
      %685 = vmatpush1.bf16.msra.mxu0 0
      %686 = vmatprep.mubr.bf16.mxu0 0
      %687 = vmatmul.mubr.bf16.gmra.mrb[0].mxu0 %v639
      %v688 = vpop.f32.mrb[0].mxu0
      %v689 = vadd.f32 0.0, %v688
      %v690 = vpop.f32.mrb[0].mxu0
      %v691 = vpop.f32.mrb[0].mxu0
      %v692 = vadd.f32 0.0, %v691
      %v693 = vpop.f32.mrb[0].mxu0
      %694 = vmatprep.mubr.bf16.mxu0 0
      %695 = vmatmul.mubr.bf16.gmra.mrb[0].mxu0 %v642
      %v696 = vpop.f32.mrb[0].mxu0
      %v697 = vadd.f32 0.0, %v696
      %v698 = vpop.f32.mrb[0].mxu0
      %v699 = vpop.f32.mrb[0].mxu0
      %v700 = vadd.f32 0.0, %v699
      %v701 = vpop.f32.mrb[0].mxu0
      %702 = vmatprep.mubr.bf16.mxu0 0
      %703 = vmatmul.mubr.bf16.gmra.mrb[0].mxu0 %v645
      %v704 = vpop.f32.mrb[0].mxu0
      %v705 = vadd.f32 0.0, %v704
      %v706 = vpop.f32.mrb[0].mxu0
      %v707 = vpop.f32.mrb[0].mxu0
      %v708 = vadd.f32 0.0, %v707
      %v709 = vpop.f32.mrb[0].mxu0
      %710 = vmatprep.mubr.bf16.mxu0 0
      %711 = vmatmul.mubr.bf16.gmra.mrb[0].mxu0 %v648
      %v712 = vpop.f32.mrb[0].mxu0
      %v713 = vadd.f32 0.0, %v712
      %v714 = vpop.f32.mrb[0].mxu0
      %v715 = vpop.f32.mrb[0].mxu0
      %v716 = vadd.f32 0.0, %v715
      %v717 = vpop.f32.mrb[0].mxu0
      %718 = vdwg.mxu0
      %v720 = vlaneseq
      %v721 = vshrl.u32 %v720, 7
      %v722 = vsub.s32 0, %v721
      %v723 = vrot.slane %v606, %v722
      %v725 = vmul.f32 %v689, %v723
      %v726 = vmul.f32 %v692, %v723
      %v727 = vmul.f32 %v697, %v723
      %v728 = vmul.f32 %v700, %v723
      %v729 = vmul.f32 %v705, %v723
      %v730 = vmul.f32 %v708, %v723
      %v731 = vmul.f32 %v713, %v723
      %v732 = vmul.f32 %v716, %v723
      %v734 = vlaneseq
      %v735 = vshrl.u32 %v734, 7
      %v736 = vsub.s32 0, %v735
      %v737 = vrot.slane %v607, %v736
      %v739 = vadd.f32 %v725, %v737
      %v740 = vadd.f32 %v726, %v737
      %v741 = vadd.f32 %v727, %v737
      %v742 = vadd.f32 %v728, %v737
      %v743 = vadd.f32 %v729, %v737
      %v744 = vadd.f32 %v730, %v737
      %v745 = vadd.f32 %v731, %v737
      %v746 = vadd.f32 %v732, %v737
      %s747 = scalar_lea.vmem %s430, 32
      %v748 = vld [vmem:[%s747] sm:$0xf]
      %v749 = vld [vmem:[%s747 + $0x4] sm:$0xf]
      %v750 = vld [vmem:[%s747 + $0x8] sm:$0xf]
      %v751 = vld [vmem:[%s747 + $0xc] sm:$0xf]
      %v752 = vld [vmem:[%s747 + $0x10] sm:$0xf]
      %v753 = vld [vmem:[%s747 + $0x14] sm:$0xf]
      %v754 = vld [vmem:[%s747 + $0x18] sm:$0xf]
      %v755 = vld [vmem:[%s747 + $0x1c] sm:$0xf]
      %v764 = vunpack.c.l.b16 %v748
      %v765 = vunpack.c.l.b16 %v749
      %v766 = vunpack.c.l.b16 %v750
      %v767 = vunpack.c.l.b16 %v751
      %v768 = vunpack.c.l.b16 %v752
      %v769 = vunpack.c.l.b16 %v753
      %v770 = vunpack.c.l.b16 %v754
      %v771 = vunpack.c.l.b16 %v755
      %v772 = vpack.c.b16 %v765, %v764
      %v773 = vpack.c.b16 %v767, %v766
      %v774 = vpack.c.b16 %v769, %v768
      %v775 = vpack.c.b16 %v771, %v770
      %v777 = vsel %vm637, %v772, 0
      %v780 = vsel %vm637, %v773, 0
      %v783 = vsel %vm637, %v774, 0
      %v786 = vsel %vm637, %v775, 0
      %788 = vmatprep.subr.bf16.mxu0 0
      %789 = vmatpush1.bf16.msra.mxu0 %v652
      %790 = vmatprep.subr.bf16.mxu0 0
      %791 = vmatpush1.bf16.msra.mxu0 0
      %792 = vmatprep.subr.bf16.mxu0 0
      %793 = vmatpush1.bf16.msra.mxu0 0
      %794 = vmatprep.subr.bf16.mxu0 0
      %795 = vmatpush1.bf16.msra.mxu0 0
      %796 = vmatprep.subr.bf16.mxu0 0
      %797 = vmatpush1.bf16.msra.mxu0 0
      %798 = vmatprep.subr.bf16.mxu0 0
      %799 = vmatpush1.bf16.msra.mxu0 0
      %800 = vmatprep.subr.bf16.mxu0 0
      %801 = vmatpush1.bf16.msra.mxu0 0
      %802 = vmatprep.subr.bf16.mxu0 0
      %803 = vmatpush1.bf16.msra.mxu0 0
      %804 = vmatprep.subr.bf16.mxu0 0
      %805 = vmatpush1.bf16.msra.mxu0 0
      %806 = vmatprep.subr.bf16.mxu0 0
      %807 = vmatpush1.bf16.msra.mxu0 0
      %808 = vmatprep.subr.bf16.mxu0 0
      %809 = vmatpush1.bf16.msra.mxu0 0
      %810 = vmatprep.subr.bf16.mxu0 0
      %811 = vmatpush1.bf16.msra.mxu0 0
      %812 = vmatprep.subr.bf16.mxu0 0
      %813 = vmatpush1.bf16.msra.mxu0 0
      %814 = vmatprep.subr.bf16.mxu0 0
      %815 = vmatpush1.bf16.msra.mxu0 0
      %816 = vmatprep.subr.bf16.mxu0 0
      %817 = vmatpush1.bf16.msra.mxu0 0
      %818 = vmatprep.subr.bf16.mxu0 0
      %819 = vmatpush1.bf16.msra.mxu0 0
      %820 = vmatprep.mubr.bf16.mxu0 0
      %821 = vmatmul.mubr.bf16.gmra.mrb[0].mxu0 %v777
      %v822 = vpop.f32.mrb[0].mxu0
      %v823 = vadd.f32 0.0, %v822
      %v824 = vpop.f32.mrb[0].mxu0
      %v825 = vpop.f32.mrb[0].mxu0
      %v826 = vadd.f32 0.0, %v825
      %v827 = vpop.f32.mrb[0].mxu0
      %828 = vmatprep.mubr.bf16.mxu0 0
      %829 = vmatmul.mubr.bf16.gmra.mrb[0].mxu0 %v780
      %v830 = vpop.f32.mrb[0].mxu0
      %v831 = vadd.f32 0.0, %v830
      %v832 = vpop.f32.mrb[0].mxu0
      %v833 = vpop.f32.mrb[0].mxu0
      %v834 = vadd.f32 0.0, %v833
      %v835 = vpop.f32.mrb[0].mxu0
      %836 = vmatprep.mubr.bf16.mxu0 0
      %837 = vmatmul.mubr.bf16.gmra.mrb[0].mxu0 %v783
      %v838 = vpop.f32.mrb[0].mxu0
      %v839 = vadd.f32 0.0, %v838
      %v840 = vpop.f32.mrb[0].mxu0
      %v841 = vpop.f32.mrb[0].mxu0
      %v842 = vadd.f32 0.0, %v841
      %v843 = vpop.f32.mrb[0].mxu0
      %844 = vmatprep.mubr.bf16.mxu0 0
      %845 = vmatmul.mubr.bf16.gmra.mrb[0].mxu0 %v786
      %v846 = vpop.f32.mrb[0].mxu0
      %v847 = vadd.f32 0.0, %v846
      %v848 = vpop.f32.mrb[0].mxu0
      %v849 = vpop.f32.mrb[0].mxu0
      %v850 = vadd.f32 0.0, %v849
      %v851 = vpop.f32.mrb[0].mxu0
      %852 = vdwg.mxu0
      %v853 = vmul.f32 %v823, %v723
      %v854 = vmul.f32 %v826, %v723
      %v855 = vmul.f32 %v831, %v723
      %v856 = vmul.f32 %v834, %v723
      %v857 = vmul.f32 %v839, %v723
      %v858 = vmul.f32 %v842, %v723
      %v859 = vmul.f32 %v847, %v723
      %v860 = vmul.f32 %v850, %v723
      %v861 = vadd.f32 %v853, %v737
      %v862 = vadd.f32 %v854, %v737
      %v863 = vadd.f32 %v855, %v737
      %v864 = vadd.f32 %v856, %v737
      %v865 = vadd.f32 %v857, %v737
      %v866 = vadd.f32 %v858, %v737
      %v867 = vadd.f32 %v859, %v737
      %v868 = vadd.f32 %v860, %v737
      %v869 = vmax.f32 %v739, %v861
      %v870 = vmax.f32 %v740, %v862
      %v871 = vmax.f32 %v741, %v863
      %v872 = vmax.f32 %v742, %v864
      %v873 = vmax.f32 %v743, %v865
      %v874 = vmax.f32 %v744, %v866
      %v875 = vmax.f32 %v745, %v867
      %v876 = vmax.f32 %v746, %v868
      %s877 = scalar_lea.vmem %s430, 64
      %v878 = vld [vmem:[%s877] sm:$0xf]
      %v879 = vld [vmem:[%s877 + $0x4] sm:$0xf]
      %v880 = vld [vmem:[%s877 + $0x8] sm:$0xf]
      %v881 = vld [vmem:[%s877 + $0xc] sm:$0xf]
      %v882 = vld [vmem:[%s877 + $0x10] sm:$0xf]
      %v883 = vld [vmem:[%s877 + $0x14] sm:$0xf]
      %v884 = vld [vmem:[%s877 + $0x18] sm:$0xf]
      %v885 = vld [vmem:[%s877 + $0x1c] sm:$0xf]
      %v894 = vunpack.c.l.b16 %v878
      %v895 = vunpack.c.l.b16 %v879
      %v896 = vunpack.c.l.b16 %v880
      %v897 = vunpack.c.l.b16 %v881
      %v898 = vunpack.c.l.b16 %v882
      %v899 = vunpack.c.l.b16 %v883
      %v900 = vunpack.c.l.b16 %v884
      %v901 = vunpack.c.l.b16 %v885
      %v902 = vpack.c.b16 %v895, %v894
      %v903 = vpack.c.b16 %v897, %v896
      %v904 = vpack.c.b16 %v899, %v898
      %v905 = vpack.c.b16 %v901, %v900
      %v907 = vsel %vm637, %v902, 0
      %v910 = vsel %vm637, %v903, 0
      %v913 = vsel %vm637, %v904, 0
      %v916 = vsel %vm637, %v905, 0
      %918 = vmatprep.subr.bf16.mxu0 0
      %919 = vmatpush1.bf16.msra.mxu0 %v652
      %920 = vmatprep.subr.bf16.mxu0 0
      %921 = vmatpush1.bf16.msra.mxu0 0
      %922 = vmatprep.subr.bf16.mxu0 0
      %923 = vmatpush1.bf16.msra.mxu0 0
      %924 = vmatprep.subr.bf16.mxu0 0
      %925 = vmatpush1.bf16.msra.mxu0 0
      %926 = vmatprep.subr.bf16.mxu0 0
      %927 = vmatpush1.bf16.msra.mxu0 0
      %928 = vmatprep.subr.bf16.mxu0 0
      %929 = vmatpush1.bf16.msra.mxu0 0
      %930 = vmatprep.subr.bf16.mxu0 0
      %931 = vmatpush1.bf16.msra.mxu0 0
      %932 = vmatprep.subr.bf16.mxu0 0
      %933 = vmatpush1.bf16.msra.mxu0 0
      %934 = vmatprep.subr.bf16.mxu0 0
      %935 = vmatpush1.bf16.msra.mxu0 0
      %936 = vmatprep.subr.bf16.mxu0 0
      %937 = vmatpush1.bf16.msra.mxu0 0
      %938 = vmatprep.subr.bf16.mxu0 0
      %939 = vmatpush1.bf16.msra.mxu0 0
      %940 = vmatprep.subr.bf16.mxu0 0
      %941 = vmatpush1.bf16.msra.mxu0 0
      %942 = vmatprep.subr.bf16.mxu0 0
      %943 = vmatpush1.bf16.msra.mxu0 0
      %944 = vmatprep.subr.bf16.mxu0 0
      %945 = vmatpush1.bf16.msra.mxu0 0
      %946 = vmatprep.subr.bf16.mxu0 0
      %947 = vmatpush1.bf16.msra.mxu0 0
      %948 = vmatprep.subr.bf16.mxu0 0
      %949 = vmatpush1.bf16.msra.mxu0 0
      %950 = vmatprep.mubr.bf16.mxu0 0
      %951 = vmatmul.mubr.bf16.gmra.mrb[0].mxu0 %v907
      %v952 = vpop.f32.mrb[0].mxu0
      %v953 = vadd.f32 0.0, %v952
      %v954 = vpop.f32.mrb[0].mxu0
      %v955 = vpop.f32.mrb[0].mxu0
      %v956 = vadd.f32 0.0, %v955
      %v957 = vpop.f32.mrb[0].mxu0
      %958 = vmatprep.mubr.bf16.mxu0 0
      %959 = vmatmul.mubr.bf16.gmra.mrb[0].mxu0 %v910
      %v960 = vpop.f32.mrb[0].mxu0
      %v961 = vadd.f32 0.0, %v960
      %v962 = vpop.f32.mrb[0].mxu0
      %v963 = vpop.f32.mrb[0].mxu0
      %v964 = vadd.f32 0.0, %v963
      %v965 = vpop.f32.mrb[0].mxu0
      %966 = vmatprep.mubr.bf16.mxu0 0
      %967 = vmatmul.mubr.bf16.gmra.mrb[0].mxu0 %v913
      %v968 = vpop.f32.mrb[0].mxu0
      %v969 = vadd.f32 0.0, %v968
      %v970 = vpop.f32.mrb[0].mxu0
      %v971 = vpop.f32.mrb[0].mxu0
      %v972 = vadd.f32 0.0, %v971
      %v973 = vpop.f32.mrb[0].mxu0
      %974 = vmatprep.mubr.bf16.mxu0 0
      %975 = vmatmul.mubr.bf16.gmra.mrb[0].mxu0 %v916
      %v976 = vpop.f32.mrb[0].mxu0
      %v977 = vadd.f32 0.0, %v976
      %v978 = vpop.f32.mrb[0].mxu0
      %v979 = vpop.f32.mrb[0].mxu0
      %v980 = vadd.f32 0.0, %v979
      %v981 = vpop.f32.mrb[0].mxu0
      %982 = vdwg.mxu0
      %v983 = vmul.f32 %v953, %v723
      %v984 = vmul.f32 %v956, %v723
      %v985 = vmul.f32 %v961, %v723
      %v986 = vmul.f32 %v964, %v723
      %v987 = vmul.f32 %v969, %v723
      %v988 = vmul.f32 %v972, %v723
      %v989 = vmul.f32 %v977, %v723
      %v990 = vmul.f32 %v980, %v723
      %v991 = vadd.f32 %v983, %v737
      %v992 = vadd.f32 %v984, %v737
      %v993 = vadd.f32 %v985, %v737
      %v994 = vadd.f32 %v986, %v737
      %v995 = vadd.f32 %v987, %v737
      %v996 = vadd.f32 %v988, %v737
      %v997 = vadd.f32 %v989, %v737
      %v998 = vadd.f32 %v990, %v737
      %v999 = vmax.f32 %v869, %v991
      %v1000 = vmax.f32 %v870, %v992
      %v1001 = vmax.f32 %v871, %v993
      %v1002 = vmax.f32 %v872, %v994
      %v1003 = vmax.f32 %v873, %v995
      %v1004 = vmax.f32 %v874, %v996
      %v1005 = vmax.f32 %v875, %v997
      %v1006 = vmax.f32 %v876, %v998
      %s1007 = scalar_lea.vmem %s430, 96
      %v1008 = vld [vmem:[%s1007] sm:$0xf]
      %v1009 = vld [vmem:[%s1007 + $0x4] sm:$0xf]
      %v1010 = vld [vmem:[%s1007 + $0x8] sm:$0xf]
      %v1011 = vld [vmem:[%s1007 + $0xc] sm:$0xf]
      %v1012 = vld [vmem:[%s1007 + $0x10] sm:$0xf]
      %v1013 = vld [vmem:[%s1007 + $0x14] sm:$0xf]
      %v1014 = vld [vmem:[%s1007 + $0x18] sm:$0xf]
      %v1015 = vld [vmem:[%s1007 + $0x1c] sm:$0xf]
      %v1024 = vunpack.c.l.b16 %v1008
      %v1025 = vunpack.c.l.b16 %v1009
      %v1026 = vunpack.c.l.b16 %v1010
      %v1027 = vunpack.c.l.b16 %v1011
      %v1028 = vunpack.c.l.b16 %v1012
      %v1029 = vunpack.c.l.b16 %v1013
      %v1030 = vunpack.c.l.b16 %v1014
      %v1031 = vunpack.c.l.b16 %v1015
      %v1032 = vpack.c.b16 %v1025, %v1024
      %v1033 = vpack.c.b16 %v1027, %v1026
      %v1034 = vpack.c.b16 %v1029, %v1028
      %v1035 = vpack.c.b16 %v1031, %v1030
      %v1037 = vsel %vm637, %v1032, 0
      %v1040 = vsel %vm637, %v1033, 0
      %v1043 = vsel %vm637, %v1034, 0
      %v1046 = vsel %vm637, %v1035, 0
      %1048 = vmatprep.subr.bf16.mxu0 0
      %1049 = vmatpush1.bf16.msra.mxu0 %v652
      %1050 = vmatprep.subr.bf16.mxu0 0
      %1051 = vmatpush1.bf16.msra.mxu0 0
      %1052 = vmatprep.subr.bf16.mxu0 0
      %1053 = vmatpush1.bf16.msra.mxu0 0
      %1054 = vmatprep.subr.bf16.mxu0 0
      %1055 = vmatpush1.bf16.msra.mxu0 0
      %1056 = vmatprep.subr.bf16.mxu0 0
      %1057 = vmatpush1.bf16.msra.mxu0 0
      %1058 = vmatprep.subr.bf16.mxu0 0
      %1059 = vmatpush1.bf16.msra.mxu0 0
      %1060 = vmatprep.subr.bf16.mxu0 0
      %1061 = vmatpush1.bf16.msra.mxu0 0
      %1062 = vmatprep.subr.bf16.mxu0 0
      %1063 = vmatpush1.bf16.msra.mxu0 0
      %1064 = vmatprep.subr.bf16.mxu0 0
      %1065 = vmatpush1.bf16.msra.mxu0 0
      %1066 = vmatprep.subr.bf16.mxu0 0
      %1067 = vmatpush1.bf16.msra.mxu0 0
      %1068 = vmatprep.subr.bf16.mxu0 0
      %1069 = vmatpush1.bf16.msra.mxu0 0
      %1070 = vmatprep.subr.bf16.mxu0 0
      %1071 = vmatpush1.bf16.msra.mxu0 0
      %1072 = vmatprep.subr.bf16.mxu0 0
      %1073 = vmatpush1.bf16.msra.mxu0 0
      %1074 = vmatprep.subr.bf16.mxu0 0
      %1075 = vmatpush1.bf16.msra.mxu0 0
      %1076 = vmatprep.subr.bf16.mxu0 0
      %1077 = vmatpush1.bf16.msra.mxu0 0
      %1078 = vmatprep.subr.bf16.mxu0 0
      %1079 = vmatpush1.bf16.msra.mxu0 0
      %1080 = vmatprep.mubr.bf16.mxu0 0
      %1081 = vmatmul.mubr.bf16.gmra.mrb[0].mxu0 %v1037
      %v1082 = vpop.f32.mrb[0].mxu0
      %v1083 = vadd.f32 0.0, %v1082
      %v1084 = vpop.f32.mrb[0].mxu0
      %v1085 = vpop.f32.mrb[0].mxu0
      %v1086 = vadd.f32 0.0, %v1085
      %v1087 = vpop.f32.mrb[0].mxu0
      %1088 = vmatprep.mubr.bf16.mxu0 0
      %1089 = vmatmul.mubr.bf16.gmra.mrb[0].mxu0 %v1040
      %v1090 = vpop.f32.mrb[0].mxu0
      %v1091 = vadd.f32 0.0, %v1090
      %v1092 = vpop.f32.mrb[0].mxu0
      %v1093 = vpop.f32.mrb[0].mxu0
      %v1094 = vadd.f32 0.0, %v1093
      %v1095 = vpop.f32.mrb[0].mxu0
      %1096 = vmatprep.mubr.bf16.mxu0 0
      %1097 = vmatmul.mubr.bf16.gmra.mrb[0].mxu0 %v1043
      %v1098 = vpop.f32.mrb[0].mxu0
      %v1099 = vadd.f32 0.0, %v1098
      %v1100 = vpop.f32.mrb[0].mxu0
      %v1101 = vpop.f32.mrb[0].mxu0
      %v1102 = vadd.f32 0.0, %v1101
      %v1103 = vpop.f32.mrb[0].mxu0
      %1104 = vmatprep.mubr.bf16.mxu0 0
      %1105 = vmatmul.mubr.bf16.gmra.mrb[0].mxu0 %v1046
      %v1106 = vpop.f32.mrb[0].mxu0
      %v1107 = vadd.f32 0.0, %v1106
      %v1108 = vpop.f32.mrb[0].mxu0
      %v1109 = vpop.f32.mrb[0].mxu0
      %v1110 = vadd.f32 0.0, %v1109
      %v1111 = vpop.f32.mrb[0].mxu0
      %1112 = vdwg.mxu0
      %v1113 = vmul.f32 %v1083, %v723
      %v1114 = vmul.f32 %v1086, %v723
      %v1115 = vmul.f32 %v1091, %v723
      %v1116 = vmul.f32 %v1094, %v723
      %v1117 = vmul.f32 %v1099, %v723
      %v1118 = vmul.f32 %v1102, %v723
      %v1119 = vmul.f32 %v1107, %v723
      %v1120 = vmul.f32 %v1110, %v723
      %v1121 = vadd.f32 %v1113, %v737
      %v1122 = vadd.f32 %v1114, %v737
      %v1123 = vadd.f32 %v1115, %v737
      %v1124 = vadd.f32 %v1116, %v737
      %v1125 = vadd.f32 %v1117, %v737
      %v1126 = vadd.f32 %v1118, %v737
      %v1127 = vadd.f32 %v1119, %v737
      %v1128 = vadd.f32 %v1120, %v737
      %v1129 = vmax.f32 %v999, %v1121
      %v1130 = vmax.f32 %v1000, %v1122
      %v1131 = vmax.f32 %v1001, %v1123
      %v1132 = vmax.f32 %v1002, %v1124
      %v1133 = vmax.f32 %v1003, %v1125
      %v1134 = vmax.f32 %v1004, %v1126
      %v1135 = vmax.f32 %v1005, %v1127
      %v1136 = vmax.f32 %v1006, %v1128
      %s1137 = scalar_lea.vmem %s430, 128
      %v1138 = vld [vmem:[%s1137] sm:$0xf]
      %v1139 = vld [vmem:[%s1137 + $0x4] sm:$0xf]
      %v1140 = vld [vmem:[%s1137 + $0x8] sm:$0xf]
      %v1141 = vld [vmem:[%s1137 + $0xc] sm:$0xf]
      %v1142 = vld [vmem:[%s1137 + $0x10] sm:$0xf]
      %v1143 = vld [vmem:[%s1137 + $0x14] sm:$0xf]
      %v1144 = vld [vmem:[%s1137 + $0x18] sm:$0xf]
      %v1145 = vld [vmem:[%s1137 + $0x1c] sm:$0xf]
      %v1154 = vunpack.c.l.b16 %v1138
      %v1155 = vunpack.c.l.b16 %v1139
      %v1156 = vunpack.c.l.b16 %v1140
      %v1157 = vunpack.c.l.b16 %v1141
      %v1158 = vunpack.c.l.b16 %v1142
      %v1159 = vunpack.c.l.b16 %v1143
      %v1160 = vunpack.c.l.b16 %v1144
      %v1161 = vunpack.c.l.b16 %v1145
      %v1162 = vpack.c.b16 %v1155, %v1154
      %v1163 = vpack.c.b16 %v1157, %v1156
      %v1164 = vpack.c.b16 %v1159, %v1158
      %v1165 = vpack.c.b16 %v1161, %v1160
      %v1167 = vsel %vm637, %v1162, 0
      %v1170 = vsel %vm637, %v1163, 0
      %v1173 = vsel %vm637, %v1164, 0
      %v1176 = vsel %vm637, %v1165, 0
      %1178 = vmatprep.subr.bf16.mxu0 0
      %1179 = vmatpush1.bf16.msra.mxu0 %v652
      %1180 = vmatprep.subr.bf16.mxu0 0
      %1181 = vmatpush1.bf16.msra.mxu0 0
      %1182 = vmatprep.subr.bf16.mxu0 0
      %1183 = vmatpush1.bf16.msra.mxu0 0
      %1184 = vmatprep.subr.bf16.mxu0 0
      %1185 = vmatpush1.bf16.msra.mxu0 0
      %1186 = vmatprep.subr.bf16.mxu0 0
      %1187 = vmatpush1.bf16.msra.mxu0 0
      %1188 = vmatprep.subr.bf16.mxu0 0
      %1189 = vmatpush1.bf16.msra.mxu0 0
      %1190 = vmatprep.subr.bf16.mxu0 0
      %1191 = vmatpush1.bf16.msra.mxu0 0
      %1192 = vmatprep.subr.bf16.mxu0 0
      %1193 = vmatpush1.bf16.msra.mxu0 0
      %1194 = vmatprep.subr.bf16.mxu0 0
      %1195 = vmatpush1.bf16.msra.mxu0 0
      %1196 = vmatprep.subr.bf16.mxu0 0
      %1197 = vmatpush1.bf16.msra.mxu0 0
      %1198 = vmatprep.subr.bf16.mxu0 0
      %1199 = vmatpush1.bf16.msra.mxu0 0
      %1200 = vmatprep.subr.bf16.mxu0 0
      %1201 = vmatpush1.bf16.msra.mxu0 0
      %1202 = vmatprep.subr.bf16.mxu0 0
      %1203 = vmatpush1.bf16.msra.mxu0 0
      %1204 = vmatprep.subr.bf16.mxu0 0
      %1205 = vmatpush1.bf16.msra.mxu0 0
      %1206 = vmatprep.subr.bf16.mxu0 0
      %1207 = vmatpush1.bf16.msra.mxu0 0
      %1208 = vmatprep.subr.bf16.mxu0 0
      %1209 = vmatpush1.bf16.msra.mxu0 0
      %1210 = vmatprep.mubr.bf16.mxu0 0
      %1211 = vmatmul.mubr.bf16.gmra.mrb[0].mxu0 %v1167
      %v1212 = vpop.f32.mrb[0].mxu0
      %v1213 = vadd.f32 0.0, %v1212
      %v1214 = vpop.f32.mrb[0].mxu0
      %v1215 = vpop.f32.mrb[0].mxu0
      %v1216 = vadd.f32 0.0, %v1215
      %v1217 = vpop.f32.mrb[0].mxu0
      %1218 = vmatprep.mubr.bf16.mxu0 0
      %1219 = vmatmul.mubr.bf16.gmra.mrb[0].mxu0 %v1170
      %v1220 = vpop.f32.mrb[0].mxu0
      %v1221 = vadd.f32 0.0, %v1220
      %v1222 = vpop.f32.mrb[0].mxu0
      %v1223 = vpop.f32.mrb[0].mxu0
      %v1224 = vadd.f32 0.0, %v1223
      %v1225 = vpop.f32.mrb[0].mxu0
      %1226 = vmatprep.mubr.bf16.mxu0 0
      %1227 = vmatmul.mubr.bf16.gmra.mrb[0].mxu0 %v1173
      %v1228 = vpop.f32.mrb[0].mxu0
      %v1229 = vadd.f32 0.0, %v1228
      %v1230 = vpop.f32.mrb[0].mxu0
      %v1231 = vpop.f32.mrb[0].mxu0
      %v1232 = vadd.f32 0.0, %v1231
      %v1233 = vpop.f32.mrb[0].mxu0
      %1234 = vmatprep.mubr.bf16.mxu0 0
      %1235 = vmatmul.mubr.bf16.gmra.mrb[0].mxu0 %v1176
      %v1236 = vpop.f32.mrb[0].mxu0
      %v1237 = vadd.f32 0.0, %v1236
      %v1238 = vpop.f32.mrb[0].mxu0
      %v1239 = vpop.f32.mrb[0].mxu0
      %v1240 = vadd.f32 0.0, %v1239
      %v1241 = vpop.f32.mrb[0].mxu0
      %1242 = vdwg.mxu0
      %v1243 = vmul.f32 %v1213, %v723
      %v1244 = vmul.f32 %v1216, %v723
      %v1245 = vmul.f32 %v1221, %v723
      %v1246 = vmul.f32 %v1224, %v723
      %v1247 = vmul.f32 %v1229, %v723
      %v1248 = vmul.f32 %v1232, %v723
      %v1249 = vmul.f32 %v1237, %v723
      %v1250 = vmul.f32 %v1240, %v723
      %v1251 = vadd.f32 %v1243, %v737
      %v1252 = vadd.f32 %v1244, %v737
      %v1253 = vadd.f32 %v1245, %v737
      %v1254 = vadd.f32 %v1246, %v737
      %v1255 = vadd.f32 %v1247, %v737
      %v1256 = vadd.f32 %v1248, %v737
      %v1257 = vadd.f32 %v1249, %v737
      %v1258 = vadd.f32 %v1250, %v737
      %v1259 = vmax.f32 %v1129, %v1251
      %v1260 = vmax.f32 %v1130, %v1252
      %v1261 = vmax.f32 %v1131, %v1253
      %v1262 = vmax.f32 %v1132, %v1254
      %v1263 = vmax.f32 %v1133, %v1255
      %v1264 = vmax.f32 %v1134, %v1256
      %v1265 = vmax.f32 %v1135, %v1257
      %v1266 = vmax.f32 %v1136, %v1258
      %s1267 = scalar_lea.vmem %s430, 160
      %v1268 = vld [vmem:[%s1267] sm:$0xf]
      %v1269 = vld [vmem:[%s1267 + $0x4] sm:$0xf]
      %v1270 = vld [vmem:[%s1267 + $0x8] sm:$0xf]
      %v1271 = vld [vmem:[%s1267 + $0xc] sm:$0xf]
      %v1272 = vld [vmem:[%s1267 + $0x10] sm:$0xf]
      %v1273 = vld [vmem:[%s1267 + $0x14] sm:$0xf]
      %v1274 = vld [vmem:[%s1267 + $0x18] sm:$0xf]
      %v1275 = vld [vmem:[%s1267 + $0x1c] sm:$0xf]
      %v1284 = vunpack.c.l.b16 %v1268
      %v1285 = vunpack.c.l.b16 %v1269
      %v1286 = vunpack.c.l.b16 %v1270
      %v1287 = vunpack.c.l.b16 %v1271
      %v1288 = vunpack.c.l.b16 %v1272
      %v1289 = vunpack.c.l.b16 %v1273
      %v1290 = vunpack.c.l.b16 %v1274
      %v1291 = vunpack.c.l.b16 %v1275
      %v1292 = vpack.c.b16 %v1285, %v1284
      %v1293 = vpack.c.b16 %v1287, %v1286
      %v1294 = vpack.c.b16 %v1289, %v1288
      %v1295 = vpack.c.b16 %v1291, %v1290
      %v1297 = vsel %vm637, %v1292, 0
      %v1300 = vsel %vm637, %v1293, 0
      %v1303 = vsel %vm637, %v1294, 0
      %v1306 = vsel %vm637, %v1295, 0
      %1308 = vmatprep.subr.bf16.mxu0 0
      %1309 = vmatpush1.bf16.msra.mxu0 %v652
      %1310 = vmatprep.subr.bf16.mxu0 0
      %1311 = vmatpush1.bf16.msra.mxu0 0
      %1312 = vmatprep.subr.bf16.mxu0 0
      %1313 = vmatpush1.bf16.msra.mxu0 0
      %1314 = vmatprep.subr.bf16.mxu0 0
      %1315 = vmatpush1.bf16.msra.mxu0 0
      %1316 = vmatprep.subr.bf16.mxu0 0
      %1317 = vmatpush1.bf16.msra.mxu0 0
      %1318 = vmatprep.subr.bf16.mxu0 0
      %1319 = vmatpush1.bf16.msra.mxu0 0
      %1320 = vmatprep.subr.bf16.mxu0 0
      %1321 = vmatpush1.bf16.msra.mxu0 0
      %1322 = vmatprep.subr.bf16.mxu0 0
      %1323 = vmatpush1.bf16.msra.mxu0 0
      %1324 = vmatprep.subr.bf16.mxu0 0
      %1325 = vmatpush1.bf16.msra.mxu0 0
      %1326 = vmatprep.subr.bf16.mxu0 0
      %1327 = vmatpush1.bf16.msra.mxu0 0
      %1328 = vmatprep.subr.bf16.mxu0 0
      %1329 = vmatpush1.bf16.msra.mxu0 0
      %1330 = vmatprep.subr.bf16.mxu0 0
      %1331 = vmatpush1.bf16.msra.mxu0 0
      %1332 = vmatprep.subr.bf16.mxu0 0
      %1333 = vmatpush1.bf16.msra.mxu0 0
      %1334 = vmatprep.subr.bf16.mxu0 0
      %1335 = vmatpush1.bf16.msra.mxu0 0
      %1336 = vmatprep.subr.bf16.mxu0 0
      %1337 = vmatpush1.bf16.msra.mxu0 0
      %1338 = vmatprep.subr.bf16.mxu0 0
      %1339 = vmatpush1.bf16.msra.mxu0 0
      %1340 = vmatprep.mubr.bf16.mxu0 0
      %1341 = vmatmul.mubr.bf16.gmra.mrb[0].mxu0 %v1297
      %v1342 = vpop.f32.mrb[0].mxu0
      %v1343 = vadd.f32 0.0, %v1342
      %v1344 = vpop.f32.mrb[0].mxu0
      %v1345 = vpop.f32.mrb[0].mxu0
      %v1346 = vadd.f32 0.0, %v1345
      %v1347 = vpop.f32.mrb[0].mxu0
      %1348 = vmatprep.mubr.bf16.mxu0 0
      %1349 = vmatmul.mubr.bf16.gmra.mrb[0].mxu0 %v1300
      %v1350 = vpop.f32.mrb[0].mxu0
      %v1351 = vadd.f32 0.0, %v1350
      %v1352 = vpop.f32.mrb[0].mxu0
      %v1353 = vpop.f32.mrb[0].mxu0
      %v1354 = vadd.f32 0.0, %v1353
      %v1355 = vpop.f32.mrb[0].mxu0
      %1356 = vmatprep.mubr.bf16.mxu0 0
      %1357 = vmatmul.mubr.bf16.gmra.mrb[0].mxu0 %v1303
      %v1358 = vpop.f32.mrb[0].mxu0
      %v1359 = vadd.f32 0.0, %v1358
      %v1360 = vpop.f32.mrb[0].mxu0
      %v1361 = vpop.f32.mrb[0].mxu0
      %v1362 = vadd.f32 0.0, %v1361
      %v1363 = vpop.f32.mrb[0].mxu0
      %1364 = vmatprep.mubr.bf16.mxu0 0
      %1365 = vmatmul.mubr.bf16.gmra.mrb[0].mxu0 %v1306
      %v1366 = vpop.f32.mrb[0].mxu0
      %v1367 = vadd.f32 0.0, %v1366
      %v1368 = vpop.f32.mrb[0].mxu0
      %v1369 = vpop.f32.mrb[0].mxu0
      %v1370 = vadd.f32 0.0, %v1369
      %v1371 = vpop.f32.mrb[0].mxu0
      %1372 = vdwg.mxu0
      %v1373 = vmul.f32 %v1343, %v723
      %v1374 = vmul.f32 %v1346, %v723
      %v1375 = vmul.f32 %v1351, %v723
      %v1376 = vmul.f32 %v1354, %v723
      %v1377 = vmul.f32 %v1359, %v723
      %v1378 = vmul.f32 %v1362, %v723
      %v1379 = vmul.f32 %v1367, %v723
      %v1380 = vmul.f32 %v1370, %v723
      %v1381 = vadd.f32 %v1373, %v737
      %v1382 = vadd.f32 %v1374, %v737
      %v1383 = vadd.f32 %v1375, %v737
      %v1384 = vadd.f32 %v1376, %v737
      %v1385 = vadd.f32 %v1377, %v737
      %v1386 = vadd.f32 %v1378, %v737
      %v1387 = vadd.f32 %v1379, %v737
      %v1388 = vadd.f32 %v1380, %v737
      %v1389 = vmax.f32 %v1259, %v1381
      %v1390 = vmax.f32 %v1260, %v1382
      %v1391 = vmax.f32 %v1261, %v1383
      %v1392 = vmax.f32 %v1262, %v1384
      %v1393 = vmax.f32 %v1263, %v1385
      %v1394 = vmax.f32 %v1264, %v1386
      %v1395 = vmax.f32 %v1265, %v1387
      %v1396 = vmax.f32 %v1266, %v1388
      %s1397 = scalar_lea.vmem %s430, 192
      %v1398 = vld [vmem:[%s1397] sm:$0xf]
      %v1399 = vld [vmem:[%s1397 + $0x4] sm:$0xf]
      %v1400 = vld [vmem:[%s1397 + $0x8] sm:$0xf]
      %v1401 = vld [vmem:[%s1397 + $0xc] sm:$0xf]
      %v1402 = vld [vmem:[%s1397 + $0x10] sm:$0xf]
      %v1403 = vld [vmem:[%s1397 + $0x14] sm:$0xf]
      %v1404 = vld [vmem:[%s1397 + $0x18] sm:$0xf]
      %v1405 = vld [vmem:[%s1397 + $0x1c] sm:$0xf]
      %v1414 = vunpack.c.l.b16 %v1398
      %v1415 = vunpack.c.l.b16 %v1399
      %v1416 = vunpack.c.l.b16 %v1400
      %v1417 = vunpack.c.l.b16 %v1401
      %v1418 = vunpack.c.l.b16 %v1402
      %v1419 = vunpack.c.l.b16 %v1403
      %v1420 = vunpack.c.l.b16 %v1404
      %v1421 = vunpack.c.l.b16 %v1405
      %v1422 = vpack.c.b16 %v1415, %v1414
      %v1423 = vpack.c.b16 %v1417, %v1416
      %v1424 = vpack.c.b16 %v1419, %v1418
      %v1425 = vpack.c.b16 %v1421, %v1420
      %v1427 = vsel %vm637, %v1422, 0
      %v1430 = vsel %vm637, %v1423, 0
      %v1433 = vsel %vm637, %v1424, 0
      %v1436 = vsel %vm637, %v1425, 0
      %1438 = vmatprep.subr.bf16.mxu0 0
      %1439 = vmatpush1.bf16.msra.mxu0 %v652
      %1440 = vmatprep.subr.bf16.mxu0 0
      %1441 = vmatpush1.bf16.msra.mxu0 0
      %1442 = vmatprep.subr.bf16.mxu0 0
      %1443 = vmatpush1.bf16.msra.mxu0 0
      %1444 = vmatprep.subr.bf16.mxu0 0
      %1445 = vmatpush1.bf16.msra.mxu0 0
      %1446 = vmatprep.subr.bf16.mxu0 0
      %1447 = vmatpush1.bf16.msra.mxu0 0
      %1448 = vmatprep.subr.bf16.mxu0 0
      %1449 = vmatpush1.bf16.msra.mxu0 0
      %1450 = vmatprep.subr.bf16.mxu0 0
      %1451 = vmatpush1.bf16.msra.mxu0 0
      %1452 = vmatprep.subr.bf16.mxu0 0
      %1453 = vmatpush1.bf16.msra.mxu0 0
      %1454 = vmatprep.subr.bf16.mxu0 0
      %1455 = vmatpush1.bf16.msra.mxu0 0
      %1456 = vmatprep.subr.bf16.mxu0 0
      %1457 = vmatpush1.bf16.msra.mxu0 0
      %1458 = vmatprep.subr.bf16.mxu0 0
      %1459 = vmatpush1.bf16.msra.mxu0 0
      %1460 = vmatprep.subr.bf16.mxu0 0
      %1461 = vmatpush1.bf16.msra.mxu0 0
      %1462 = vmatprep.subr.bf16.mxu0 0
      %1463 = vmatpush1.bf16.msra.mxu0 0
      %1464 = vmatprep.subr.bf16.mxu0 0
      %1465 = vmatpush1.bf16.msra.mxu0 0
      %1466 = vmatprep.subr.bf16.mxu0 0
      %1467 = vmatpush1.bf16.msra.mxu0 0
      %1468 = vmatprep.subr.bf16.mxu0 0
      %1469 = vmatpush1.bf16.msra.mxu0 0
      %1470 = vmatprep.mubr.bf16.mxu0 0
      %1471 = vmatmul.mubr.bf16.gmra.mrb[0].mxu0 %v1427
      %v1472 = vpop.f32.mrb[0].mxu0
      %v1473 = vadd.f32 0.0, %v1472
      %v1474 = vpop.f32.mrb[0].mxu0
      %v1475 = vpop.f32.mrb[0].mxu0
      %v1476 = vadd.f32 0.0, %v1475
      %v1477 = vpop.f32.mrb[0].mxu0
      %1478 = vmatprep.mubr.bf16.mxu0 0
      %1479 = vmatmul.mubr.bf16.gmra.mrb[0].mxu0 %v1430
      %v1480 = vpop.f32.mrb[0].mxu0
      %v1481 = vadd.f32 0.0, %v1480
      %v1482 = vpop.f32.mrb[0].mxu0
      %v1483 = vpop.f32.mrb[0].mxu0
      %v1484 = vadd.f32 0.0, %v1483
      %v1485 = vpop.f32.mrb[0].mxu0
      %1486 = vmatprep.mubr.bf16.mxu0 0
      %1487 = vmatmul.mubr.bf16.gmra.mrb[0].mxu0 %v1433
      %v1488 = vpop.f32.mrb[0].mxu0
      %v1489 = vadd.f32 0.0, %v1488
      %v1490 = vpop.f32.mrb[0].mxu0
      %v1491 = vpop.f32.mrb[0].mxu0
      %v1492 = vadd.f32 0.0, %v1491
      %v1493 = vpop.f32.mrb[0].mxu0
      %1494 = vmatprep.mubr.bf16.mxu0 0
      %1495 = vmatmul.mubr.bf16.gmra.mrb[0].mxu0 %v1436
      %v1496 = vpop.f32.mrb[0].mxu0
      %v1497 = vadd.f32 0.0, %v1496
      %v1498 = vpop.f32.mrb[0].mxu0
      %v1499 = vpop.f32.mrb[0].mxu0
      %v1500 = vadd.f32 0.0, %v1499
      %v1501 = vpop.f32.mrb[0].mxu0
      %1502 = vdwg.mxu0
      %v1503 = vmul.f32 %v1473, %v723
      %v1504 = vmul.f32 %v1476, %v723
      %v1505 = vmul.f32 %v1481, %v723
      %v1506 = vmul.f32 %v1484, %v723
      %v1507 = vmul.f32 %v1489, %v723
      %v1508 = vmul.f32 %v1492, %v723
      %v1509 = vmul.f32 %v1497, %v723
      %v1510 = vmul.f32 %v1500, %v723
      %v1511 = vadd.f32 %v1503, %v737
      %v1512 = vadd.f32 %v1504, %v737
      %v1513 = vadd.f32 %v1505, %v737
      %v1514 = vadd.f32 %v1506, %v737
      %v1515 = vadd.f32 %v1507, %v737
      %v1516 = vadd.f32 %v1508, %v737
      %v1517 = vadd.f32 %v1509, %v737
      %v1518 = vadd.f32 %v1510, %v737
      %v1519 = vmax.f32 %v1389, %v1511
      %v1520 = vmax.f32 %v1390, %v1512
      %v1521 = vmax.f32 %v1391, %v1513
      %v1522 = vmax.f32 %v1392, %v1514
      %v1523 = vmax.f32 %v1393, %v1515
      %v1524 = vmax.f32 %v1394, %v1516
      %v1525 = vmax.f32 %v1395, %v1517
      %v1526 = vmax.f32 %v1396, %v1518
      %s1527 = scalar_lea.vmem %s430, 224
      %v1528 = vld [vmem:[%s1527] sm:$0xf]
      %v1529 = vld [vmem:[%s1527 + $0x4] sm:$0xf]
      %v1530 = vld [vmem:[%s1527 + $0x8] sm:$0xf]
      %v1531 = vld [vmem:[%s1527 + $0xc] sm:$0xf]
      %v1532 = vld [vmem:[%s1527 + $0x10] sm:$0xf]
      %v1533 = vld [vmem:[%s1527 + $0x14] sm:$0xf]
      %v1534 = vld [vmem:[%s1527 + $0x18] sm:$0xf]
      %v1535 = vld [vmem:[%s1527 + $0x1c] sm:$0xf]
      %v1544 = vunpack.c.l.b16 %v1528
      %v1545 = vunpack.c.l.b16 %v1529
      %v1546 = vunpack.c.l.b16 %v1530
      %v1547 = vunpack.c.l.b16 %v1531
      %v1548 = vunpack.c.l.b16 %v1532
      %v1549 = vunpack.c.l.b16 %v1533
      %v1550 = vunpack.c.l.b16 %v1534
      %v1551 = vunpack.c.l.b16 %v1535
      %v1552 = vpack.c.b16 %v1545, %v1544
      %v1553 = vpack.c.b16 %v1547, %v1546
      %v1554 = vpack.c.b16 %v1549, %v1548
      %v1555 = vpack.c.b16 %v1551, %v1550
      %v1557 = vsel %vm637, %v1552, 0
      %v1560 = vsel %vm637, %v1553, 0
      %v1563 = vsel %vm637, %v1554, 0
      %v1566 = vsel %vm637, %v1555, 0
      %1568 = vmatprep.subr.bf16.mxu0 0
      %1569 = vmatpush1.bf16.msra.mxu0 %v652
      %1570 = vmatprep.subr.bf16.mxu0 0
      %1571 = vmatpush1.bf16.msra.mxu0 0
      %1572 = vmatprep.subr.bf16.mxu0 0
      %1573 = vmatpush1.bf16.msra.mxu0 0
      %1574 = vmatprep.subr.bf16.mxu0 0
      %1575 = vmatpush1.bf16.msra.mxu0 0
      %1576 = vmatprep.subr.bf16.mxu0 0
      %1577 = vmatpush1.bf16.msra.mxu0 0
      %1578 = vmatprep.subr.bf16.mxu0 0
      %1579 = vmatpush1.bf16.msra.mxu0 0
      %1580 = vmatprep.subr.bf16.mxu0 0
      %1581 = vmatpush1.bf16.msra.mxu0 0
      %1582 = vmatprep.subr.bf16.mxu0 0
      %1583 = vmatpush1.bf16.msra.mxu0 0
      %1584 = vmatprep.subr.bf16.mxu0 0
      %1585 = vmatpush1.bf16.msra.mxu0 0
      %1586 = vmatprep.subr.bf16.mxu0 0
      %1587 = vmatpush1.bf16.msra.mxu0 0
      %1588 = vmatprep.subr.bf16.mxu0 0
      %1589 = vmatpush1.bf16.msra.mxu0 0
      %1590 = vmatprep.subr.bf16.mxu0 0
      %1591 = vmatpush1.bf16.msra.mxu0 0
      %1592 = vmatprep.subr.bf16.mxu0 0
      %1593 = vmatpush1.bf16.msra.mxu0 0
      %1594 = vmatprep.subr.bf16.mxu0 0
      %1595 = vmatpush1.bf16.msra.mxu0 0
      %1596 = vmatprep.subr.bf16.mxu0 0
      %1597 = vmatpush1.bf16.msra.mxu0 0
      %1598 = vmatprep.subr.bf16.mxu0 0
      %1599 = vmatpush1.bf16.msra.mxu0 0
      %1600 = vmatprep.mubr.bf16.mxu0 0
      %1601 = vmatmul.mubr.bf16.gmra.mrb[0].mxu0 %v1557
      %v1602 = vpop.f32.mrb[0].mxu0
      %v1603 = vadd.f32 0.0, %v1602
      %v1604 = vpop.f32.mrb[0].mxu0
      %v1605 = vpop.f32.mrb[0].mxu0
      %v1606 = vadd.f32 0.0, %v1605
      %v1607 = vpop.f32.mrb[0].mxu0
      %1608 = vmatprep.mubr.bf16.mxu0 0
      %1609 = vmatmul.mubr.bf16.gmra.mrb[0].mxu0 %v1560
      %v1610 = vpop.f32.mrb[0].mxu0
      %v1611 = vadd.f32 0.0, %v1610
      %v1612 = vpop.f32.mrb[0].mxu0
      %v1613 = vpop.f32.mrb[0].mxu0
      %v1614 = vadd.f32 0.0, %v1613
      %v1615 = vpop.f32.mrb[0].mxu0
      %1616 = vmatprep.mubr.bf16.mxu0 0
      %1617 = vmatmul.mubr.bf16.gmra.mrb[0].mxu0 %v1563
      %v1618 = vpop.f32.mrb[0].mxu0
      %v1619 = vadd.f32 0.0, %v1618
      %v1620 = vpop.f32.mrb[0].mxu0
      %v1621 = vpop.f32.mrb[0].mxu0
      %v1622 = vadd.f32 0.0, %v1621
      %v1623 = vpop.f32.mrb[0].mxu0
      %1624 = vmatprep.mubr.bf16.mxu0 0
      %1625 = vmatmul.mubr.bf16.gmra.mrb[0].mxu0 %v1566
      %v1626 = vpop.f32.mrb[0].mxu0
      %v1627 = vadd.f32 0.0, %v1626
      %v1628 = vpop.f32.mrb[0].mxu0
      %v1629 = vpop.f32.mrb[0].mxu0
      %v1630 = vadd.f32 0.0, %v1629
      %v1631 = vpop.f32.mrb[0].mxu0
      %1632 = vdwg.mxu0
      %v1633 = vmul.f32 %v1603, %v723
      %v1634 = vmul.f32 %v1606, %v723
      %v1635 = vmul.f32 %v1611, %v723
      %v1636 = vmul.f32 %v1614, %v723
      %v1637 = vmul.f32 %v1619, %v723
      %v1638 = vmul.f32 %v1622, %v723
      %v1639 = vmul.f32 %v1627, %v723
      %v1640 = vmul.f32 %v1630, %v723
      %v1641 = vadd.f32 %v1633, %v737
      %v1642 = vadd.f32 %v1634, %v737
      %v1643 = vadd.f32 %v1635, %v737
      %v1644 = vadd.f32 %v1636, %v737
      %v1645 = vadd.f32 %v1637, %v737
      %v1646 = vadd.f32 %v1638, %v737
      %v1647 = vadd.f32 %v1639, %v737
      %v1648 = vadd.f32 %v1640, %v737
      %v1649 = vmax.f32 %v1519, %v1641
      %v1650 = vmax.f32 %v1520, %v1642
      %v1651 = vmax.f32 %v1521, %v1643
      %v1652 = vmax.f32 %v1522, %v1644
      %v1653 = vmax.f32 %v1523, %v1645
      %v1654 = vmax.f32 %v1524, %v1646
      %v1655 = vmax.f32 %v1525, %v1647
      %v1656 = vmax.f32 %v1526, %v1648
      %v1657 = vadd.f32 %v1649, %v598
      %v1658 = vadd.f32 %v1650, %v599
      %v1659 = vadd.f32 %v1651, %v600
      %v1660 = vadd.f32 %v1652, %v601
      %v1661 = vadd.f32 %v1653, %v602
      %v1662 = vadd.f32 %v1654, %v603
      %v1663 = vadd.f32 %v1655, %v604
      %v1664 = vadd.f32 %v1656, %v605
      %v1665 = vmax.f32 %v1657, 0.0
      %v1666 = vmax.f32 %v1658, 0.0
      %v1667 = vmax.f32 %v1659, 0.0
      %v1668 = vmax.f32 %v1660, 0.0
      %v1669 = vmax.f32 %v1661, 0.0
      %v1670 = vmax.f32 %v1662, 0.0
      %v1671 = vmax.f32 %v1663, 0.0
      %v1672 = vmax.f32 %v1664, 0.0
      %v1673 = vpack.c.bf16 %v1666, %v1665
      %v1674 = vpack.c.bf16 %v1668, %v1667
      %v1675 = vpack.c.bf16 %v1670, %v1669
      %v1676 = vpack.c.bf16 %v1672, %v1671
      %v1677 = vld [vmem:[%s4] sm:$0xf]
      %v1678 = vld [vmem:[%s4 + $0x4] sm:$0xf]
      %v1681 = vunpack.c.l.b16 %v1677
      %v1682 = vunpack.c.l.b16 %v1678
      %v1683 = vpack.c.b16 %v1682, %v1681
      %vm1685 = vcmask 130048
      %v1687 = vsel %vm1685, %v1673, 0
      %v1690 = vsel %vm1685, %v1674, 0
      %v1693 = vsel %vm1685, %v1675, 0
      %v1696 = vsel %vm1685, %v1676, 0
      %1698 = vmatprep.subr.bf16.mxu0 0
      %1699 = vmatpush1.bf16.msra.mxu0 %v1683
      %1700 = vmatprep.subr.bf16.mxu0 0
      %1701 = vmatpush1.bf16.msra.mxu0 0
      %1702 = vmatprep.subr.bf16.mxu0 0
      %1703 = vmatpush1.bf16.msra.mxu0 0
      %1704 = vmatprep.subr.bf16.mxu0 0
      %1705 = vmatpush1.bf16.msra.mxu0 0
      %1706 = vmatprep.subr.bf16.mxu0 0
      %1707 = vmatpush1.bf16.msra.mxu0 0
      %1708 = vmatprep.subr.bf16.mxu0 0
      %1709 = vmatpush1.bf16.msra.mxu0 0
      %1710 = vmatprep.subr.bf16.mxu0 0
      %1711 = vmatpush1.bf16.msra.mxu0 0
      %1712 = vmatprep.subr.bf16.mxu0 0
      %1713 = vmatpush1.bf16.msra.mxu0 0
      %1714 = vmatprep.subr.bf16.mxu0 0
      %1715 = vmatpush1.bf16.msra.mxu0 0
      %1716 = vmatprep.subr.bf16.mxu0 0
      %1717 = vmatpush1.bf16.msra.mxu0 0
      %1718 = vmatprep.subr.bf16.mxu0 0
      %1719 = vmatpush1.bf16.msra.mxu0 0
      %1720 = vmatprep.subr.bf16.mxu0 0
      %1721 = vmatpush1.bf16.msra.mxu0 0
      %1722 = vmatprep.subr.bf16.mxu0 0
      %1723 = vmatpush1.bf16.msra.mxu0 0
      %1724 = vmatprep.subr.bf16.mxu0 0
      %1725 = vmatpush1.bf16.msra.mxu0 0
      %1726 = vmatprep.subr.bf16.mxu0 0
      %1727 = vmatpush1.bf16.msra.mxu0 0
      %1728 = vmatprep.subr.bf16.mxu0 0
      %1729 = vmatpush1.bf16.msra.mxu0 0
      %1730 = vmatprep.mubr.bf16.mxu0 0
      %1731 = vmatmul.mubr.bf16.gmra.mrb[0].mxu0 %v1687
      %v1732 = vpop.f32.mrb[0].mxu0
      %v1733 = vadd.f32 0.0, %v1732
      %v1734 = vpop.f32.mrb[0].mxu0
      %v1735 = vpop.f32.mrb[0].mxu0
      %v1736 = vadd.f32 0.0, %v1735
      %v1737 = vpop.f32.mrb[0].mxu0
      %1738 = vmatprep.mubr.bf16.mxu0 0
      %1739 = vmatmul.mubr.bf16.gmra.mrb[0].mxu0 %v1690
      %v1740 = vpop.f32.mrb[0].mxu0
      %v1741 = vadd.f32 0.0, %v1740
      %v1742 = vpop.f32.mrb[0].mxu0
      %v1743 = vpop.f32.mrb[0].mxu0
      %v1744 = vadd.f32 0.0, %v1743
      %v1745 = vpop.f32.mrb[0].mxu0
      %1746 = vmatprep.mubr.bf16.mxu0 0
      %1747 = vmatmul.mubr.bf16.gmra.mrb[0].mxu0 %v1693
      %v1748 = vpop.f32.mrb[0].mxu0
      %v1749 = vadd.f32 0.0, %v1748
      %v1750 = vpop.f32.mrb[0].mxu0
      %v1751 = vpop.f32.mrb[0].mxu0
      %v1752 = vadd.f32 0.0, %v1751
      %v1753 = vpop.f32.mrb[0].mxu0
      %1754 = vmatprep.mubr.bf16.mxu0 0
      %1755 = vmatmul.mubr.bf16.gmra.mrb[0].mxu0 %v1696
      %v1756 = vpop.f32.mrb[0].mxu0
      %v1757 = vadd.f32 0.0, %v1756
      %v1758 = vpop.f32.mrb[0].mxu0
      %v1759 = vpop.f32.mrb[0].mxu0
      %v1760 = vadd.f32 0.0, %v1759
      %v1761 = vpop.f32.mrb[0].mxu0
      %1762 = vdwg.mxu0
      %vm1763 = vcmask 15360
      %1764 = vst.msk [vmem:[%s462] sm:$0xff] %vm1763, %v1733
      %1765 = vst.msk [vmem:[%s462 + $0x8] sm:$0xff] %vm1763, %v1736
      %1766 = vst.msk [vmem:[%s462 + $0x10] sm:$0xff] %vm1763, %v1741
      %1767 = vst.msk [vmem:[%s462 + $0x18] sm:$0xff] %vm1763, %v1744
      %1768 = vst.msk [vmem:[%s462 + $0x20] sm:$0xff] %vm1763, %v1749
      %1769 = vst.msk [vmem:[%s462 + $0x28] sm:$0xff] %vm1763, %v1752
      %1770 = vst.msk [vmem:[%s462 + $0x30] sm:$0xff] %vm1763, %v1757
      %1771 = vst.msk [vmem:[%s462 + $0x38] sm:$0xff] %vm1763, %v1760
      %s1772 = smul.u32 8, %s25
      %p1773 = scmp.lt.s32.totalorder %s24, 1
      %s1774 = scalar_select %p1773, %s24, 1
      %p1775 = scmp.lt.s32.totalorder %s1772, 7
      %s1776 = scalar_select %p1775, %s1772, 7
      %s1777 = smul.addr %s1774, 8
      %s1778 = sadd.s32 %s1776, %s1777
      %s1779 = smul.addr %s1778, 8
      %s1780 = scalar_lea.vmem %s9, %s1779
      // Predicated region
      $region57: #{mhca_forward.2} parent=55 // pred_check
        %p1781 = pneg %p275
      $region58: #{mhca_forward.2} parent=55 // pred_check_branch
        %1783 = sbr.rel (%p1781) target = $region60
      $region59: #{mhca_forward.2} parent=55 // pred_region
        %s1784 = smul.u32 8, %s25
      $region60: #{mhca_forward.2} parent=55 // pred_fallthru
        _
    $region56: #{mhca_forward.2} parent=5 // pred_fallthru
      _
    %p1785 = scmp.le.s32.totalorder 2, %s15
    // Predicated region
    $region61: #{mhca_forward.2} parent=5 // pred_check
      %p1786 = pneg %p1785
    $region62: #{mhca_forward.2} parent=5 // pred_check_branch
      %1788 = sbr.rel (%p1786) target = $region64
    $region63: #{mhca_forward.2} parent=5 // pred_region
      %s1789 = ssub.s32 %s15, 2
      // Predicated region
      $region65: #{mhca_forward.2} parent=63 // pred_check
        %p1790 = pneg %p281
      $region66: #{mhca_forward.2} parent=63 // pred_check_branch
        %1792 = sbr.rel (%p1790) target = $region68
      $region67: #{mhca_forward.2} parent=63 // pred_region
        %s1793 = smul.u32 8, %s27
        %p1794 = scmp.lt.s32.totalorder %s26, 1
        %s1795 = scalar_select %p1794, %s26, 1
        %p1796 = scmp.lt.s32.totalorder %s1793, 7
        %s1797 = scalar_select %p1796, %s1793, 7
        %s1798 = smul.addr %s1795, 8
        %s1799 = sadd.s32 %s1797, %s1798
        %s1800 = smul.addr %s1799, 8
        %s1801 = scalar_lea.vmem %s9, %s1800
      $region68: #{mhca_forward.2} parent=63 // pred_fallthru
        _
    $region64: #{mhca_forward.2} parent=5 // pred_fallthru
      _
  $region6: #{mhca_forward.2} parent=0 // loop_footer
    %s19 = sadd.s32 1, %s15
  $region7: #{mhca_forward.2} parent=0 // loop_footer_branch
    %14 = sbr.rel target = $region3
  $region8: #{mhca_forward.2} parent=0 // loop_exit
    _

// kernel: squeeze.2
$region0: #{squeeze.2}
  %s0 = inlined_call_operand.vmem [shape: f32[2,8], index: 0, kind: input, shape index: {}]
  %s1 = inlined_call_operand.vmem [shape: f32[2,4,2], index: 1, kind: output, shape index: {}]
  $region1: #{squeeze.2} parent=0
    #allocation0 [shape = 'u8[8192]{0}', space=vmem, size = 0x2000, scoped, tag = 'scoped mem for output reshape']
    #allocation1 [shape = 'u8[4096]{0}', space=vmem, size = 0x1000, scoped, tag = 'scoped mem for input reshape']
    %s3 = sshllo.u32 0, 2
    %v4 = vld [vmem:[%s0] sm:%s3]
    %5 = vst [vmem:[#allocation1] sm:%s3] %v4
    %v6 = vld [vmem:[#allocation1] sm:$0x3]
    %vm7 = vcmask 15360
    %8 = vst.msk [vmem:[#allocation0] ss:$8 sm:$0x3] %vm7, %v6
    %v9 = vld [vmem:[#allocation1] sm:$0x3]
    %10 = vrot.lane.b32.xlu0 %v9, 126
    %v11 = vpop.permute.xlu0 %10
    %vm12 = vcmask 15360
    %s13 = scalar_lea.vmem [#allocation0], 1
    %14 = vst.msk [vmem:[%s13] ss:$8 sm:$0x3] %vm12, %v11
    %v15 = vld [vmem:[#allocation1] sm:$0x3]
    %16 = vrot.lane.b32.xlu0 %v15, 124
    %v17 = vpop.permute.xlu0 %16
    %vm18 = vcmask 15360
    %s19 = scalar_lea.vmem [#allocation0], 2
    %20 = vst.msk [vmem:[%s19] ss:$8 sm:$0x3] %vm18, %v17
    %v21 = vld [vmem:[#allocation1] sm:$0x3]
    %22 = vrot.lane.b32.xlu0 %v21, 122
    %v23 = vpop.permute.xlu0 %22
    %vm24 = vcmask 15360
    %s25 = scalar_lea.vmem [#allocation0], 3
    %26 = vst.msk [vmem:[%s25] ss:$8 sm:$0x3] %vm24, %v23
    %s28 = sshllo.u32 0, 4
    %v30 = vld [vmem:[#allocation0] sm:%s28]
    %s31 = sshllo.u32 0, 4
    %32 = vst [vmem:[%s1] sm:%s31] %v30
    %s33 = scalar_lea.vmem [#allocation0], 8
    %v34 = vld [vmem:[%s33] sm:%s28]
    %s35 = sshllo.u32 0, 4
    %s36 = scalar_lea.vmem %s1, 4
    %37 = vst [vmem:[%s36] sm:%s35] %v34

// kernel: mhca_forward.3
$region0: #{mhca_forward.3}
  #allocation0 [shape = 'u32[]', space=smem, size = 0x4, offset = 0x4, fixed_abs, tag = 'smem constant byte address 0x4 - core index']
  #allocation1 [shape = 'u32[144,128]{1,0:T(1,128)}', space=vmem, size = 0x12000, scoped, tag = 'internal scratch']
  %s0 = inlined_call_operand.vmem [shape: bf16[2,512,4], index: 0, kind: input, shape index: {}]
  %s1 = inlined_call_operand.vmem [shape: bf16[2,512,2], index: 1, kind: input, shape index: {}]
  %s2 = inlined_call_operand.vmem [shape: bf16[2,16], index: 2, kind: input, shape index: {}]
  %s3 = inlined_call_operand.vmem [shape: bf16[4,16], index: 3, kind: input, shape index: {}]
  %s4 = inlined_call_operand.vmem [shape: bf16[16,8], index: 4, kind: input, shape index: {}]
  %s5 = inlined_call_operand.vmem [shape: f32[1,8], index: 5, kind: input, shape index: {}]
  %s6 = inlined_call_operand.vmem [shape: f32[2,1,16], index: 6, kind: input, shape index: {}]
  %s7 = inlined_call_operand.vmem [shape: f32[2,1,16], index: 7, kind: input, shape index: {}]
  %s8 = inlined_call_operand.vmem [shape: f32[2,512,8], index: 8, kind: output, shape index: {0}]
  %s9 = inlined_call_operand.vmem [shape: f32[2,1,8], index: 9, kind: output, shape index: {1}]
  %s10 = inlined_call_operand.vmem [shape: f32[2,1,8], index: 10, kind: output, shape index: {2}]
  %11 = xla_tuple %s8, %s9, %s10
  %s12 = sld [smem:[#allocation0]]
  $region85: #{mhca_forward.3} parent=0
    _
  %s14 = ssub.s32 1, %s12
  %s15 = scalar_select 0, %s14, %s12
  loop: start=0, step=1, limit=6
  $region2: #{mhca_forward.3} parent=0 // loop_pre_header
    _
  $region3: #{mhca_forward.3} parent=0 // loop_header
    %s17 = sphi 0, %s21
    %p18 = scmp.ge.s32.totalorder %s17, 6
    %s24 = sphi 0, %s36
    %s25 = sphi 0, %s32
    %s26 = sphi 0, %s24
    %s27 = sphi 0, %s25
    %s28 = sphi 0, %s26
    %s29 = sphi 0, %s27
    %s41 = sphi 0, %s43
    %s44 = sphi 0, %s41
    %s45 = sphi 0, %s44
    %s61 = sphi 0, %s45
    %s69 = sphi 0, %s71
    %s72 = sphi 0, %s69
    %s73 = sphi 0, %s72
    %s89 = sphi 0, %s73
    %s93 = sphi 0, %s93
    %s95 = sphi 0, %s93
    %s96 = sphi 0, %s95
    %s110 = sphi 0, %s96
    %s114 = sphi 0, %s114
    %s116 = sphi 0, %s114
    %s117 = sphi 0, %s116
    %s131 = sphi 0, %s117
    %s135 = sphi 0, %s135
    %s137 = sphi 0, %s135
    %s138 = sphi 0, %s137
    %s152 = sphi 0, %s138
    %s156 = sphi 0, %s156
    %s158 = sphi 0, %s156
    %s159 = sphi 0, %s158
    %s173 = sphi 0, %s159
    %s179 = sphi 0, %s181
    %s182 = sphi 0, %s179
    %s183 = sphi 0, %s182
    %s199 = sphi 0, %s183
    %s205 = sphi 0, %s207
    %s208 = sphi 0, %s205
    %s209 = sphi 0, %s208
    %s225 = sphi 0, %s209
    %s233 = sphi 0, %s235
    %s236 = sphi 0, %s233
    %s237 = sphi 0, %s236
    %s253 = sphi 0, %s237
    %s259 = sphi 0, %s261
    %s262 = sphi 0, %s259
    %s263 = sphi 0, %s262
    %s279 = sphi 0, %s263
    %s285 = sphi 0, %s287
    %s288 = sphi 0, %s285
    %s289 = sphi 0, %s288
    %s305 = sphi 0, %s289
  $region4: #{mhca_forward.3} parent=0 // loop_header_branch
    %20 = sbr.rel (%p18) target = $region8
  $region5: #{mhca_forward.3} parent=0 // loop_body
    %s22 = ssub.s32 %s17, 1
    %s23 = ssub.s32 %s17, 2
    %s30 = sadd.s32 1, %s25
    %p31 = scmp.ge.s32.totalorder %s30, 2
    %s32 = scalar_select %p31, 0, %s30
    %s33 = sadd.s32 1, %s24
    %s34 = scalar_select %p31, %s33, %s24
    %p35 = scmp.ge.s32.totalorder %s34, 2
    %s36 = scalar_select %p35, 0, %s34
    %s37 = ssub.s32 %s24, %s36
    %s38 = ssub.s32 %s25, %s32
    %s39 = sor.u32 %s37, %s38
    %p40 = scmp.eq.s32.totalorder %s39, 0
    %s42 = sadd.s32 %s41, 1
    %s43 = scalar_select %p40, %s41, %s42
    %p46 = pneg %p40
    %p47 = scmp.eq.s32.totalorder %s17, 3
    %p48 = por %p46, %p47
    %p49 = scmp.ne.s32.totalorder %s41, %s44
    %p50 = scmp.eq.s32.totalorder %s17, 0
    %p51 = por %p49, %p50
    %p52 = scmp.ne.s32.totalorder %s41, %s44
    %p53 = scmp.eq.s32.totalorder %s22, 3
    %p54 = por %p52, %p53
    %p55 = scmp.ne.s32.totalorder %s44, %s45
    %p56 = scmp.eq.s32.totalorder %s22, 0
    %p57 = por %p55, %p56
    %p58 = scmp.ne.s32.totalorder %s44, %s45
    %p59 = scmp.eq.s32.totalorder %s23, 3
    %p60 = por %p58, %p59
    %p62 = scmp.ne.s32.totalorder %s45, %s61
    %p63 = scmp.eq.s32.totalorder %s23, 0
    %p64 = por %p62, %p63
    %s65 = ssub.s32 %s24, %s36
    %s66 = ssub.s32 %s25, %s32
    %s67 = sor.u32 %s65, %s66
    %p68 = scmp.eq.s32.totalorder %s67, 0
    %s70 = sadd.s32 %s69, 1
    %s71 = scalar_select %p68, %s69, %s70
    %p74 = pneg %p68
    %p75 = scmp.eq.s32.totalorder %s17, 3
    %p76 = por %p74, %p75
    %p77 = scmp.ne.s32.totalorder %s69, %s72
    %p78 = scmp.eq.s32.totalorder %s17, 0
    %p79 = por %p77, %p78
    %p80 = scmp.ne.s32.totalorder %s69, %s72
    %p81 = scmp.eq.s32.totalorder %s22, 3
    %p82 = por %p80, %p81
    %p83 = scmp.ne.s32.totalorder %s72, %s73
    %p84 = scmp.eq.s32.totalorder %s22, 0
    %p85 = por %p83, %p84
    %p86 = scmp.ne.s32.totalorder %s72, %s73
    %p87 = scmp.eq.s32.totalorder %s23, 3
    %p88 = por %p86, %p87
    %p90 = scmp.ne.s32.totalorder %s73, %s89
    %p91 = scmp.eq.s32.totalorder %s23, 0
    %p92 = por %p90, %p91
    %s94 = sadd.s32 %s93, 1
    %p97 = scmp.eq.s32.totalorder %s17, 3
    %p98 = scmp.ne.s32.totalorder %s93, %s95
    %p99 = scmp.eq.s32.totalorder %s17, 0
    %p100 = por %p98, %p99
    %p101 = scmp.ne.s32.totalorder %s93, %s95
    %p102 = scmp.eq.s32.totalorder %s22, 3
    %p103 = por %p101, %p102
    %p104 = scmp.ne.s32.totalorder %s95, %s96
    %p105 = scmp.eq.s32.totalorder %s22, 0
    %p106 = por %p104, %p105
    %p107 = scmp.ne.s32.totalorder %s95, %s96
    %p108 = scmp.eq.s32.totalorder %s23, 3
    %p109 = por %p107, %p108
    %p111 = scmp.ne.s32.totalorder %s96, %s110
    %p112 = scmp.eq.s32.totalorder %s23, 0
    %p113 = por %p111, %p112
    %s115 = sadd.s32 %s114, 1
    %p118 = scmp.eq.s32.totalorder %s17, 3
    %p119 = scmp.ne.s32.totalorder %s114, %s116
    %p120 = scmp.eq.s32.totalorder %s17, 0
    %p121 = por %p119, %p120
    %p122 = scmp.ne.s32.totalorder %s114, %s116
    %p123 = scmp.eq.s32.totalorder %s22, 3
    %p124 = por %p122, %p123
    %p125 = scmp.ne.s32.totalorder %s116, %s117
    %p126 = scmp.eq.s32.totalorder %s22, 0
    %p127 = por %p125, %p126
    %p128 = scmp.ne.s32.totalorder %s116, %s117
    %p129 = scmp.eq.s32.totalorder %s23, 3
    %p130 = por %p128, %p129
    %p132 = scmp.ne.s32.totalorder %s117, %s131
    %p133 = scmp.eq.s32.totalorder %s23, 0
    %p134 = por %p132, %p133
    %s136 = sadd.s32 %s135, 1
    %p139 = scmp.eq.s32.totalorder %s17, 3
    %p140 = scmp.ne.s32.totalorder %s135, %s137
    %p141 = scmp.eq.s32.totalorder %s17, 0
    %p142 = por %p140, %p141
    %p143 = scmp.ne.s32.totalorder %s135, %s137
    %p144 = scmp.eq.s32.totalorder %s22, 3
    %p145 = por %p143, %p144
    %p146 = scmp.ne.s32.totalorder %s137, %s138
    %p147 = scmp.eq.s32.totalorder %s22, 0
    %p148 = por %p146, %p147
    %p149 = scmp.ne.s32.totalorder %s137, %s138
    %p150 = scmp.eq.s32.totalorder %s23, 3
    %p151 = por %p149, %p150
    %p153 = scmp.ne.s32.totalorder %s138, %s152
    %p154 = scmp.eq.s32.totalorder %s23, 0
    %p155 = por %p153, %p154
    %s157 = sadd.s32 %s156, 1
    %p160 = scmp.eq.s32.totalorder %s17, 3
    %p161 = scmp.ne.s32.totalorder %s156, %s158
    %p162 = scmp.eq.s32.totalorder %s17, 0
    %p163 = por %p161, %p162
    %p164 = scmp.ne.s32.totalorder %s156, %s158
    %p165 = scmp.eq.s32.totalorder %s22, 3
    %p166 = por %p164, %p165
    %p167 = scmp.ne.s32.totalorder %s158, %s159
    %p168 = scmp.eq.s32.totalorder %s22, 0
    %p169 = por %p167, %p168
    %p170 = scmp.ne.s32.totalorder %s158, %s159
    %p171 = scmp.eq.s32.totalorder %s23, 3
    %p172 = por %p170, %p171
    %p174 = scmp.ne.s32.totalorder %s159, %s173
    %p175 = scmp.eq.s32.totalorder %s23, 0
    %p176 = por %p174, %p175
    %s177 = ssub.s32 %s24, %s36
    %p178 = scmp.eq.s32.totalorder %s177, 0
    %s180 = sadd.s32 %s179, 1
    %s181 = scalar_select %p178, %s179, %s180
    %p184 = pneg %p178
    %p185 = scmp.eq.s32.totalorder %s17, 3
    %p186 = por %p184, %p185
    %p187 = scmp.ne.s32.totalorder %s179, %s182
    %p188 = scmp.eq.s32.totalorder %s17, 0
    %p189 = por %p187, %p188
    %p190 = scmp.ne.s32.totalorder %s179, %s182
    %p191 = scmp.eq.s32.totalorder %s22, 3
    %p192 = por %p190, %p191
    %p193 = scmp.ne.s32.totalorder %s182, %s183
    %p194 = scmp.eq.s32.totalorder %s22, 0
    %p195 = por %p193, %p194
    %p196 = scmp.ne.s32.totalorder %s182, %s183
    %p197 = scmp.eq.s32.totalorder %s23, 3
    %p198 = por %p196, %p197
    %p200 = scmp.ne.s32.totalorder %s183, %s199
    %p201 = scmp.eq.s32.totalorder %s23, 0
    %p202 = por %p200, %p201
    %s203 = ssub.s32 %s24, %s36
    %p204 = scmp.eq.s32.totalorder %s203, 0
    %s206 = sadd.s32 %s205, 1
    %s207 = scalar_select %p204, %s205, %s206
    %p210 = pneg %p204
    %p211 = scmp.eq.s32.totalorder %s17, 3
    %p212 = por %p210, %p211
    %p213 = scmp.ne.s32.totalorder %s205, %s208
    %p214 = scmp.eq.s32.totalorder %s17, 0
    %p215 = por %p213, %p214
    %p216 = scmp.ne.s32.totalorder %s205, %s208
    %p217 = scmp.eq.s32.totalorder %s22, 3
    %p218 = por %p216, %p217
    %p219 = scmp.ne.s32.totalorder %s208, %s209
    %p220 = scmp.eq.s32.totalorder %s22, 0
    %p221 = por %p219, %p220
    %p222 = scmp.ne.s32.totalorder %s208, %s209
    %p223 = scmp.eq.s32.totalorder %s23, 3
    %p224 = por %p222, %p223
    %p226 = scmp.ne.s32.totalorder %s209, %s225
    %p227 = scmp.eq.s32.totalorder %s23, 0
    %p228 = por %p226, %p227
    %s229 = ssub.s32 %s24, %s36
    %s230 = ssub.s32 %s25, %s32
    %s231 = sor.u32 %s229, %s230
    %p232 = scmp.eq.s32.totalorder %s231, 0
    %s234 = sadd.s32 %s233, 1
    %s235 = scalar_select %p232, %s233, %s234
    %p238 = pneg %p232
    %p239 = scmp.eq.s32.totalorder %s17, 3
    %p240 = por %p238, %p239
    %p241 = scmp.ne.s32.totalorder %s233, %s236
    %p242 = scmp.eq.s32.totalorder %s17, 0
    %p243 = por %p241, %p242
    %p244 = scmp.ne.s32.totalorder %s233, %s236
    %p245 = scmp.eq.s32.totalorder %s22, 3
    %p246 = por %p244, %p245
    %p247 = scmp.ne.s32.totalorder %s236, %s237
    %p248 = scmp.eq.s32.totalorder %s22, 0
    %p249 = por %p247, %p248
    %p250 = scmp.ne.s32.totalorder %s236, %s237
    %p251 = scmp.eq.s32.totalorder %s23, 3
    %p252 = por %p250, %p251
    %p254 = scmp.ne.s32.totalorder %s237, %s253
    %p255 = scmp.eq.s32.totalorder %s23, 0
    %p256 = por %p254, %p255
    %s257 = ssub.s32 %s24, %s36
    %p258 = scmp.eq.s32.totalorder %s257, 0
    %s260 = sadd.s32 %s259, 1
    %s261 = scalar_select %p258, %s259, %s260
    %p264 = pneg %p258
    %p265 = scmp.eq.s32.totalorder %s17, 3
    %p266 = por %p264, %p265
    %p267 = scmp.ne.s32.totalorder %s259, %s262
    %p268 = scmp.eq.s32.totalorder %s17, 0
    %p269 = por %p267, %p268
    %p270 = scmp.ne.s32.totalorder %s259, %s262
    %p271 = scmp.eq.s32.totalorder %s22, 3
    %p272 = por %p270, %p271
    %p273 = scmp.ne.s32.totalorder %s262, %s263
    %p274 = scmp.eq.s32.totalorder %s22, 0
    %p275 = por %p273, %p274
    %p276 = scmp.ne.s32.totalorder %s262, %s263
    %p277 = scmp.eq.s32.totalorder %s23, 3
    %p278 = por %p276, %p277
    %p280 = scmp.ne.s32.totalorder %s263, %s279
    %p281 = scmp.eq.s32.totalorder %s23, 0
    %p282 = por %p280, %p281
    %s283 = ssub.s32 %s24, %s36
    %p284 = scmp.eq.s32.totalorder %s283, 0
    %s286 = sadd.s32 %s285, 1
    %s287 = scalar_select %p284, %s285, %s286
    %p290 = pneg %p284
    %p291 = scmp.eq.s32.totalorder %s17, 3
    %p292 = por %p290, %p291
    %p293 = scmp.ne.s32.totalorder %s285, %s288
    %p294 = scmp.eq.s32.totalorder %s17, 0
    %p295 = por %p293, %p294
    %p296 = scmp.ne.s32.totalorder %s285, %s288
    %p297 = scmp.eq.s32.totalorder %s22, 3
    %p298 = por %p296, %p297
    %p299 = scmp.ne.s32.totalorder %s288, %s289
    %p300 = scmp.eq.s32.totalorder %s22, 0
    %p301 = por %p299, %p300
    %p302 = scmp.ne.s32.totalorder %s288, %s289
    %p303 = scmp.eq.s32.totalorder %s23, 3
    %p304 = por %p302, %p303
    %p306 = scmp.ne.s32.totalorder %s289, %s305
    %p307 = scmp.eq.s32.totalorder %s23, 0
    %p308 = por %p306, %p307
    %p309 = scmp.le.s32.totalorder 1, %s17
    %p310 = scmp.lt.s32.totalorder %s17, 5
    %p311 = pnand %p309, %p310
    %p312 = pneg %p311
    // Predicated region
    $region9: #{mhca_forward.3} parent=5 // pred_check
      _
    $region10: #{mhca_forward.3} parent=5 // pred_check_branch
      %314 = sbr.rel (%p311) target = $region12
    $region11: #{mhca_forward.3} parent=5 // pred_region
      %s315 = ssub.s32 %s17, 1
      // Predicated region
      $region13: #{mhca_forward.3} parent=11 // pred_check
        %p316 = pneg %p106
      $region14: #{mhca_forward.3} parent=11 // pred_check_branch
        %318 = sbr.rel (%p316) target = $region16
      $region15: #{mhca_forward.3} parent=11 // pred_region
        _
      $region16: #{mhca_forward.3} parent=11 // pred_fallthru
        _
      // Predicated region
      $region17: #{mhca_forward.3} parent=11 // pred_check
        %p319 = pneg %p127
      $region18: #{mhca_forward.3} parent=11 // pred_check_branch
        %321 = sbr.rel (%p319) target = $region20
      $region19: #{mhca_forward.3} parent=11 // pred_region
        _
      $region20: #{mhca_forward.3} parent=11 // pred_fallthru
        _
      // Predicated region
      $region21: #{mhca_forward.3} parent=11 // pred_check
        %p322 = pneg %p148
      $region22: #{mhca_forward.3} parent=11 // pred_check_branch
        %324 = sbr.rel (%p322) target = $region24
      $region23: #{mhca_forward.3} parent=11 // pred_region
        _
      $region24: #{mhca_forward.3} parent=11 // pred_fallthru
        _
      // Predicated region
      $region25: #{mhca_forward.3} parent=11 // pred_check
        %p325 = pneg %p169
      $region26: #{mhca_forward.3} parent=11 // pred_check_branch
        %327 = sbr.rel (%p325) target = $region28
      $region27: #{mhca_forward.3} parent=11 // pred_region
        _
      $region28: #{mhca_forward.3} parent=11 // pred_fallthru
        _
    $region12: #{mhca_forward.3} parent=5 // pred_fallthru
      _
    %p328 = scmp.lt.s32.totalorder %s17, 4
    // Predicated region
    $region29: #{mhca_forward.3} parent=5 // pred_check
      %p329 = pneg %p328
    $region30: #{mhca_forward.3} parent=5 // pred_check_branch
      %331 = sbr.rel (%p329) target = $region32
    $region31: #{mhca_forward.3} parent=5 // pred_region
      // Predicated region
      $region33: #{mhca_forward.3} parent=31 // pred_check
        %p332 = pneg %p51
      $region34: #{mhca_forward.3} parent=31 // pred_check_branch
        %334 = sbr.rel (%p332) target = $region36
      $region35: #{mhca_forward.3} parent=31 // pred_region
        %s335 = smul.u32 32, %s25
        %p336 = scmp.lt.s32.totalorder %s24, 1
        %s337 = scalar_select %p336, %s24, 1
        %p338 = scmp.lt.s32.totalorder %s335, 63
        %s339 = scalar_select %p338, %s335, 63
        %s340 = smul.addr %s337, 64
        %s341 = sadd.s32 %s339, %s340
        %s342 = smul.addr %s341, 4
        %s343 = scalar_lea.vmem %s0, %s342
        %s344 = smul.u32 32, %s25
      $region36: #{mhca_forward.3} parent=31 // pred_fallthru
        _
      // Predicated region
      $region37: #{mhca_forward.3} parent=31 // pred_check
        %p345 = pneg %p79
      $region38: #{mhca_forward.3} parent=31 // pred_check_branch
        %347 = sbr.rel (%p345) target = $region40
      $region39: #{mhca_forward.3} parent=31 // pred_region
        %s348 = smul.u32 32, %s25
        %p349 = scmp.lt.s32.totalorder %s24, 1
        %s350 = scalar_select %p349, %s24, 1
        %p351 = scmp.lt.s32.totalorder %s348, 63
        %s352 = scalar_select %p351, %s348, 63
        %s353 = smul.addr %s350, 64
        %s354 = sadd.s32 %s352, %s353
        %s355 = smul.addr %s354, 4
        %s356 = scalar_lea.vmem %s1, %s355
        %s357 = smul.u32 32, %s25
      $region40: #{mhca_forward.3} parent=31 // pred_fallthru
        _
      // Predicated region
      $region41: #{mhca_forward.3} parent=31 // pred_check
        %p358 = pneg %p189
      $region42: #{mhca_forward.3} parent=31 // pred_check_branch
        %360 = sbr.rel (%p358) target = $region44
      $region43: #{mhca_forward.3} parent=31 // pred_region
        %p361 = scmp.lt.s32.totalorder %s24, 1
        %s362 = scalar_select %p361, %s24, 1
        %s363 = scalar_lea.vmem %s6, %s362
      $region44: #{mhca_forward.3} parent=31 // pred_fallthru
        _
      // Predicated region
      $region45: #{mhca_forward.3} parent=31 // pred_check
        %p364 = pneg %p215
      $region46: #{mhca_forward.3} parent=31 // pred_check_branch
        %366 = sbr.rel (%p364) target = $region48
      $region47: #{mhca_forward.3} parent=31 // pred_region
        %p367 = scmp.lt.s32.totalorder %s24, 1
        %s368 = scalar_select %p367, %s24, 1
        %s369 = scalar_lea.vmem %s7, %s368
      $region48: #{mhca_forward.3} parent=31 // pred_fallthru
        _
    $region32: #{mhca_forward.3} parent=5 // pred_fallthru
      _
    %p370 = scmp.le.s32.totalorder 1, %s17
    %p371 = scmp.lt.s32.totalorder %s17, 5
    %p372 = pnand %p370, %p371
    %p373 = pneg %p372
    // Predicated region
    $region49: #{mhca_forward.3} parent=5 // pred_check
      _
    $region50: #{mhca_forward.3} parent=5 // pred_check_branch
      %375 = sbr.rel (%p372) target = $region52
    $region51: #{mhca_forward.3} parent=5 // pred_region
      %s376 = ssub.s32 %s17, 1
      %s377 = smul.u32 32, %s27
      %p378 = scmp.lt.s32.totalorder %s26, 1
      %s379 = scalar_select %p378, %s26, 1
      %p380 = scmp.lt.s32.totalorder %s377, 63
      %s381 = scalar_select %p380, %s377, 63
      %s382 = smul.addr %s379, 64
      %s383 = sadd.s32 %s381, %s382
      %s384 = smul.addr %s383, 4
      %s385 = scalar_lea.vmem %s0, %s384
      %p386 = pneg %p57
      %p387 = pneg %p54
      %s388 = smul.u32 32, %s27
      %p389 = scmp.lt.s32.totalorder %s26, 1
      %s390 = scalar_select %p389, %s26, 1
      %p391 = scmp.lt.s32.totalorder %s388, 63
      %s392 = scalar_select %p391, %s388, 63
      %s393 = smul.addr %s390, 64
      %s394 = sadd.s32 %s392, %s393
      %s395 = smul.addr %s394, 4
      %s396 = scalar_lea.vmem %s1, %s395
      %p397 = pneg %p85
      %p398 = pneg %p82
      %p399 = pneg %p106
      %p400 = pneg %p103
      %p401 = pneg %p127
      %p402 = pneg %p124
      %p403 = pneg %p148
      %p404 = pneg %p145
      %p405 = pneg %p169
      %p406 = pneg %p166
      %p407 = scmp.lt.s32.totalorder %s26, 1
      %s408 = scalar_select %p407, %s26, 1
      %s409 = scalar_lea.vmem %s6, %s408
      %p410 = pneg %p195
      %p411 = pneg %p192
      %p412 = scmp.lt.s32.totalorder %s26, 1
      %s413 = scalar_select %p412, %s26, 1
      %s414 = scalar_lea.vmem %s7, %s413
      %p415 = pneg %p221
      %p416 = pneg %p218
      %p417 = pneg %p249
      %p418 = pneg %p246
      %s419 = smul.u32 32, %s27
      %p420 = scmp.lt.s32.totalorder %s26, 1
      %s421 = scalar_select %p420, %s26, 1
      %p422 = scmp.lt.s32.totalorder %s419, 63
      %s423 = scalar_select %p422, %s419, 63
      %s424 = smul.addr %s421, 64
      %s425 = sadd.s32 %s423, %s424
      %s426 = smul.addr %s425, 8
      %s427 = scalar_lea.vmem %s8, %s426
      %p428 = pneg %p275
      %p429 = pneg %p272
      %p430 = scmp.lt.s32.totalorder %s26, 1
      %s431 = scalar_select %p430, %s26, 1
      %s432 = scalar_lea.vmem %s9, %s431
      %p433 = pneg %p301
      %p434 = pneg %p298
      %p435 = scmp.lt.s32.totalorder %s26, 1
      %s436 = scalar_select %p435, %s26, 1
      %s437 = scalar_lea.vmem %s10, %s436
      %s438 = smul.u32 32, %s27
      %p439 = scmp.lt.s32.totalorder %s26, 1
      %s440 = scalar_select %p439, %s26, 1
      %p441 = scmp.lt.s32.totalorder %s438, 63
      %s442 = scalar_select %p441, %s438, 63
      %s443 = smul.addr %s440, 64
      %s444 = sadd.s32 %s442, %s443
      %s445 = smul.addr %s444, 4
      %s446 = scalar_lea.vmem %s0, %s445
      %s447 = smul.u32 32, %s27
      %s448 = smul.u32 32, %s27
      %p449 = scmp.lt.s32.totalorder %s26, 1
      %s450 = scalar_select %p449, %s26, 1
      %p451 = scmp.lt.s32.totalorder %s448, 63
      %s452 = scalar_select %p451, %s448, 63
      %s453 = smul.addr %s450, 64
      %s454 = sadd.s32 %s452, %s453
      %s455 = smul.addr %s454, 4
      %s456 = scalar_lea.vmem %s1, %s455
      %s457 = smul.u32 32, %s27
      %p458 = scmp.lt.s32.totalorder %s26, 1
      %s459 = scalar_select %p458, %s26, 1
      %s460 = scalar_lea.vmem %s6, %s459
      %p461 = scmp.lt.s32.totalorder %s26, 1
      %s462 = scalar_select %p461, %s26, 1
      %s463 = scalar_lea.vmem %s7, %s462
      %s464 = smul.u32 32, %s27
      %p465 = scmp.lt.s32.totalorder %s26, 1
      %s466 = scalar_select %p465, %s26, 1
      %p467 = scmp.lt.s32.totalorder %s464, 63
      %s468 = scalar_select %p467, %s464, 63
      %s469 = smul.addr %s466, 64
      %s470 = sadd.s32 %s468, %s469
      %s471 = smul.addr %s470, 8
      %s472 = scalar_lea.vmem %s8, %s471
      %s473 = smul.u32 32, %s27
      %p474 = scmp.lt.s32.totalorder %s26, 1
      %s475 = scalar_select %p474, %s26, 1
      %s476 = scalar_lea.vmem %s9, %s475
      %p477 = scmp.lt.s32.totalorder %s26, 1
      %s478 = scalar_select %p477, %s26, 1
      %s479 = scalar_lea.vmem %s10, %s478
      %p481 = scmp.eq.s32.totalorder %s27, 0
      // Predicated region
      $region53: #{mhca_forward.3} parent=51 // pred_check
        %p482 = pneg %p481
      $region54: #{mhca_forward.3} parent=51 // pred_check_branch
        %484 = sbr.rel (%p482) target = $region56
      $region55: #{mhca_forward.3} parent=51 // pred_region
        %vm485 = vcmask 57344
        %486 = vst.msk [vmem:[%s476] sm:$0x1] %vm485, 0.0
        %487 = vst.msk [vmem:[%s479] sm:$0x1] %vm485, 0.0
      $region56: #{mhca_forward.3} parent=51 // pred_fallthru
        _
      %v488 = vld [vmem:[%s446] sm:$0xf]
      %v489 = vld [vmem:[%s446 + $0x4] sm:$0xf]
      %v490 = vld [vmem:[%s446 + $0x8] sm:$0xf]
      %v491 = vld [vmem:[%s446 + $0xc] sm:$0xf]
      %v492 = vld [vmem:[%s446 + $0x10] sm:$0xf]
      %v493 = vld [vmem:[%s446 + $0x14] sm:$0xf]
      %v494 = vld [vmem:[%s446 + $0x18] sm:$0xf]
      %v495 = vld [vmem:[%s446 + $0x1c] sm:$0xf]
      %v496 = vld [vmem:[%s446 + $0x20] sm:$0xf]
      %v497 = vld [vmem:[%s446 + $0x24] sm:$0xf]
      %v498 = vld [vmem:[%s446 + $0x28] sm:$0xf]
      %v499 = vld [vmem:[%s446 + $0x2c] sm:$0xf]
      %v500 = vld [vmem:[%s446 + $0x30] sm:$0xf]
      %v501 = vld [vmem:[%s446 + $0x34] sm:$0xf]
      %v502 = vld [vmem:[%s446 + $0x38] sm:$0xf]
      %v503 = vld [vmem:[%s446 + $0x3c] sm:$0xf]
      %v504 = vld [vmem:[%s446 + $0x40] sm:$0xf]
      %v505 = vld [vmem:[%s446 + $0x44] sm:$0xf]
      %v506 = vld [vmem:[%s446 + $0x48] sm:$0xf]
      %v507 = vld [vmem:[%s446 + $0x4c] sm:$0xf]
      %v508 = vld [vmem:[%s446 + $0x50] sm:$0xf]
      %v509 = vld [vmem:[%s446 + $0x54] sm:$0xf]
      %v510 = vld [vmem:[%s446 + $0x58] sm:$0xf]
      %v511 = vld [vmem:[%s446 + $0x5c] sm:$0xf]
      %v512 = vld [vmem:[%s446 + $0x60] sm:$0xf]
      %v513 = vld [vmem:[%s446 + $0x64] sm:$0xf]
      %v514 = vld [vmem:[%s446 + $0x68] sm:$0xf]
      %v515 = vld [vmem:[%s446 + $0x6c] sm:$0xf]
      %v516 = vld [vmem:[%s446 + $0x70] sm:$0xf]
      %v517 = vld [vmem:[%s446 + $0x74] sm:$0xf]
      %v518 = vld [vmem:[%s446 + $0x78] sm:$0xf]
      %v519 = vld [vmem:[%s446 + $0x7c] sm:$0xf]
      %v520 = vld [vmem:[%s3] sm:$0x3]
      %v553 = vunpack.c.l.b16 %v488
      %v554 = vunpack.c.l.b16 %v489
      %v555 = vunpack.c.l.b16 %v490
      %v556 = vunpack.c.l.b16 %v491
      %v557 = vunpack.c.l.b16 %v492
      %v558 = vunpack.c.l.b16 %v493
      %v559 = vunpack.c.l.b16 %v494
      %v560 = vunpack.c.l.b16 %v495
      %v561 = vunpack.c.l.b16 %v496
      %v562 = vunpack.c.l.b16 %v497
      %v563 = vunpack.c.l.b16 %v498
      %v564 = vunpack.c.l.b16 %v499
      %v565 = vunpack.c.l.b16 %v500
      %v566 = vunpack.c.l.b16 %v501
      %v567 = vunpack.c.l.b16 %v502
      %v568 = vunpack.c.l.b16 %v503
      %v569 = vunpack.c.l.b16 %v504
      %v570 = vunpack.c.l.b16 %v505
      %v571 = vunpack.c.l.b16 %v506
      %v572 = vunpack.c.l.b16 %v507
      %v573 = vunpack.c.l.b16 %v508
      %v574 = vunpack.c.l.b16 %v509
      %v575 = vunpack.c.l.b16 %v510
      %v576 = vunpack.c.l.b16 %v511
      %v577 = vunpack.c.l.b16 %v512
      %v578 = vunpack.c.l.b16 %v513
      %v579 = vunpack.c.l.b16 %v514
      %v580 = vunpack.c.l.b16 %v515
      %v581 = vunpack.c.l.b16 %v516
      %v582 = vunpack.c.l.b16 %v517
      %v583 = vunpack.c.l.b16 %v518
      %v584 = vunpack.c.l.b16 %v519
      %v585 = vpack.c.b16 %v554, %v553
      %v586 = vpack.c.b16 %v556, %v555
      %v587 = vpack.c.b16 %v558, %v557
      %v588 = vpack.c.b16 %v560, %v559
      %v589 = vpack.c.b16 %v562, %v561
      %v590 = vpack.c.b16 %v564, %v563
      %v591 = vpack.c.b16 %v566, %v565
      %v592 = vpack.c.b16 %v568, %v567
      %v593 = vpack.c.b16 %v570, %v569
      %v594 = vpack.c.b16 %v572, %v571
      %v595 = vpack.c.b16 %v574, %v573
      %v596 = vpack.c.b16 %v576, %v575
      %v597 = vpack.c.b16 %v578, %v577
      %v598 = vpack.c.b16 %v580, %v579
      %v599 = vpack.c.b16 %v582, %v581
      %v600 = vpack.c.b16 %v584, %v583
      %vm601 = vcmask 31744
      %v603 = vsel %vm601, %v585, 0
      %v606 = vsel %vm601, %v586, 0
      %v609 = vsel %vm601, %v587, 0
      %v612 = vsel %vm601, %v588, 0
      %v615 = vsel %vm601, %v589, 0
      %v618 = vsel %vm601, %v590, 0
      %v621 = vsel %vm601, %v591, 0
      %v624 = vsel %vm601, %v592, 0
      %v627 = vsel %vm601, %v593, 0
      %v630 = vsel %vm601, %v594, 0
      %v633 = vsel %vm601, %v595, 0
      %v636 = vsel %vm601, %v596, 0
      %v639 = vsel %vm601, %v597, 0
      %v642 = vsel %vm601, %v598, 0
      %v645 = vsel %vm601, %v599, 0
      %v648 = vsel %vm601, %v600, 0
      %vm650 = vcmask 1041408
      %v652 = vsel %vm650, %v520, 0
      %654 = vmatprep.subr.bf16.mxu0 0
      %655 = vmatpush1.bf16.msra.mxu0 %v652
      %656 = vmatprep.subr.bf16.mxu0 0
      %657 = vmatpush1.bf16.msra.mxu0 0
      %658 = vmatprep.subr.bf16.mxu0 0
      %659 = vmatpush1.bf16.msra.mxu0 0
      %660 = vmatprep.subr.bf16.mxu0 0
      %661 = vmatpush1.bf16.msra.mxu0 0
      %662 = vmatprep.subr.bf16.mxu0 0
      %663 = vmatpush1.bf16.msra.mxu0 0
      %664 = vmatprep.subr.bf16.mxu0 0
      %665 = vmatpush1.bf16.msra.mxu0 0
      %666 = vmatprep.subr.bf16.mxu0 0
      %667 = vmatpush1.bf16.msra.mxu0 0
      %668 = vmatprep.subr.bf16.mxu0 0
      %669 = vmatpush1.bf16.msra.mxu0 0
      %670 = vmatprep.subr.bf16.mxu0 0
      %671 = vmatpush1.bf16.msra.mxu0 0
      %672 = vmatprep.subr.bf16.mxu0 0
      %673 = vmatpush1.bf16.msra.mxu0 0
      %674 = vmatprep.subr.bf16.mxu0 0
      %675 = vmatpush1.bf16.msra.mxu0 0
      %676 = vmatprep.subr.bf16.mxu0 0
      %677 = vmatpush1.bf16.msra.mxu0 0
      %678 = vmatprep.subr.bf16.mxu0 0
      %679 = vmatpush1.bf16.msra.mxu0 0
      %680 = vmatprep.subr.bf16.mxu0 0
      %681 = vmatpush1.bf16.msra.mxu0 0
      %682 = vmatprep.subr.bf16.mxu0 0
      %683 = vmatpush1.bf16.msra.mxu0 0
      %684 = vmatprep.subr.bf16.mxu0 0
      %685 = vmatpush1.bf16.msra.mxu0 0
      %686 = vmatprep.mubr.bf16.mxu0 0
      %687 = vmatmul.mubr.bf16.gmra.mrb[0].mxu0 %v603
      %v688 = vpop.f32.mrb[0].mxu0
      %v689 = vadd.f32 0.0, %v688
      %v690 = vpop.f32.mrb[0].mxu0
      %v691 = vpop.f32.mrb[0].mxu0
      %v692 = vadd.f32 0.0, %v691
      %v693 = vpop.f32.mrb[0].mxu0
      %694 = vmatprep.mubr.bf16.mxu0 0
      %695 = vmatmul.mubr.bf16.gmra.mrb[0].mxu0 %v606
      %v696 = vpop.f32.mrb[0].mxu0
      %v697 = vadd.f32 0.0, %v696
      %v698 = vpop.f32.mrb[0].mxu0
      %v699 = vpop.f32.mrb[0].mxu0
      %v700 = vadd.f32 0.0, %v699
      %v701 = vpop.f32.mrb[0].mxu0
      %702 = vmatprep.mubr.bf16.mxu0 0
      %703 = vmatmul.mubr.bf16.gmra.mrb[0].mxu0 %v609
      %v704 = vpop.f32.mrb[0].mxu0
      %v705 = vadd.f32 0.0, %v704
      %v706 = vpop.f32.mrb[0].mxu0
      %v707 = vpop.f32.mrb[0].mxu0
      %v708 = vadd.f32 0.0, %v707
      %v709 = vpop.f32.mrb[0].mxu0
      %710 = vmatprep.mubr.bf16.mxu0 0
      %711 = vmatmul.mubr.bf16.gmra.mrb[0].mxu0 %v612
      %v712 = vpop.f32.mrb[0].mxu0
      %v713 = vadd.f32 0.0, %v712
      %v714 = vpop.f32.mrb[0].mxu0
      %v715 = vpop.f32.mrb[0].mxu0
      %v716 = vadd.f32 0.0, %v715
      %v717 = vpop.f32.mrb[0].mxu0
      %718 = vmatprep.mubr.bf16.mxu0 0
      %719 = vmatmul.mubr.bf16.gmra.mrb[0].mxu0 %v615
      %v720 = vpop.f32.mrb[0].mxu0
      %v721 = vadd.f32 0.0, %v720
      %v722 = vpop.f32.mrb[0].mxu0
      %v723 = vpop.f32.mrb[0].mxu0
      %v724 = vadd.f32 0.0, %v723
      %v725 = vpop.f32.mrb[0].mxu0
      %726 = vmatprep.mubr.bf16.mxu0 0
      %727 = vmatmul.mubr.bf16.gmra.mrb[0].mxu0 %v618
      %v728 = vpop.f32.mrb[0].mxu0
      %v729 = vadd.f32 0.0, %v728
      %v730 = vpop.f32.mrb[0].mxu0
      %v731 = vpop.f32.mrb[0].mxu0
      %v732 = vadd.f32 0.0, %v731
      %v733 = vpop.f32.mrb[0].mxu0
      %734 = vmatprep.mubr.bf16.mxu0 0
      %735 = vmatmul.mubr.bf16.gmra.mrb[0].mxu0 %v621
      %v736 = vpop.f32.mrb[0].mxu0
      %v737 = vadd.f32 0.0, %v736
      %v738 = vpop.f32.mrb[0].mxu0
      %v739 = vpop.f32.mrb[0].mxu0
      %v740 = vadd.f32 0.0, %v739
      %v741 = vpop.f32.mrb[0].mxu0
      %742 = vmatprep.mubr.bf16.mxu0 0
      %743 = vmatmul.mubr.bf16.gmra.mrb[0].mxu0 %v624
      %v744 = vpop.f32.mrb[0].mxu0
      %v745 = vadd.f32 0.0, %v744
      %v746 = vpop.f32.mrb[0].mxu0
      %v747 = vpop.f32.mrb[0].mxu0
      %v748 = vadd.f32 0.0, %v747
      %v749 = vpop.f32.mrb[0].mxu0
      %750 = vmatprep.mubr.bf16.mxu0 0
      %751 = vmatmul.mubr.bf16.gmra.mrb[0].mxu0 %v627
      %v752 = vpop.f32.mrb[0].mxu0
      %v753 = vadd.f32 0.0, %v752
      %v754 = vpop.f32.mrb[0].mxu0
      %v755 = vpop.f32.mrb[0].mxu0
      %v756 = vadd.f32 0.0, %v755
      %v757 = vpop.f32.mrb[0].mxu0
      %758 = vmatprep.mubr.bf16.mxu0 0
      %759 = vmatmul.mubr.bf16.gmra.mrb[0].mxu0 %v630
      %v760 = vpop.f32.mrb[0].mxu0
      %v761 = vadd.f32 0.0, %v760
      %v762 = vpop.f32.mrb[0].mxu0
      %v763 = vpop.f32.mrb[0].mxu0
      %v764 = vadd.f32 0.0, %v763
      %v765 = vpop.f32.mrb[0].mxu0
      %766 = vmatprep.mubr.bf16.mxu0 0
      %767 = vmatmul.mubr.bf16.gmra.mrb[0].mxu0 %v633
      %v768 = vpop.f32.mrb[0].mxu0
      %v769 = vadd.f32 0.0, %v768
      %v770 = vpop.f32.mrb[0].mxu0
      %v771 = vpop.f32.mrb[0].mxu0
      %v772 = vadd.f32 0.0, %v771
      %v773 = vpop.f32.mrb[0].mxu0
      %774 = vmatprep.mubr.bf16.mxu0 0
      %775 = vmatmul.mubr.bf16.gmra.mrb[0].mxu0 %v636
      %v776 = vpop.f32.mrb[0].mxu0
      %v777 = vadd.f32 0.0, %v776
      %v778 = vpop.f32.mrb[0].mxu0
      %v779 = vpop.f32.mrb[0].mxu0
      %v780 = vadd.f32 0.0, %v779
      %v781 = vpop.f32.mrb[0].mxu0
      %782 = vmatprep.mubr.bf16.mxu0 0
      %783 = vmatmul.mubr.bf16.gmra.mrb[0].mxu0 %v639
      %v784 = vpop.f32.mrb[0].mxu0
      %v785 = vadd.f32 0.0, %v784
      %v786 = vpop.f32.mrb[0].mxu0
      %v787 = vpop.f32.mrb[0].mxu0
      %v788 = vadd.f32 0.0, %v787
      %v789 = vpop.f32.mrb[0].mxu0
      %790 = vmatprep.mubr.bf16.mxu0 0
      %791 = vmatmul.mubr.bf16.gmra.mrb[0].mxu0 %v642
      %v792 = vpop.f32.mrb[0].mxu0
      %v793 = vadd.f32 0.0, %v792
      %v794 = vpop.f32.mrb[0].mxu0
      %v795 = vpop.f32.mrb[0].mxu0
      %v796 = vadd.f32 0.0, %v795
      %v797 = vpop.f32.mrb[0].mxu0
      %798 = vmatprep.mubr.bf16.mxu0 0
      %799 = vmatmul.mubr.bf16.gmra.mrb[0].mxu0 %v645
      %v800 = vpop.f32.mrb[0].mxu0
      %v801 = vadd.f32 0.0, %v800
      %v802 = vpop.f32.mrb[0].mxu0
      %v803 = vpop.f32.mrb[0].mxu0
      %v804 = vadd.f32 0.0, %v803
      %v805 = vpop.f32.mrb[0].mxu0
      %806 = vmatprep.mubr.bf16.mxu0 0
      %807 = vmatmul.mubr.bf16.gmra.mrb[0].mxu0 %v648
      %v808 = vpop.f32.mrb[0].mxu0
      %v809 = vadd.f32 0.0, %v808
      %v810 = vpop.f32.mrb[0].mxu0
      %v811 = vpop.f32.mrb[0].mxu0
      %v812 = vadd.f32 0.0, %v811
      %v813 = vpop.f32.mrb[0].mxu0
      %814 = vdwg.mxu0
      %v815 = vld [vmem:[%s460] sm:$0x1]
      %v817 = vlaneseq
      %v818 = vshrl.u32 %v817, 7
      %v819 = vsub.s32 0, %v818
      %v820 = vrot.slane %v815, %v819
      %v822 = vmul.f32 %v689, %v820
      %v823 = vmul.f32 %v692, %v820
      %v824 = vmul.f32 %v697, %v820
      %v825 = vmul.f32 %v700, %v820
      %v826 = vmul.f32 %v705, %v820
      %v827 = vmul.f32 %v708, %v820
      %v828 = vmul.f32 %v713, %v820
      %v829 = vmul.f32 %v716, %v820
      %v830 = vmul.f32 %v721, %v820
      %v831 = vmul.f32 %v724, %v820
      %v832 = vmul.f32 %v729, %v820
      %v833 = vmul.f32 %v732, %v820
      %v834 = vmul.f32 %v737, %v820
      %v835 = vmul.f32 %v740, %v820
      %v836 = vmul.f32 %v745, %v820
      %v837 = vmul.f32 %v748, %v820
      %v838 = vmul.f32 %v753, %v820
      %v839 = vmul.f32 %v756, %v820
      %v840 = vmul.f32 %v761, %v820
      %v841 = vmul.f32 %v764, %v820
      %v842 = vmul.f32 %v769, %v820
      %v843 = vmul.f32 %v772, %v820
      %v844 = vmul.f32 %v777, %v820
      %v845 = vmul.f32 %v780, %v820
      %v846 = vmul.f32 %v785, %v820
      %v847 = vmul.f32 %v788, %v820
      %v848 = vmul.f32 %v793, %v820
      %v849 = vmul.f32 %v796, %v820
      %v850 = vmul.f32 %v801, %v820
      %v851 = vmul.f32 %v804, %v820
      %v852 = vmul.f32 %v809, %v820
      %v853 = vmul.f32 %v812, %v820
      %v854 = vld [vmem:[%s463] sm:$0x1]
      %v856 = vlaneseq
      %v857 = vshrl.u32 %v856, 7
      %v858 = vsub.s32 0, %v857
      %v859 = vrot.slane %v854, %v858
      %v861 = vadd.f32 %v822, %v859
      %v862 = vadd.f32 %v823, %v859
      %v863 = vadd.f32 %v824, %v859
      %v864 = vadd.f32 %v825, %v859
      %v865 = vadd.f32 %v826, %v859
      %v866 = vadd.f32 %v827, %v859
      %v867 = vadd.f32 %v828, %v859
      %v868 = vadd.f32 %v829, %v859
      %v869 = vadd.f32 %v830, %v859
      %v870 = vadd.f32 %v831, %v859
      %v871 = vadd.f32 %v832, %v859
      %v872 = vadd.f32 %v833, %v859
      %v873 = vadd.f32 %v834, %v859
      %v874 = vadd.f32 %v835, %v859
      %v875 = vadd.f32 %v836, %v859
      %v876 = vadd.f32 %v837, %v859
      %v877 = vadd.f32 %v838, %v859
      %v878 = vadd.f32 %v839, %v859
      %v879 = vadd.f32 %v840, %v859
      %v880 = vadd.f32 %v841, %v859
      %v881 = vadd.f32 %v842, %v859
      %v882 = vadd.f32 %v843, %v859
      %v883 = vadd.f32 %v844, %v859
      %v884 = vadd.f32 %v845, %v859
      %v885 = vadd.f32 %v846, %v859
      %v886 = vadd.f32 %v847, %v859
      %v887 = vadd.f32 %v848, %v859
      %v888 = vadd.f32 %v849, %v859
      %v889 = vadd.f32 %v850, %v859
      %v890 = vadd.f32 %v851, %v859
      %v891 = vadd.f32 %v852, %v859
      %v892 = vadd.f32 %v853, %v859
      %v893 = vld [vmem:[%s456] sm:$0xf]
      %v894 = vld [vmem:[%s456 + $0x4] sm:$0xf]
      %v895 = vld [vmem:[%s456 + $0x8] sm:$0xf]
      %v896 = vld [vmem:[%s456 + $0xc] sm:$0xf]
      %v897 = vld [vmem:[%s456 + $0x10] sm:$0xf]
      %v898 = vld [vmem:[%s456 + $0x14] sm:$0xf]
      %v899 = vld [vmem:[%s456 + $0x18] sm:$0xf]
      %v900 = vld [vmem:[%s456 + $0x1c] sm:$0xf]
      %v901 = vld [vmem:[%s456 + $0x20] sm:$0xf]
      %v902 = vld [vmem:[%s456 + $0x24] sm:$0xf]
      %v903 = vld [vmem:[%s456 + $0x28] sm:$0xf]
      %v904 = vld [vmem:[%s456 + $0x2c] sm:$0xf]
      %v905 = vld [vmem:[%s456 + $0x30] sm:$0xf]
      %v906 = vld [vmem:[%s456 + $0x34] sm:$0xf]
      %v907 = vld [vmem:[%s456 + $0x38] sm:$0xf]
      %v908 = vld [vmem:[%s456 + $0x3c] sm:$0xf]
      %v909 = vld [vmem:[%s456 + $0x40] sm:$0xf]
      %v910 = vld [vmem:[%s456 + $0x44] sm:$0xf]
      %v911 = vld [vmem:[%s456 + $0x48] sm:$0xf]
      %v912 = vld [vmem:[%s456 + $0x4c] sm:$0xf]
      %v913 = vld [vmem:[%s456 + $0x50] sm:$0xf]
      %v914 = vld [vmem:[%s456 + $0x54] sm:$0xf]
      %v915 = vld [vmem:[%s456 + $0x58] sm:$0xf]
      %v916 = vld [vmem:[%s456 + $0x5c] sm:$0xf]
      %v917 = vld [vmem:[%s456 + $0x60] sm:$0xf]
      %v918 = vld [vmem:[%s456 + $0x64] sm:$0xf]
      %v919 = vld [vmem:[%s456 + $0x68] sm:$0xf]
      %v920 = vld [vmem:[%s456 + $0x6c] sm:$0xf]
      %v921 = vld [vmem:[%s456 + $0x70] sm:$0xf]
      %v922 = vld [vmem:[%s456 + $0x74] sm:$0xf]
      %v923 = vld [vmem:[%s456 + $0x78] sm:$0xf]
      %v924 = vld [vmem:[%s456 + $0x7c] sm:$0xf]
      %v925 = vld [vmem:[%s2] sm:$0x1]
      %v958 = vunpack.c.l.b16 %v893
      %v959 = vunpack.c.l.b16 %v894
      %v960 = vunpack.c.l.b16 %v895
      %v961 = vunpack.c.l.b16 %v896
      %v962 = vunpack.c.l.b16 %v897
      %v963 = vunpack.c.l.b16 %v898
      %v964 = vunpack.c.l.b16 %v899
      %v965 = vunpack.c.l.b16 %v900
      %v966 = vunpack.c.l.b16 %v901
      %v967 = vunpack.c.l.b16 %v902
      %v968 = vunpack.c.l.b16 %v903
      %v969 = vunpack.c.l.b16 %v904
      %v970 = vunpack.c.l.b16 %v905
      %v971 = vunpack.c.l.b16 %v906
      %v972 = vunpack.c.l.b16 %v907
      %v973 = vunpack.c.l.b16 %v908
      %v974 = vunpack.c.l.b16 %v909
      %v975 = vunpack.c.l.b16 %v910
      %v976 = vunpack.c.l.b16 %v911
      %v977 = vunpack.c.l.b16 %v912
      %v978 = vunpack.c.l.b16 %v913
      %v979 = vunpack.c.l.b16 %v914
      %v980 = vunpack.c.l.b16 %v915
      %v981 = vunpack.c.l.b16 %v916
      %v982 = vunpack.c.l.b16 %v917
      %v983 = vunpack.c.l.b16 %v918
      %v984 = vunpack.c.l.b16 %v919
      %v985 = vunpack.c.l.b16 %v920
      %v986 = vunpack.c.l.b16 %v921
      %v987 = vunpack.c.l.b16 %v922
      %v988 = vunpack.c.l.b16 %v923
      %v989 = vunpack.c.l.b16 %v924
      %v990 = vpack.c.b16 %v959, %v958
      %v991 = vpack.c.b16 %v961, %v960
      %v992 = vpack.c.b16 %v963, %v962
      %v993 = vpack.c.b16 %v965, %v964
      %v994 = vpack.c.b16 %v967, %v966
      %v995 = vpack.c.b16 %v969, %v968
      %v996 = vpack.c.b16 %v971, %v970
      %v997 = vpack.c.b16 %v973, %v972
      %v998 = vpack.c.b16 %v975, %v974
      %v999 = vpack.c.b16 %v977, %v976
      %v1000 = vpack.c.b16 %v979, %v978
      %v1001 = vpack.c.b16 %v981, %v980
      %v1002 = vpack.c.b16 %v983, %v982
      %v1003 = vpack.c.b16 %v985, %v984
      %v1004 = vpack.c.b16 %v987, %v986
      %v1005 = vpack.c.b16 %v989, %v988
      %vm1006 = vcmask 15360
      %v1008 = vsel %vm1006, %v990, 0
      %v1011 = vsel %vm1006, %v991, 0
      %v1014 = vsel %vm1006, %v992, 0
      %v1017 = vsel %vm1006, %v993, 0
      %v1020 = vsel %vm1006, %v994, 0
      %v1023 = vsel %vm1006, %v995, 0
      %v1026 = vsel %vm1006, %v996, 0
      %v1029 = vsel %vm1006, %v997, 0
      %v1032 = vsel %vm1006, %v998, 0
      %v1035 = vsel %vm1006, %v999, 0
      %v1038 = vsel %vm1006, %v1000, 0
      %v1041 = vsel %vm1006, %v1001, 0
      %v1044 = vsel %vm1006, %v1002, 0
      %v1047 = vsel %vm1006, %v1003, 0
      %v1050 = vsel %vm1006, %v1004, 0
      %v1053 = vsel %vm1006, %v1005, 0
      %vm1055 = vcmask 1040384
      %v1057 = vsel %vm1055, %v925, 0
      %1059 = vmatprep.subr.bf16.mxu0 0
      %1060 = vmatpush1.bf16.msra.mxu0 %v1057
      %1061 = vmatprep.subr.bf16.mxu0 0
      %1062 = vmatpush1.bf16.msra.mxu0 0
      %1063 = vmatprep.subr.bf16.mxu0 0
      %1064 = vmatpush1.bf16.msra.mxu0 0
      %1065 = vmatprep.subr.bf16.mxu0 0
      %1066 = vmatpush1.bf16.msra.mxu0 0
      %1067 = vmatprep.subr.bf16.mxu0 0
      %1068 = vmatpush1.bf16.msra.mxu0 0
      %1069 = vmatprep.subr.bf16.mxu0 0
      %1070 = vmatpush1.bf16.msra.mxu0 0
      %1071 = vmatprep.subr.bf16.mxu0 0
      %1072 = vmatpush1.bf16.msra.mxu0 0
      %1073 = vmatprep.subr.bf16.mxu0 0
      %1074 = vmatpush1.bf16.msra.mxu0 0
      %1075 = vmatprep.subr.bf16.mxu0 0
      %1076 = vmatpush1.bf16.msra.mxu0 0
      %1077 = vmatprep.subr.bf16.mxu0 0
      %1078 = vmatpush1.bf16.msra.mxu0 0
      %1079 = vmatprep.subr.bf16.mxu0 0
      %1080 = vmatpush1.bf16.msra.mxu0 0
      %1081 = vmatprep.subr.bf16.mxu0 0
      %1082 = vmatpush1.bf16.msra.mxu0 0
      %1083 = vmatprep.subr.bf16.mxu0 0
      %1084 = vmatpush1.bf16.msra.mxu0 0
      %1085 = vmatprep.subr.bf16.mxu0 0
      %1086 = vmatpush1.bf16.msra.mxu0 0
      %1087 = vmatprep.subr.bf16.mxu0 0
      %1088 = vmatpush1.bf16.msra.mxu0 0
      %1089 = vmatprep.subr.bf16.mxu0 0
      %1090 = vmatpush1.bf16.msra.mxu0 0
      %1091 = vmatprep.mubr.bf16.mxu0 0
      %1092 = vmatmul.mubr.bf16.gmra.mrb[0].mxu0 %v1008
      %v1093 = vpop.f32.mrb[0].mxu0
      %v1094 = vadd.f32 0.0, %v1093
      %v1095 = vpop.f32.mrb[0].mxu0
      %v1096 = vpop.f32.mrb[0].mxu0
      %v1097 = vadd.f32 0.0, %v1096
      %v1098 = vpop.f32.mrb[0].mxu0
      %1099 = vmatprep.mubr.bf16.mxu0 0
      %1100 = vmatmul.mubr.bf16.gmra.mrb[0].mxu0 %v1011
      %v1101 = vpop.f32.mrb[0].mxu0
      %v1102 = vadd.f32 0.0, %v1101
      %v1103 = vpop.f32.mrb[0].mxu0
      %v1104 = vpop.f32.mrb[0].mxu0
      %v1105 = vadd.f32 0.0, %v1104
      %v1106 = vpop.f32.mrb[0].mxu0
      %1107 = vmatprep.mubr.bf16.mxu0 0
      %1108 = vmatmul.mubr.bf16.gmra.mrb[0].mxu0 %v1014
      %v1109 = vpop.f32.mrb[0].mxu0
      %v1110 = vadd.f32 0.0, %v1109
      %v1111 = vpop.f32.mrb[0].mxu0
      %v1112 = vpop.f32.mrb[0].mxu0
      %v1113 = vadd.f32 0.0, %v1112
      %v1114 = vpop.f32.mrb[0].mxu0
      %1115 = vmatprep.mubr.bf16.mxu0 0
      %1116 = vmatmul.mubr.bf16.gmra.mrb[0].mxu0 %v1017
      %v1117 = vpop.f32.mrb[0].mxu0
      %v1118 = vadd.f32 0.0, %v1117
      %v1119 = vpop.f32.mrb[0].mxu0
      %v1120 = vpop.f32.mrb[0].mxu0
      %v1121 = vadd.f32 0.0, %v1120
      %v1122 = vpop.f32.mrb[0].mxu0
      %1123 = vmatprep.mubr.bf16.mxu0 0
      %1124 = vmatmul.mubr.bf16.gmra.mrb[0].mxu0 %v1020
      %v1125 = vpop.f32.mrb[0].mxu0
      %v1126 = vadd.f32 0.0, %v1125
      %v1127 = vpop.f32.mrb[0].mxu0
      %v1128 = vpop.f32.mrb[0].mxu0
      %v1129 = vadd.f32 0.0, %v1128
      %v1130 = vpop.f32.mrb[0].mxu0
      %1131 = vmatprep.mubr.bf16.mxu0 0
      %1132 = vmatmul.mubr.bf16.gmra.mrb[0].mxu0 %v1023
      %v1133 = vpop.f32.mrb[0].mxu0
      %v1134 = vadd.f32 0.0, %v1133
      %v1135 = vpop.f32.mrb[0].mxu0
      %v1136 = vpop.f32.mrb[0].mxu0
      %v1137 = vadd.f32 0.0, %v1136
      %v1138 = vpop.f32.mrb[0].mxu0
      %1139 = vmatprep.mubr.bf16.mxu0 0
      %1140 = vmatmul.mubr.bf16.gmra.mrb[0].mxu0 %v1026
      %v1141 = vpop.f32.mrb[0].mxu0
      %v1142 = vadd.f32 0.0, %v1141
      %v1143 = vpop.f32.mrb[0].mxu0
      %v1144 = vpop.f32.mrb[0].mxu0
      %v1145 = vadd.f32 0.0, %v1144
      %v1146 = vpop.f32.mrb[0].mxu0
      %1147 = vmatprep.mubr.bf16.mxu0 0
      %1148 = vmatmul.mubr.bf16.gmra.mrb[0].mxu0 %v1029
      %v1149 = vpop.f32.mrb[0].mxu0
      %v1150 = vadd.f32 0.0, %v1149
      %v1151 = vpop.f32.mrb[0].mxu0
      %v1152 = vpop.f32.mrb[0].mxu0
      %v1153 = vadd.f32 0.0, %v1152
      %v1154 = vpop.f32.mrb[0].mxu0
      %1155 = vmatprep.mubr.bf16.mxu0 0
      %1156 = vmatmul.mubr.bf16.gmra.mrb[0].mxu0 %v1032
      %v1157 = vpop.f32.mrb[0].mxu0
      %v1158 = vadd.f32 0.0, %v1157
      %v1159 = vpop.f32.mrb[0].mxu0
      %v1160 = vpop.f32.mrb[0].mxu0
      %v1161 = vadd.f32 0.0, %v1160
      %v1162 = vpop.f32.mrb[0].mxu0
      %1163 = vmatprep.mubr.bf16.mxu0 0
      %1164 = vmatmul.mubr.bf16.gmra.mrb[0].mxu0 %v1035
      %v1165 = vpop.f32.mrb[0].mxu0
      %v1166 = vadd.f32 0.0, %v1165
      %v1167 = vpop.f32.mrb[0].mxu0
      %v1168 = vpop.f32.mrb[0].mxu0
      %v1169 = vadd.f32 0.0, %v1168
      %v1170 = vpop.f32.mrb[0].mxu0
      %1171 = vmatprep.mubr.bf16.mxu0 0
      %1172 = vmatmul.mubr.bf16.gmra.mrb[0].mxu0 %v1038
      %v1173 = vpop.f32.mrb[0].mxu0
      %v1174 = vadd.f32 0.0, %v1173
      %v1175 = vpop.f32.mrb[0].mxu0
      %v1176 = vpop.f32.mrb[0].mxu0
      %v1177 = vadd.f32 0.0, %v1176
      %v1178 = vpop.f32.mrb[0].mxu0
      %1179 = vmatprep.mubr.bf16.mxu0 0
      %1180 = vmatmul.mubr.bf16.gmra.mrb[0].mxu0 %v1041
      %v1181 = vpop.f32.mrb[0].mxu0
      %v1182 = vadd.f32 0.0, %v1181
      %v1183 = vpop.f32.mrb[0].mxu0
      %v1184 = vpop.f32.mrb[0].mxu0
      %v1185 = vadd.f32 0.0, %v1184
      %v1186 = vpop.f32.mrb[0].mxu0
      %1187 = vmatprep.mubr.bf16.mxu0 0
      %1188 = vmatmul.mubr.bf16.gmra.mrb[0].mxu0 %v1044
      %v1189 = vpop.f32.mrb[0].mxu0
      %v1190 = vadd.f32 0.0, %v1189
      %v1191 = vpop.f32.mrb[0].mxu0
      %v1192 = vpop.f32.mrb[0].mxu0
      %v1193 = vadd.f32 0.0, %v1192
      %v1194 = vpop.f32.mrb[0].mxu0
      %1195 = vmatprep.mubr.bf16.mxu0 0
      %1196 = vmatmul.mubr.bf16.gmra.mrb[0].mxu0 %v1047
      %v1197 = vpop.f32.mrb[0].mxu0
      %v1198 = vadd.f32 0.0, %v1197
      %v1199 = vpop.f32.mrb[0].mxu0
      %v1200 = vpop.f32.mrb[0].mxu0
      %v1201 = vadd.f32 0.0, %v1200
      %v1202 = vpop.f32.mrb[0].mxu0
      %1203 = vmatprep.mubr.bf16.mxu0 0
      %1204 = vmatmul.mubr.bf16.gmra.mrb[0].mxu0 %v1050
      %v1205 = vpop.f32.mrb[0].mxu0
      %v1206 = vadd.f32 0.0, %v1205
      %v1207 = vpop.f32.mrb[0].mxu0
      %v1208 = vpop.f32.mrb[0].mxu0
      %v1209 = vadd.f32 0.0, %v1208
      %v1210 = vpop.f32.mrb[0].mxu0
      %1211 = vmatprep.mubr.bf16.mxu0 0
      %1212 = vmatmul.mubr.bf16.gmra.mrb[0].mxu0 %v1053
      %v1213 = vpop.f32.mrb[0].mxu0
      %v1214 = vadd.f32 0.0, %v1213
      %v1215 = vpop.f32.mrb[0].mxu0
      %v1216 = vpop.f32.mrb[0].mxu0
      %v1217 = vadd.f32 0.0, %v1216
      %v1218 = vpop.f32.mrb[0].mxu0
      %1219 = vdwg.mxu0
      %v1220 = vmul.f32 %v861, %v1094
      %v1221 = vmul.f32 %v862, %v1097
      %v1222 = vmul.f32 %v863, %v1102
      %v1223 = vmul.f32 %v864, %v1105
      %v1224 = vmul.f32 %v865, %v1110
      %v1225 = vmul.f32 %v866, %v1113
      %v1226 = vmul.f32 %v867, %v1118
      %v1227 = vmul.f32 %v868, %v1121
      %v1228 = vmul.f32 %v869, %v1126
      %v1229 = vmul.f32 %v870, %v1129
      %v1230 = vmul.f32 %v871, %v1134
      %v1231 = vmul.f32 %v872, %v1137
      %v1232 = vmul.f32 %v873, %v1142
      %v1233 = vmul.f32 %v874, %v1145
      %v1234 = vmul.f32 %v875, %v1150
      %v1235 = vmul.f32 %v876, %v1153
      %v1236 = vmul.f32 %v877, %v1158
      %v1237 = vmul.f32 %v878, %v1161
      %v1238 = vmul.f32 %v879, %v1166
      %v1239 = vmul.f32 %v880, %v1169
      %v1240 = vmul.f32 %v881, %v1174
      %v1241 = vmul.f32 %v882, %v1177
      %v1242 = vmul.f32 %v883, %v1182
      %v1243 = vmul.f32 %v884, %v1185
      %v1244 = vmul.f32 %v885, %v1190
      %v1245 = vmul.f32 %v886, %v1193
      %v1246 = vmul.f32 %v887, %v1198
      %v1247 = vmul.f32 %v888, %v1201
      %v1248 = vmul.f32 %v889, %v1206
      %v1249 = vmul.f32 %v890, %v1209
      %v1250 = vmul.f32 %v891, %v1214
      %v1251 = vmul.f32 %v892, %v1217
      %v1252 = vpack.c.bf16 %v1221, %v1220
      %v1253 = vpack.c.bf16 %v1223, %v1222
      %v1254 = vpack.c.bf16 %v1225, %v1224
      %v1255 = vpack.c.bf16 %v1227, %v1226
      %v1256 = vpack.c.bf16 %v1229, %v1228
      %v1257 = vpack.c.bf16 %v1231, %v1230
      %v1258 = vpack.c.bf16 %v1233, %v1232
      %v1259 = vpack.c.bf16 %v1235, %v1234
      %v1260 = vpack.c.bf16 %v1237, %v1236
      %v1261 = vpack.c.bf16 %v1239, %v1238
      %v1262 = vpack.c.bf16 %v1241, %v1240
      %v1263 = vpack.c.bf16 %v1243, %v1242
      %v1264 = vpack.c.bf16 %v1245, %v1244
      %v1265 = vpack.c.bf16 %v1247, %v1246
      %v1266 = vpack.c.bf16 %v1249, %v1248
      %v1267 = vpack.c.bf16 %v1251, %v1250
      %v1268 = vld [vmem:[%s4] sm:$0xf]
      %v1269 = vld [vmem:[%s4 + $0x4] sm:$0xf]
      %v1270 = vld [vmem:[%s5] sm:$0x1]
      %v1272 = vlaneseq
      %v1273 = vshrl.u32 %v1272, 7
      %v1274 = vsub.s32 0, %v1273
      %v1275 = vrot.slane %v1270, %v1274
      %v1279 = vunpack.c.l.b16 %v1268
      %v1280 = vunpack.c.l.b16 %v1269
      %v1281 = vpack.c.b16 %v1280, %v1279
      %vm1283 = vcmask 130048
      %v1285 = vsel %vm1283, %v1252, 0
      %v1288 = vsel %vm1283, %v1253, 0
      %v1291 = vsel %vm1283, %v1254, 0
      %v1294 = vsel %vm1283, %v1255, 0
      %v1297 = vsel %vm1283, %v1256, 0
      %v1300 = vsel %vm1283, %v1257, 0
      %v1303 = vsel %vm1283, %v1258, 0
      %v1306 = vsel %vm1283, %v1259, 0
      %v1309 = vsel %vm1283, %v1260, 0
      %v1312 = vsel %vm1283, %v1261, 0
      %v1315 = vsel %vm1283, %v1262, 0
      %v1318 = vsel %vm1283, %v1263, 0
      %v1321 = vsel %vm1283, %v1264, 0
      %v1324 = vsel %vm1283, %v1265, 0
      %v1327 = vsel %vm1283, %v1266, 0
      %v1330 = vsel %vm1283, %v1267, 0
      %1332 = vmatprep.subr.bf16.mxu0 0
      %1333 = vmatpush1.bf16.msra.mxu0 %v1281
      %1334 = vmatprep.subr.bf16.mxu0 0
      %1335 = vmatpush1.bf16.msra.mxu0 0
      %1336 = vmatprep.subr.bf16.mxu0 0
      %1337 = vmatpush1.bf16.msra.mxu0 0
      %1338 = vmatprep.subr.bf16.mxu0 0
      %1339 = vmatpush1.bf16.msra.mxu0 0
      %1340 = vmatprep.subr.bf16.mxu0 0
      %1341 = vmatpush1.bf16.msra.mxu0 0
      %1342 = vmatprep.subr.bf16.mxu0 0
      %1343 = vmatpush1.bf16.msra.mxu0 0
      %1344 = vmatprep.subr.bf16.mxu0 0
      %1345 = vmatpush1.bf16.msra.mxu0 0
      %1346 = vmatprep.subr.bf16.mxu0 0
      %1347 = vmatpush1.bf16.msra.mxu0 0
      %1348 = vmatprep.subr.bf16.mxu0 0
      %1349 = vmatpush1.bf16.msra.mxu0 0
      %1350 = vmatprep.subr.bf16.mxu0 0
      %1351 = vmatpush1.bf16.msra.mxu0 0
      %1352 = vmatprep.subr.bf16.mxu0 0
      %1353 = vmatpush1.bf16.msra.mxu0 0
      %1354 = vmatprep.subr.bf16.mxu0 0
      %1355 = vmatpush1.bf16.msra.mxu0 0
      %1356 = vmatprep.subr.bf16.mxu0 0
      %1357 = vmatpush1.bf16.msra.mxu0 0
      %1358 = vmatprep.subr.bf16.mxu0 0
      %1359 = vmatpush1.bf16.msra.mxu0 0
      %1360 = vmatprep.subr.bf16.mxu0 0
      %1361 = vmatpush1.bf16.msra.mxu0 0
      %1362 = vmatprep.subr.bf16.mxu0 0
      %1363 = vmatpush1.bf16.msra.mxu0 0
      %1364 = vmatprep.mubr.bf16.mxu0 0
      %1365 = vmatmul.mubr.bf16.gmra.mrb[0].mxu0 %v1285
      %v1366 = vpop.f32.mrb[0].mxu0
      %v1367 = vadd.f32 %v1275, %v1366
      %v1368 = vpop.f32.mrb[0].mxu0
      %v1369 = vpop.f32.mrb[0].mxu0
      %v1370 = vadd.f32 %v1275, %v1369
      %v1371 = vpop.f32.mrb[0].mxu0
      %1372 = vmatprep.mubr.bf16.mxu0 0
      %1373 = vmatmul.mubr.bf16.gmra.mrb[0].mxu0 %v1288
      %v1374 = vpop.f32.mrb[0].mxu0
      %v1375 = vadd.f32 %v1275, %v1374
      %v1376 = vpop.f32.mrb[0].mxu0
      %v1377 = vpop.f32.mrb[0].mxu0
      %v1378 = vadd.f32 %v1275, %v1377
      %v1379 = vpop.f32.mrb[0].mxu0
      %1380 = vmatprep.mubr.bf16.mxu0 0
      %1381 = vmatmul.mubr.bf16.gmra.mrb[0].mxu0 %v1291
      %v1382 = vpop.f32.mrb[0].mxu0
      %v1383 = vadd.f32 %v1275, %v1382
      %v1384 = vpop.f32.mrb[0].mxu0
      %v1385 = vpop.f32.mrb[0].mxu0
      %v1386 = vadd.f32 %v1275, %v1385
      %v1387 = vpop.f32.mrb[0].mxu0
      %1388 = vmatprep.mubr.bf16.mxu0 0
      %1389 = vmatmul.mubr.bf16.gmra.mrb[0].mxu0 %v1294
      %v1390 = vpop.f32.mrb[0].mxu0
      %v1391 = vadd.f32 %v1275, %v1390
      %v1392 = vpop.f32.mrb[0].mxu0
      %v1393 = vpop.f32.mrb[0].mxu0
      %v1394 = vadd.f32 %v1275, %v1393
      %v1395 = vpop.f32.mrb[0].mxu0
      %1396 = vmatprep.mubr.bf16.mxu0 0
      %1397 = vmatmul.mubr.bf16.gmra.mrb[0].mxu0 %v1297
      %v1398 = vpop.f32.mrb[0].mxu0
      %v1399 = vadd.f32 %v1275, %v1398
      %v1400 = vpop.f32.mrb[0].mxu0
      %v1401 = vpop.f32.mrb[0].mxu0
      %v1402 = vadd.f32 %v1275, %v1401
      %v1403 = vpop.f32.mrb[0].mxu0
      %1404 = vmatprep.mubr.bf16.mxu0 0
      %1405 = vmatmul.mubr.bf16.gmra.mrb[0].mxu0 %v1300
      %v1406 = vpop.f32.mrb[0].mxu0
      %v1407 = vadd.f32 %v1275, %v1406
      %v1408 = vpop.f32.mrb[0].mxu0
      %v1409 = vpop.f32.mrb[0].mxu0
      %v1410 = vadd.f32 %v1275, %v1409
      %v1411 = vpop.f32.mrb[0].mxu0
      %1412 = vmatprep.mubr.bf16.mxu0 0
      %1413 = vmatmul.mubr.bf16.gmra.mrb[0].mxu0 %v1303
      %v1414 = vpop.f32.mrb[0].mxu0
      %v1415 = vadd.f32 %v1275, %v1414
      %v1416 = vpop.f32.mrb[0].mxu0
      %v1417 = vpop.f32.mrb[0].mxu0
      %v1418 = vadd.f32 %v1275, %v1417
      %v1419 = vpop.f32.mrb[0].mxu0
      %1420 = vmatprep.mubr.bf16.mxu0 0
      %1421 = vmatmul.mubr.bf16.gmra.mrb[0].mxu0 %v1306
      %v1422 = vpop.f32.mrb[0].mxu0
      %v1423 = vadd.f32 %v1275, %v1422
      %v1424 = vpop.f32.mrb[0].mxu0
      %v1425 = vpop.f32.mrb[0].mxu0
      %v1426 = vadd.f32 %v1275, %v1425
      %v1427 = vpop.f32.mrb[0].mxu0
      %1428 = vmatprep.mubr.bf16.mxu0 0
      %1429 = vmatmul.mubr.bf16.gmra.mrb[0].mxu0 %v1309
      %v1430 = vpop.f32.mrb[0].mxu0
      %v1431 = vadd.f32 %v1275, %v1430
      %v1432 = vpop.f32.mrb[0].mxu0
      %v1433 = vpop.f32.mrb[0].mxu0
      %v1434 = vadd.f32 %v1275, %v1433
      %v1435 = vpop.f32.mrb[0].mxu0
      %1436 = vmatprep.mubr.bf16.mxu0 0
      %1437 = vmatmul.mubr.bf16.gmra.mrb[0].mxu0 %v1312
      %v1438 = vpop.f32.mrb[0].mxu0
      %v1439 = vadd.f32 %v1275, %v1438
      %v1440 = vpop.f32.mrb[0].mxu0
      %v1441 = vpop.f32.mrb[0].mxu0
      %v1442 = vadd.f32 %v1275, %v1441
      %v1443 = vpop.f32.mrb[0].mxu0
      %1444 = vmatprep.mubr.bf16.mxu0 0
      %1445 = vmatmul.mubr.bf16.gmra.mrb[0].mxu0 %v1315
      %v1446 = vpop.f32.mrb[0].mxu0
      %v1447 = vadd.f32 %v1275, %v1446
      %v1448 = vpop.f32.mrb[0].mxu0
      %v1449 = vpop.f32.mrb[0].mxu0
      %v1450 = vadd.f32 %v1275, %v1449
      %v1451 = vpop.f32.mrb[0].mxu0
      %1452 = vmatprep.mubr.bf16.mxu0 0
      %1453 = vmatmul.mubr.bf16.gmra.mrb[0].mxu0 %v1318
      %v1454 = vpop.f32.mrb[0].mxu0
      %v1455 = vadd.f32 %v1275, %v1454
      %v1456 = vpop.f32.mrb[0].mxu0
      %v1457 = vpop.f32.mrb[0].mxu0
      %v1458 = vadd.f32 %v1275, %v1457
      %v1459 = vpop.f32.mrb[0].mxu0
      %1460 = vmatprep.mubr.bf16.mxu0 0
      %1461 = vmatmul.mubr.bf16.gmra.mrb[0].mxu0 %v1321
      %v1462 = vpop.f32.mrb[0].mxu0
      %v1463 = vadd.f32 %v1275, %v1462
      %v1464 = vpop.f32.mrb[0].mxu0
      %v1465 = vpop.f32.mrb[0].mxu0
      %v1466 = vadd.f32 %v1275, %v1465
      %v1467 = vpop.f32.mrb[0].mxu0
      %1468 = vmatprep.mubr.bf16.mxu0 0
      %1469 = vmatmul.mubr.bf16.gmra.mrb[0].mxu0 %v1324
      %v1470 = vpop.f32.mrb[0].mxu0
      %v1471 = vadd.f32 %v1275, %v1470
      %v1472 = vpop.f32.mrb[0].mxu0
      %v1473 = vpop.f32.mrb[0].mxu0
      %v1474 = vadd.f32 %v1275, %v1473
      %v1475 = vpop.f32.mrb[0].mxu0
      %1476 = vmatprep.mubr.bf16.mxu0 0
      %1477 = vmatmul.mubr.bf16.gmra.mrb[0].mxu0 %v1327
      %v1478 = vpop.f32.mrb[0].mxu0
      %v1479 = vadd.f32 %v1275, %v1478
      %v1480 = vpop.f32.mrb[0].mxu0
      %v1481 = vpop.f32.mrb[0].mxu0
      %v1482 = vadd.f32 %v1275, %v1481
      %v1483 = vpop.f32.mrb[0].mxu0
      %1484 = vmatprep.mubr.bf16.mxu0 0
      %1485 = vmatmul.mubr.bf16.gmra.mrb[0].mxu0 %v1330
      %v1486 = vpop.f32.mrb[0].mxu0
      %v1487 = vadd.f32 %v1275, %v1486
      %v1488 = vpop.f32.mrb[0].mxu0
      %v1489 = vpop.f32.mrb[0].mxu0
      %v1490 = vadd.f32 %v1275, %v1489
      %v1491 = vpop.f32.mrb[0].mxu0
      %1492 = vdwg.mxu0
      %vm1493 = vcmask 64512
      %1494 = vst.msk [vmem:[%s472] sm:$0xff] %vm1493, %v1367
      %1495 = vst.msk [vmem:[%s472 + $0x8] sm:$0xff] %vm1493, %v1370
      %1496 = vst.msk [vmem:[%s472 + $0x10] sm:$0xff] %vm1493, %v1375
      %1497 = vst.msk [vmem:[%s472 + $0x18] sm:$0xff] %vm1493, %v1378
      %1498 = vst.msk [vmem:[%s472 + $0x20] sm:$0xff] %vm1493, %v1383
      %1499 = vst.msk [vmem:[%s472 + $0x28] sm:$0xff] %vm1493, %v1386
      %1500 = vst.msk [vmem:[%s472 + $0x30] sm:$0xff] %vm1493, %v1391
      %1501 = vst.msk [vmem:[%s472 + $0x38] sm:$0xff] %vm1493, %v1394
      %1502 = vst.msk [vmem:[%s472 + $0x40] sm:$0xff] %vm1493, %v1399
      %1503 = vst.msk [vmem:[%s472 + $0x48] sm:$0xff] %vm1493, %v1402
      %1504 = vst.msk [vmem:[%s472 + $0x50] sm:$0xff] %vm1493, %v1407
      %1505 = vst.msk [vmem:[%s472 + $0x58] sm:$0xff] %vm1493, %v1410
      %1506 = vst.msk [vmem:[%s472 + $0x60] sm:$0xff] %vm1493, %v1415
      %1507 = vst.msk [vmem:[%s472 + $0x68] sm:$0xff] %vm1493, %v1418
      %1508 = vst.msk [vmem:[%s472 + $0x70] sm:$0xff] %vm1493, %v1423
      %1509 = vst.msk [vmem:[%s472 + $0x78] sm:$0xff] %vm1493, %v1426
      %1510 = vst.msk [vmem:[%s472 + $0x80] sm:$0xff] %vm1493, %v1431
      %1511 = vst.msk [vmem:[%s472 + $0x88] sm:$0xff] %vm1493, %v1434
      %1512 = vst.msk [vmem:[%s472 + $0x90] sm:$0xff] %vm1493, %v1439
      %1513 = vst.msk [vmem:[%s472 + $0x98] sm:$0xff] %vm1493, %v1442
      %1514 = vst.msk [vmem:[%s472 + $0xa0] sm:$0xff] %vm1493, %v1447
      %1515 = vst.msk [vmem:[%s472 + $0xa8] sm:$0xff] %vm1493, %v1450
      %1516 = vst.msk [vmem:[%s472 + $0xb0] sm:$0xff] %vm1493, %v1455
      %1517 = vst.msk [vmem:[%s472 + $0xb8] sm:$0xff] %vm1493, %v1458
      %1518 = vst.msk [vmem:[%s472 + $0xc0] sm:$0xff] %vm1493, %v1463
      %1519 = vst.msk [vmem:[%s472 + $0xc8] sm:$0xff] %vm1493, %v1466
      %1520 = vst.msk [vmem:[%s472 + $0xd0] sm:$0xff] %vm1493, %v1471
      %1521 = vst.msk [vmem:[%s472 + $0xd8] sm:$0xff] %vm1493, %v1474
      %1522 = vst.msk [vmem:[%s472 + $0xe0] sm:$0xff] %vm1493, %v1479
      %1523 = vst.msk [vmem:[%s472 + $0xe8] sm:$0xff] %vm1493, %v1482
      %1524 = vst.msk [vmem:[%s472 + $0xf0] sm:$0xff] %vm1493, %v1487
      %1525 = vst.msk [vmem:[%s472 + $0xf8] sm:$0xff] %vm1493, %v1490
      %v1526 = vld [vmem:[%s476] sm:$0x1]
      %v1527 = vsel %vm1493, %v1367, 0.0
      %v1528 = vsel %vm1493, %v1370, 0.0
      %v1529 = vadd.f32 %v1527, %v1528
      %v1530 = vsel %vm1493, %v1375, 0.0
      %v1531 = vadd.f32 %v1529, %v1530
      %v1532 = vsel %vm1493, %v1378, 0.0
      %v1533 = vadd.f32 %v1531, %v1532
      %v1534 = vsel %vm1493, %v1383, 0.0
      %v1535 = vadd.f32 %v1533, %v1534
      %v1536 = vsel %vm1493, %v1386, 0.0
      %v1537 = vadd.f32 %v1535, %v1536
      %v1538 = vsel %vm1493, %v1391, 0.0
      %v1539 = vadd.f32 %v1537, %v1538
      %v1540 = vsel %vm1493, %v1394, 0.0
      %v1541 = vadd.f32 %v1539, %v1540
      %v1542 = vsel %vm1493, %v1399, 0.0
      %v1543 = vadd.f32 %v1541, %v1542
      %v1544 = vsel %vm1493, %v1402, 0.0
      %v1545 = vadd.f32 %v1543, %v1544
      %v1546 = vsel %vm1493, %v1407, 0.0
      %v1547 = vadd.f32 %v1545, %v1546
      %v1548 = vsel %vm1493, %v1410, 0.0
      %v1549 = vadd.f32 %v1547, %v1548
      %v1550 = vsel %vm1493, %v1415, 0.0
      %v1551 = vadd.f32 %v1549, %v1550
      %v1552 = vsel %vm1493, %v1418, 0.0
      %v1553 = vadd.f32 %v1551, %v1552
      %v1554 = vsel %vm1493, %v1423, 0.0
      %v1555 = vadd.f32 %v1553, %v1554
      %v1556 = vsel %vm1493, %v1426, 0.0
      %v1557 = vadd.f32 %v1555, %v1556
      %v1558 = vsel %vm1493, %v1431, 0.0
      %v1559 = vadd.f32 %v1557, %v1558
      %v1560 = vsel %vm1493, %v1434, 0.0
      %v1561 = vadd.f32 %v1559, %v1560
      %v1562 = vsel %vm1493, %v1439, 0.0
      %v1563 = vadd.f32 %v1561, %v1562
      %v1564 = vsel %vm1493, %v1442, 0.0
      %v1565 = vadd.f32 %v1563, %v1564
      %v1566 = vsel %vm1493, %v1447, 0.0
      %v1567 = vadd.f32 %v1565, %v1566
      %v1568 = vsel %vm1493, %v1450, 0.0
      %v1569 = vadd.f32 %v1567, %v1568
      %v1570 = vsel %vm1493, %v1455, 0.0
      %v1571 = vadd.f32 %v1569, %v1570
      %v1572 = vsel %vm1493, %v1458, 0.0
      %v1573 = vadd.f32 %v1571, %v1572
      %v1574 = vsel %vm1493, %v1463, 0.0
      %v1575 = vadd.f32 %v1573, %v1574
      %v1576 = vsel %vm1493, %v1466, 0.0
      %v1577 = vadd.f32 %v1575, %v1576
      %v1578 = vsel %vm1493, %v1471, 0.0
      %v1579 = vadd.f32 %v1577, %v1578
      %v1580 = vsel %vm1493, %v1474, 0.0
      %v1581 = vadd.f32 %v1579, %v1580
      %v1582 = vsel %vm1493, %v1479, 0.0
      %v1583 = vadd.f32 %v1581, %v1582
      %v1584 = vsel %vm1493, %v1482, 0.0
      %v1585 = vadd.f32 %v1583, %v1584
      %v1586 = vsel %vm1493, %v1487, 0.0
      %v1587 = vadd.f32 %v1585, %v1586
      %v1588 = vsel %vm1493, %v1490, 0.0
      %v1589 = vadd.f32 %v1587, %v1588
      %v1590 = vrot.slane %v1589, 4
      %v1591 = vadd.f32 %v1589, %v1590
      %v1592 = vrot.slane %v1591, 2
      %v1593 = vadd.f32 %v1591, %v1592
      %v1594 = vrot.slane %v1593, 1
      %v1595 = vadd.f32 %v1593, %v1594
      %v1596 = vadd.f32 %v1526, %v1595
      %vm1597 = vcmask 57344
      %1598 = vst.msk [vmem:[%s476] sm:$0x1] %vm1597, %v1596
      %v1599 = vld [vmem:[%s479] sm:$0x1]
      %v1600 = vmul.f32 %v1367, %v1367
      %v1601 = vmul.f32 %v1370, %v1370
      %v1602 = vmul.f32 %v1375, %v1375
      %v1603 = vmul.f32 %v1378, %v1378
      %v1604 = vmul.f32 %v1383, %v1383
      %v1605 = vmul.f32 %v1386, %v1386
      %v1606 = vmul.f32 %v1391, %v1391
      %v1607 = vmul.f32 %v1394, %v1394
      %v1608 = vmul.f32 %v1399, %v1399
      %v1609 = vmul.f32 %v1402, %v1402
      %v1610 = vmul.f32 %v1407, %v1407
      %v1611 = vmul.f32 %v1410, %v1410
      %v1612 = vmul.f32 %v1415, %v1415
      %v1613 = vmul.f32 %v1418, %v1418
      %v1614 = vmul.f32 %v1423, %v1423
      %v1615 = vmul.f32 %v1426, %v1426
      %v1616 = vmul.f32 %v1431, %v1431
      %v1617 = vmul.f32 %v1434, %v1434
      %v1618 = vmul.f32 %v1439, %v1439
      %v1619 = vmul.f32 %v1442, %v1442
      %v1620 = vmul.f32 %v1447, %v1447
      %v1621 = vmul.f32 %v1450, %v1450
      %v1622 = vmul.f32 %v1455, %v1455
      %v1623 = vmul.f32 %v1458, %v1458
      %v1624 = vmul.f32 %v1463, %v1463
      %v1625 = vmul.f32 %v1466, %v1466
      %v1626 = vmul.f32 %v1471, %v1471
      %v1627 = vmul.f32 %v1474, %v1474
      %v1628 = vmul.f32 %v1479, %v1479
      %v1629 = vmul.f32 %v1482, %v1482
      %v1630 = vmul.f32 %v1487, %v1487
      %v1631 = vmul.f32 %v1490, %v1490
      %v1632 = vsel %vm1493, %v1600, 0.0
      %v1633 = vsel %vm1493, %v1601, 0.0
      %v1634 = vadd.f32 %v1632, %v1633
      %v1635 = vsel %vm1493, %v1602, 0.0
      %v1636 = vadd.f32 %v1634, %v1635
      %v1637 = vsel %vm1493, %v1603, 0.0
      %v1638 = vadd.f32 %v1636, %v1637
      %v1639 = vsel %vm1493, %v1604, 0.0
      %v1640 = vadd.f32 %v1638, %v1639
      %v1641 = vsel %vm1493, %v1605, 0.0
      %v1642 = vadd.f32 %v1640, %v1641
      %v1643 = vsel %vm1493, %v1606, 0.0
      %v1644 = vadd.f32 %v1642, %v1643
      %v1645 = vsel %vm1493, %v1607, 0.0
      %v1646 = vadd.f32 %v1644, %v1645
      %v1647 = vsel %vm1493, %v1608, 0.0
      %v1648 = vadd.f32 %v1646, %v1647
      %v1649 = vsel %vm1493, %v1609, 0.0
      %v1650 = vadd.f32 %v1648, %v1649
      %v1651 = vsel %vm1493, %v1610, 0.0
      %v1652 = vadd.f32 %v1650, %v1651
      %v1653 = vsel %vm1493, %v1611, 0.0
      %v1654 = vadd.f32 %v1652, %v1653
      %v1655 = vsel %vm1493, %v1612, 0.0
      %v1656 = vadd.f32 %v1654, %v1655
      %v1657 = vsel %vm1493, %v1613, 0.0
      %v1658 = vadd.f32 %v1656, %v1657
      %v1659 = vsel %vm1493, %v1614, 0.0
      %v1660 = vadd.f32 %v1658, %v1659
      %v1661 = vsel %vm1493, %v1615, 0.0
      %v1662 = vadd.f32 %v1660, %v1661
      %v1663 = vsel %vm1493, %v1616, 0.0
      %v1664 = vadd.f32 %v1662, %v1663
      %v1665 = vsel %vm1493, %v1617, 0.0
      %v1666 = vadd.f32 %v1664, %v1665
      %v1667 = vsel %vm1493, %v1618, 0.0
      %v1668 = vadd.f32 %v1666, %v1667
      %v1669 = vsel %vm1493, %v1619, 0.0
      %v1670 = vadd.f32 %v1668, %v1669
      %v1671 = vsel %vm1493, %v1620, 0.0
      %v1672 = vadd.f32 %v1670, %v1671
      %v1673 = vsel %vm1493, %v1621, 0.0
      %v1674 = vadd.f32 %v1672, %v1673
      %v1675 = vsel %vm1493, %v1622, 0.0
      %v1676 = vadd.f32 %v1674, %v1675
      %v1677 = vsel %vm1493, %v1623, 0.0
      %v1678 = vadd.f32 %v1676, %v1677
      %v1679 = vsel %vm1493, %v1624, 0.0
      %v1680 = vadd.f32 %v1678, %v1679
      %v1681 = vsel %vm1493, %v1625, 0.0
      %v1682 = vadd.f32 %v1680, %v1681
      %v1683 = vsel %vm1493, %v1626, 0.0
      %v1684 = vadd.f32 %v1682, %v1683
      %v1685 = vsel %vm1493, %v1627, 0.0
      %v1686 = vadd.f32 %v1684, %v1685
      %v1687 = vsel %vm1493, %v1628, 0.0
      %v1688 = vadd.f32 %v1686, %v1687
      %v1689 = vsel %vm1493, %v1629, 0.0
      %v1690 = vadd.f32 %v1688, %v1689
      %v1691 = vsel %vm1493, %v1630, 0.0
      %v1692 = vadd.f32 %v1690, %v1691
      %v1693 = vsel %vm1493, %v1631, 0.0
      %v1694 = vadd.f32 %v1692, %v1693
      %v1695 = vrot.slane %v1694, 4
      %v1696 = vadd.f32 %v1694, %v1695
      %v1697 = vrot.slane %v1696, 2
      %v1698 = vadd.f32 %v1696, %v1697
      %v1699 = vrot.slane %v1698, 1
      %v1700 = vadd.f32 %v1698, %v1699
      %v1701 = vadd.f32 %v1599, %v1700
      %1702 = vst.msk [vmem:[%s479] sm:$0x1] %vm1597, %v1701
      %s1703 = smul.u32 32, %s27
      %p1704 = scmp.lt.s32.totalorder %s26, 1
      %s1705 = scalar_select %p1704, %s26, 1
      %p1706 = scmp.lt.s32.totalorder %s1703, 63
      %s1707 = scalar_select %p1706, %s1703, 63
      %s1708 = smul.addr %s1705, 64
      %s1709 = sadd.s32 %s1707, %s1708
      %s1710 = smul.addr %s1709, 8
      %s1711 = scalar_lea.vmem %s8, %s1710
      %p1712 = scmp.lt.s32.totalorder %s26, 1
      %s1713 = scalar_select %p1712, %s26, 1
      %s1714 = scalar_lea.vmem %s9, %s1713
      %p1715 = scmp.lt.s32.totalorder %s26, 1
      %s1716 = scalar_select %p1715, %s26, 1
      %s1717 = scalar_lea.vmem %s10, %s1716
      // Predicated region
      $region57: #{mhca_forward.3} parent=51 // pred_check
        %p1718 = pneg %p246
      $region58: #{mhca_forward.3} parent=51 // pred_check_branch
        %1720 = sbr.rel (%p1718) target = $region60
      $region59: #{mhca_forward.3} parent=51 // pred_region
        %s1721 = smul.u32 32, %s27
      $region60: #{mhca_forward.3} parent=51 // pred_fallthru
        _
      // Predicated region
      $region61: #{mhca_forward.3} parent=51 // pred_check
        %p1722 = pneg %p272
      $region62: #{mhca_forward.3} parent=51 // pred_check_branch
        %1724 = sbr.rel (%p1722) target = $region64
      $region63: #{mhca_forward.3} parent=51 // pred_region
        _
      $region64: #{mhca_forward.3} parent=51 // pred_fallthru
        _
      // Predicated region
      $region65: #{mhca_forward.3} parent=51 // pred_check
        %p1725 = pneg %p298
      $region66: #{mhca_forward.3} parent=51 // pred_check_branch
        %1727 = sbr.rel (%p1725) target = $region68
      $region67: #{mhca_forward.3} parent=51 // pred_region
        _
      $region68: #{mhca_forward.3} parent=51 // pred_fallthru
        _
    $region52: #{mhca_forward.3} parent=5 // pred_fallthru
      _
    %p1728 = scmp.le.s32.totalorder 2, %s17
    // Predicated region
    $region69: #{mhca_forward.3} parent=5 // pred_check
      %p1729 = pneg %p1728
    $region70: #{mhca_forward.3} parent=5 // pred_check_branch
      %1731 = sbr.rel (%p1729) target = $region72
    $region71: #{mhca_forward.3} parent=5 // pred_region
      %s1732 = ssub.s32 %s17, 2
      // Predicated region
      $region73: #{mhca_forward.3} parent=71 // pred_check
        %p1733 = pneg %p252
      $region74: #{mhca_forward.3} parent=71 // pred_check_branch
        %1735 = sbr.rel (%p1733) target = $region76
      $region75: #{mhca_forward.3} parent=71 // pred_region
        %s1736 = smul.u32 32, %s29
        %p1737 = scmp.lt.s32.totalorder %s28, 1
        %s1738 = scalar_select %p1737, %s28, 1
        %p1739 = scmp.lt.s32.totalorder %s1736, 63
        %s1740 = scalar_select %p1739, %s1736, 63
        %s1741 = smul.addr %s1738, 64
        %s1742 = sadd.s32 %s1740, %s1741
        %s1743 = smul.addr %s1742, 8
        %s1744 = scalar_lea.vmem %s8, %s1743
      $region76: #{mhca_forward.3} parent=71 // pred_fallthru
        _
      // Predicated region
      $region77: #{mhca_forward.3} parent=71 // pred_check
        %p1745 = pneg %p278
      $region78: #{mhca_forward.3} parent=71 // pred_check_branch
        %1747 = sbr.rel (%p1745) target = $region80
      $region79: #{mhca_forward.3} parent=71 // pred_region
        %p1748 = scmp.lt.s32.totalorder %s28, 1
        %s1749 = scalar_select %p1748, %s28, 1
        %s1750 = scalar_lea.vmem %s9, %s1749
      $region80: #{mhca_forward.3} parent=71 // pred_fallthru
        _
      // Predicated region
      $region81: #{mhca_forward.3} parent=71 // pred_check
        %p1751 = pneg %p304
      $region82: #{mhca_forward.3} parent=71 // pred_check_branch
        %1753 = sbr.rel (%p1751) target = $region84
      $region83: #{mhca_forward.3} parent=71 // pred_region
        %p1754 = scmp.lt.s32.totalorder %s28, 1
        %s1755 = scalar_select %p1754, %s28, 1
        %s1756 = scalar_lea.vmem %s10, %s1755
      $region84: #{mhca_forward.3} parent=71 // pred_fallthru
        _
    $region72: #{mhca_forward.3} parent=5 // pred_fallthru
      _
  $region6: #{mhca_forward.3} parent=0 // loop_footer
    %s21 = sadd.s32 1, %s17
  $region7: #{mhca_forward.3} parent=0 // loop_footer_branch
    %16 = sbr.rel target = $region3
  $region8: #{mhca_forward.3} parent=0 // loop_exit
    _

</llo_original>
